<compile_context>
chip_gen: v7x
topology: tpu7x:2x2x1
jax: 0.10.0
libtpu: 0.0.40
codegen_flags: <defaults>
</compile_context>

<pallas_src>
import functools

import jax
import jax.numpy as jnp
from jax import lax
from jax.experimental import pallas as pl
from jax.experimental.pallas import tpu as pltpu

# Hyperparameters hard-coded in training.py.
N_EMBD = 384
BLOCK_SIZE = 64
HEAD_SIZE = 64                      # head_size = n_embd // n_head in training.py

_MASK_VALUE = -1e30                 # finite large-negative (robust vs -inf NaN edge cases)


def _head_kernel(x_ref, wqkv_ref, o_ref, *, head_size, d_pad):
    """One grid step == bb batch elements; everything fits comfortably in VMEM.

    x_ref:    (bb, T, C)        bf16
    wqkv_ref: (C, 3*d_pad)      bf16, columns [Wq*scale | pad | Wk | pad | Wv | pad]
    o_ref:    (1, bb, T*D)      bf16, lane-dense output slab
    """
    bb, t, c = x_ref.shape

    # ---- fused q/k/v projection: one (bb*T, C) @ (C, 3*d_pad) MXU matmul ----
    # Operands are bf16 (cast at the call boundary); accumulation is f32.
    x2 = x_ref[...].reshape(bb * t, c)                          # (M, C), M = bb*T
    qkv = jnp.dot(x2, wqkv_ref[...],
                  preferred_element_type=jnp.float32)           # (M, 3*d_pad) f32
    qkv = qkv.astype(jnp.bfloat16).reshape(bb, t, 3 * d_pad)

    # Slices all start on 128-lane tile boundaries (d_pad is a multiple of 128).
    q = qkv[:, :, 0 * d_pad:0 * d_pad + head_size]              # (bb, T, D) bf16
    k = qkv[:, :, 1 * d_pad:1 * d_pad + head_size]
    v = qkv[:, :, 2 * d_pad:2 * d_pad + head_size]

    # ---- scaled dot-product scores (scale already folded into Wq) ----
    s = jnp.einsum('btd,bsd->bts', q, k,
                   preferred_element_type=jnp.float32)          # (bb, T, T) f32

    # Causal mask built once per grid step on (T, T), broadcast over bb.
    row = lax.broadcasted_iota(jnp.int32, (t, t), 0)
    col = lax.broadcasted_iota(jnp.int32, (t, t), 1)
    s = jnp.where((row >= col)[None, :, :], s, _MASK_VALUE)

    # ---- softmax over keys (elementwise math in f32; reciprocal on the EUP) ----
    s = s - jnp.max(s, axis=-1, keepdims=True)
    p = jnp.exp(s)
    p = p * pl.reciprocal(jnp.sum(p, axis=-1, keepdims=True), approx=True)
    # TODO(synk): dropout(p) omitted (identity / eval mode).

    # ---- weighted value sum ----
    out = jnp.einsum('bts,bsd->btd', p.astype(jnp.bfloat16), v,
                     preferred_element_type=jnp.float32)        # (bb, T, D) f32

    # Lane-dense bf16 store: (bb, T, D) -> (1, bb, T*D), last dim multiple of 128.
    o_ref[...] = out.astype(o_ref.dtype).reshape(o_ref.shape)


def _tensorcores_per_chip():
    """2 on v7x (megacore-style dual TC), 1 on v5e/v6e; safe fallback = 1."""
    try:
        kind = jax.devices()[0].device_kind.lower()
    except Exception:
        return 1
    return 2 if "7" in kind else 1


def _pick_batch_block(batch, seq, *, target_rows=1024, min_steps=1):
    """Largest batch fold giving ~target_rows projection rows per step.

    min_steps=2 on dual-TC chips so both TensorCores get a grid step;
    min_steps=1 elsewhere (single fat step, no wasted pipeline overhead).
    """
    bb = max(1, min(batch, max(1, target_rows // max(seq, 1))))
    if min_steps > 1:
        bb = max(1, min(bb, batch // min_steps))
    while batch % bb:                 # must evenly divide the batch
        bb -= 1
    return bb


def head_attention(x, wq, wk, wv, *, interpret=False):
    """x: (B, T, C); wq/wk/wv: (C, head_size) stored (in, out). Returns (B, T, head_size) bf16."""
    B, T, C = x.shape
    D = wq.shape[1]
    scale = D ** (-0.5)
    d_pad = ((D + 127) // 128) * 128           # lane-tile-aligned stride per projection

    # Host-side fusion of the three projection weights into one lane-aligned wide
    # matmul operand; attention scale folded into Wq (linear, so exact).
    wqkv = jnp.zeros((C, 3 * d_pad), dtype=jnp.float32)
    wqkv = wqkv.at[:, 0 * d_pad:0 * d_pad + D].set(wq * scale)
    wqkv = wqkv.at[:, 1 * d_pad:1 * d_pad + D].set(wk)
    wqkv = wqkv.at[:, 2 * d_pad:2 * d_pad + D].set(wv)

    # bf16 MXU operands (halves HBM->VMEM DMA bytes); accumulation stays f32 in-kernel.
    x_bf = x.astype(jnp.bfloat16)
    wqkv_bf = wqkv.astype(jnp.bfloat16)

    min_steps = 2 if (_tensorcores_per_chip() >= 2 and B >= 2) else 1
    bb = _pick_batch_block(B, T, min_steps=min_steps)
    n_steps = B // bb

    kernel = functools.partial(_head_kernel, head_size=D, d_pad=d_pad)

    # Output is a lane-dense bf16 slab (n_steps, bb, T*D); last two block dims
    # equal the full array dims so the BlockSpec is always legal, stores are
    # unmasked full-lane vst, and the wrapper reshape back to (B, T, D) is a
    # free metadata op.
    out_flat = pl.pallas_call(
        kernel,
        out_shape=jax.ShapeDtypeStruct((n_steps, bb, T * D), jnp.bfloat16),
        grid_spec=pltpu.PrefetchScalarGridSpec(
            num_scalar_prefetch=0,
            grid=(n_steps,),
            in_specs=[
                pl.BlockSpec((bb, T, C), lambda b: (b, 0, 0)),        # x, batch-folded
                pl.BlockSpec((C, 3 * d_pad), lambda b: (0, 0)),       # fused, padded Wq|Wk|Wv
            ],
            out_specs=pl.BlockSpec((1, bb, T * D), lambda b: (b, 0, 0)),
        ),
        compiler_params=pltpu.CompilerParams(
            dimension_semantics=("parallel",)),
        interpret=interpret,
    )(x_bf, wqkv_bf)

    return out_flat.reshape(B, T, D)


def _reference(x, wq, wk, wv):
    """Pure-JAX f32 reference of the PyTorch Head.forward (eval mode)."""
    T = x.shape[1]
    q = x @ wq
    k = x @ wk
    v = x @ wv
    wei = jnp.einsum('btd,bsd->bts', q, k) * (wq.shape[1] ** (-0.5))
    tril = jnp.tril(jnp.ones((T, T), dtype=bool))
    wei = jnp.where(tril[None], wei, -jnp.inf)
    wei = jax.nn.softmax(wei, axis=-1)
    return jnp.einsum('bts,bsd->btd', wei, v)


if __name__ == "__main__":
    B, T = 8, BLOCK_SIZE          # T == block_size; grid=(1,) on v5e/v6e, (2,) on v7x
    key = jax.random.PRNGKey(0)
    kx, kq, kk, kv = jax.random.split(key, 4)

    x = jax.random.normal(kx, (B, T, N_EMBD), dtype=jnp.float32)

    bound = 1.0 / (N_EMBD ** 0.5)          # torch nn.Linear default init range
    wq = jax.random.uniform(kq, (N_EMBD, HEAD_SIZE), minval=-bound, maxval=bound,
                            dtype=jnp.float32)
    wk = jax.random.uniform(kk, (N_EMBD, HEAD_SIZE), minval=-bound, maxval=bound,
                            dtype=jnp.float32)
    wv = jax.random.uniform(kv, (N_EMBD, HEAD_SIZE), minval=-bound, maxval=bound,
                            dtype=jnp.float32)

    out = jax.block_until_ready(head_attention(x, wq, wk, wv))
    ref = _reference(x, wq, wk, wv)

    assert out.shape == (B, T, HEAD_SIZE)
    # bf16 MXU operands + bf16 output + approx reciprocal -> ~1e-2-level error.
    assert jnp.allclose(out.astype(jnp.float32), ref, atol=3e-2, rtol=3e-2), \
        "mismatch vs reference"

    print("KERNEL_OK")
</pallas_src>

<mosaic_0001>
module attributes {stable_mosaic.version = 11 : i64} {
  func.func @_head_kernel(%arg0: i32, %arg1: memref<8x64x384xbf16, #tpu.memory_space<vmem>>, %arg2: memref<384x384xbf16, #tpu.memory_space<vmem>>, %arg3: memref<1x8x4096xbf16, #tpu.memory_space<vmem>>) attributes {dimension_semantics = [#tpu.dimension_semantics<parallel>], iteration_bounds = array<i64: 1>, scalar_prefetch = 0 : i64, scratch_operands = 0 : i64, tpu.core_type = #tpu.core_type<tc>, window_params = [{transform_indices = @transform_0, window_bounds = array<i64: 8, 64, 384>}, {pipeline_mode = #tpu.pipeline_mode<synchronous>, transform_indices = @transform_1, window_bounds = array<i64: 384, 384>}, {transform_indices = @transform_2, window_bounds = array<i64: 1, 8, 4096>}]} {
    %c0 = arith.constant 0 : index
    %c0_0 = arith.constant 0 : index
    %c0_1 = arith.constant 0 : index
    %0 = vector.load %arg1[%c0, %c0_0, %c0_1] : memref<8x64x384xbf16, #tpu.memory_space<vmem>>, vector<8x64x384xbf16>
    %1 = vector.shape_cast %0 : vector<8x64x384xbf16> to vector<512x384xbf16>
    %c0_2 = arith.constant 0 : index
    %c0_3 = arith.constant 0 : index
    %2 = vector.load %arg2[%c0_2, %c0_3] : memref<384x384xbf16, #tpu.memory_space<vmem>>, vector<384x384xbf16>
    %cst = arith.constant dense<0.000000e+00> : vector<512x384xf32>
    %3 = tpu.matmul %1, %2, %cst {dimension_numbers = #tpu.dot_dimension_numbers<[1], [0], [0], [1], [0, 0, 1, 1], [], []>} : vector<512x384xbf16>, vector<384x384xbf16>, vector<512x384xf32> -> vector<512x384xf32>
    %4 = arith.truncf %3 : vector<512x384xf32> to vector<512x384xbf16>
    %5 = vector.shape_cast %4 : vector<512x384xbf16> to vector<8x64x384xbf16>
    %6 = vector.extract_strided_slice %5 {offsets = [0, 0, 0], sizes = [8, 64, 64], strides = [1, 1, 1]} : vector<8x64x384xbf16> to vector<8x64x64xbf16>
    %7 = vector.extract_strided_slice %5 {offsets = [0, 0, 128], sizes = [8, 64, 64], strides = [1, 1, 1]} : vector<8x64x384xbf16> to vector<8x64x64xbf16>
    %8 = vector.extract_strided_slice %5 {offsets = [0, 0, 256], sizes = [8, 64, 64], strides = [1, 1, 1]} : vector<8x64x384xbf16> to vector<8x64x64xbf16>
    "tpu.trace_start"() <{level = 10 : i32, message = "btd,bsd->bts"}> : () -> ()
    %cst_4 = arith.constant dense<0.000000e+00> : vector<8x64x64xf32>
    %9 = tpu.matmul %6, %7, %cst_4 {dimension_numbers = #tpu.dot_dimension_numbers<[2], [2], [1], [1], [0, 0, 0, 1, 1, 1], [0], [0]>} : vector<8x64x64xbf16>, vector<8x64x64xbf16>, vector<8x64x64xf32> -> vector<8x64x64xf32>
    "tpu.trace_stop"() : () -> ()
    %10 = tpu.iota {dimensions = array<i32: 0>} : vector<64x64xi32>
    %11 = tpu.iota {dimensions = array<i32: 1>} : vector<64x64xi32>
    %12 = arith.cmpi sge, %10, %11 : vector<64x64xi32>
    %13 = vector.shape_cast %12 : vector<64x64xi1> to vector<1x64x64xi1>
    %cst_5 = arith.constant -1.000000e+30 : f32
    %14 = vector.shape_cast %13 : vector<1x64x64xi1> to vector<1x64x64xi1>
    %15 = vector.broadcast %14 : vector<1x64x64xi1> to vector<8x64x64xi1>
    %16 = vector.broadcast %cst_5 : f32 to vector<8x64x64xf32>
    %17 = arith.select %15, %9, %16 : vector<8x64x64xi1>, vector<8x64x64xf32>
    %cst_6 = arith.constant dense<0xFF800000> : vector<8x64xf32>
    %18 = vector.multi_reduction <maximumf>, %17, %cst_6 [2] : vector<8x64x64xf32> to vector<8x64xf32>
    %19 = vector.shape_cast %18 : vector<8x64xf32> to vector<8x64x1xf32>
    %20 = vector.broadcast %19 : vector<8x64x1xf32> to vector<8x64x64xf32>
    %21 = arith.subf %17, %20 : vector<8x64x64xf32>
    %22 = math.exp %21 : vector<8x64x64xf32>
    %cst_7 = arith.constant dense<0.000000e+00> : vector<8x64xf32>
    %23 = vector.multi_reduction <add>, %22, %cst_7 [2] : vector<8x64x64xf32> to vector<8x64xf32>
    %24 = vector.shape_cast %23 : vector<8x64xf32> to vector<8x64x1xf32>
    %25 = tpu.reciprocal %24 {approx = true} : vector<8x64x1xf32> -> vector<8x64x1xf32>
    %26 = vector.broadcast %25 : vector<8x64x1xf32> to vector<8x64x64xf32>
    %27 = arith.mulf %22, %26 : vector<8x64x64xf32>
    %28 = arith.truncf %27 : vector<8x64x64xf32> to vector<8x64x64xbf16>
    "tpu.trace_start"() <{level = 10 : i32, message = "bts,bsd->btd"}> : () -> ()
    %cst_8 = arith.constant dense<0.000000e+00> : vector<8x64x64xf32>
    %29 = tpu.matmul %28, %8, %cst_8 {dimension_numbers = #tpu.dot_dimension_numbers<[2], [1], [1], [2], [0, 0, 0, 1, 1, 2], [0], [0]>} : vector<8x64x64xbf16>, vector<8x64x64xbf16>, vector<8x64x64xf32> -> vector<8x64x64xf32>
    "tpu.trace_stop"() : () -> ()
    %30 = arith.truncf %29 : vector<8x64x64xf32> to vector<8x64x64xbf16>
    %31 = vector.shape_cast %30 : vector<8x64x64xbf16> to vector<1x8x4096xbf16>
    %c0_9 = arith.constant 0 : index
    %c0_10 = arith.constant 0 : index
    %c0_11 = arith.constant 0 : index
    %32 = vector.load %arg3[%c0_9, %c0_10, %c0_11] : memref<1x8x4096xbf16, #tpu.memory_space<vmem>>, vector<1x8x4096xbf16>
    tpu.vector_store %arg3[%c0_9, %c0_10, %c0_11], %31 {strides = array<i32>} : memref<1x8x4096xbf16, #tpu.memory_space<vmem>>, vector<1x8x4096xbf16>,
    return
  }
  func.func @transform_0(%arg0: i32) -> (i32, i32, i32) {
    %c0_i32 = arith.constant 0 : i32
    %c0_i32_0 = arith.constant 0 : i32
    %c0_i32_1 = arith.constant 0 : i32
    return %arg0, %c0_i32, %c0_i32_0 : i32, i32, i32
  }
  func.func @transform_1(%arg0: i32) -> (i32, i32) {
    %c0_i32 = arith.constant 0 : i32
    %c0_i32_0 = arith.constant 0 : i32
    %c0_i32_1 = arith.constant 0 : i32
    return %c0_i32, %c0_i32_0 : i32, i32
  }
  func.func @transform_2(%arg0: i32) -> (i32, i32, i32) {
    %c0_i32 = arith.constant 0 : i32
    %c0_i32_0 = arith.constant 0 : i32
    %c0_i32_1 = arith.constant 0 : i32
    return %arg0, %c0_i32, %c0_i32_0 : i32, i32, i32
  }
}

</mosaic_0001>

<llo_original>
// kernel: tpu_custom_call.1
$region0: #{tpu_custom_call.1}
  #allocation0 [shape = 'u32[]', space=smem, size = 0x4, offset = 0x4, fixed_abs, tag = 'smem constant byte address 0x4 - core index']
  #allocation1 [shape = 'u32[144,128]{1,0:T(1,128)}', space=vmem, size = 0x12000, scoped, tag = 'internal scratch']
  %s0 = inlined_call_operand.hbm [shape: bf16[8,64,384], index: 0, kind: input, shape index: {}]
  %s1 = inlined_call_operand.hbm [shape: bf16[384,384], index: 1, kind: input, shape index: {}]
  %s2 = inlined_call_operand.hbm [shape: bf16[1,8,4096], index: 2, kind: output, shape index: {}]
  %s3 = sld [smem:[#allocation0]]
  $region26: #{tpu_custom_call.1} parent=0
    _
  %s5 = ssub.s32 1, %s3
  %s6 = scalar_select 0, %s5, %s3
  $region1: #{tpu_custom_call.1} parent=0
    #allocation2 [shape = 'u8[393216]{0}', space=vmem, size = 0x60000, scoped, tag = 'input window, operand 0, single buffered']
    #allocation3 [shape = 's32[1]{0}', space=sflag, size = 0x4, scoped, tag = 'scoped memory for tpu_custom_call.1']
    #allocation4 [shape = 's32[1]{0}', space=sflag, size = 0x4, scoped, tag = 'scoped memory for tpu_custom_call.1']
    #allocation5 [shape = 'u8[294912]{0}', space=vmem, size = 0x48000, scoped, tag = 'input window, operand 1, single buffered']
    #allocation6 [shape = 's32[1]{0}', space=sflag, size = 0x4, scoped, tag = 'scoped memory for tpu_custom_call.1']
    #allocation7 [shape = 'u8[65536]{0}', space=vmem, size = 0x10000, scoped, tag = 'output window, operand 0, single buffered']
    %7 = vsyncpa [#allocation3], 0
    %8 = vsyncpa [#allocation6], 0
    %9 = vsyncpa [#allocation4], 0
    // Predicated region
    $region2: #{tpu_custom_call.1} parent=1 // pred_check
      _
    $region3: #{tpu_custom_call.1} parent=1 // pred_check_branch
      %11 = sbr.rel (0) target = $region5
    $region4: #{tpu_custom_call.1} parent=1 // pred_region
      %s13 = ssub.s32 12288, 12288
      %14 = vsyncadd [#allocation3], %s13
      %s15 = sshll.u32 [#allocation2], 4
      %s16 = int_to_ptr.vmem [resolvable:$true] %s15
      %21 = dma.hbm_to_vmem [thread:$0]  %s0, 12288, %s16, [#allocation3], 192, 192, 12
    $region5: #{tpu_custom_call.1} parent=1 // pred_fallthru
      _
    // Predicated region
    $region6: #{tpu_custom_call.1} parent=1 // pred_check
      _
    $region7: #{tpu_custom_call.1} parent=1 // pred_check_branch
      %23 = sbr.rel (0) target = $region9
    $region8: #{tpu_custom_call.1} parent=1 // pred_region
      %s25 = ssub.s32 9216, 9216
      %26 = vsyncadd [#allocation6], %s25
      %s27 = sshll.u32 [#allocation5], 4
      %s28 = int_to_ptr.vmem [resolvable:$true] %s27
      %33 = dma.hbm_to_vmem [thread:$0]  %s1, 9216, %s28, [#allocation6], 192, 192, 12
    $region9: #{tpu_custom_call.1} parent=1 // pred_fallthru
      _
    // Predicated region
    $region10: #{tpu_custom_call.1} parent=1 // pred_check
      _
    $region11: #{tpu_custom_call.1} parent=1 // pred_check_branch
      %35 = sbr.rel (0) target = $region13
    $region12: #{tpu_custom_call.1} parent=1 // pred_region
      %36 = dma.done [#allocation3], 12288
    $region13: #{tpu_custom_call.1} parent=1 // pred_fallthru
      _
    // Predicated region
    $region14: #{tpu_custom_call.1} parent=1 // pred_check
      _
    $region15: #{tpu_custom_call.1} parent=1 // pred_check_branch
      %38 = sbr.rel (0) target = $region17
    $region16: #{tpu_custom_call.1} parent=1 // pred_region
      %39 = dma.done [#allocation6], 9216
    $region17: #{tpu_custom_call.1} parent=1 // pred_fallthru
      _
    %v41 = vld [vmem:[#allocation2] sm:$0xff]
    %v42 = vld [vmem:[#allocation2 + $0x8] sm:$0xf]
    %v43 = vld [vmem:[#allocation2 + $0xc] sm:$0xff]
    %v44 = vld [vmem:[#allocation2 + $0x14] sm:$0xf]
    %v45 = vld [vmem:[#allocation2 + $0x18] sm:$0xff]
    %v46 = vld [vmem:[#allocation2 + $0x20] sm:$0xf]
    %v47 = vld [vmem:[#allocation2 + $0x24] sm:$0xff]
    %v48 = vld [vmem:[#allocation2 + $0x2c] sm:$0xf]
    %v49 = vld [vmem:[#allocation2 + $0x30] sm:$0xff]
    %v50 = vld [vmem:[#allocation2 + $0x38] sm:$0xf]
    %v51 = vld [vmem:[#allocation2 + $0x3c] sm:$0xff]
    %v52 = vld [vmem:[#allocation2 + $0x44] sm:$0xf]
    %v53 = vld [vmem:[#allocation2 + $0x48] sm:$0xff]
    %v54 = vld [vmem:[#allocation2 + $0x50] sm:$0xf]
    %v55 = vld [vmem:[#allocation2 + $0x54] sm:$0xff]
    %v56 = vld [vmem:[#allocation2 + $0x5c] sm:$0xf]
    %v57 = vld [vmem:[#allocation2 + $0x60] sm:$0xff]
    %v58 = vld [vmem:[#allocation2 + $0x68] sm:$0xf]
    %v59 = vld [vmem:[#allocation2 + $0x6c] sm:$0xff]
    %v60 = vld [vmem:[#allocation2 + $0x74] sm:$0xf]
    %v61 = vld [vmem:[#allocation2 + $0x78] sm:$0xff]
    %v62 = vld [vmem:[#allocation2 + $0x80] sm:$0xf]
    %v63 = vld [vmem:[#allocation2 + $0x84] sm:$0xff]
    %v64 = vld [vmem:[#allocation2 + $0x8c] sm:$0xf]
    %v65 = vld [vmem:[#allocation2 + $0x90] sm:$0xff]
    %v66 = vld [vmem:[#allocation2 + $0x98] sm:$0xf]
    %v67 = vld [vmem:[#allocation2 + $0x9c] sm:$0xff]
    %v68 = vld [vmem:[#allocation2 + $0xa4] sm:$0xf]
    %v69 = vld [vmem:[#allocation2 + $0xa8] sm:$0xff]
    %v70 = vld [vmem:[#allocation2 + $0xb0] sm:$0xf]
    %v71 = vld [vmem:[#allocation2 + $0xb4] sm:$0xff]
    %v72 = vld [vmem:[#allocation2 + $0xbc] sm:$0xf]
    %v73 = vld [vmem:[#allocation2 + $0xc0] sm:$0xff]
    %v74 = vld [vmem:[#allocation2 + $0xc8] sm:$0xf]
    %v75 = vld [vmem:[#allocation2 + $0xcc] sm:$0xff]
    %v76 = vld [vmem:[#allocation2 + $0xd4] sm:$0xf]
    %v77 = vld [vmem:[#allocation2 + $0xd8] sm:$0xff]
    %v78 = vld [vmem:[#allocation2 + $0xe0] sm:$0xf]
    %v79 = vld [vmem:[#allocation2 + $0xe4] sm:$0xff]
    %v80 = vld [vmem:[#allocation2 + $0xec] sm:$0xf]
    %v81 = vld [vmem:[#allocation2 + $0xf0] sm:$0xff]
    %v82 = vld [vmem:[#allocation2 + $0xf8] sm:$0xf]
    %v83 = vld [vmem:[#allocation2 + $0xfc] sm:$0xff]
    %v84 = vld [vmem:[#allocation2 + $0x104] sm:$0xf]
    %v85 = vld [vmem:[#allocation2 + $0x108] sm:$0xff]
    %v86 = vld [vmem:[#allocation2 + $0x110] sm:$0xf]
    %v87 = vld [vmem:[#allocation2 + $0x114] sm:$0xff]
    %v88 = vld [vmem:[#allocation2 + $0x11c] sm:$0xf]
    %v89 = vld [vmem:[#allocation2 + $0x120] sm:$0xff]
    %v90 = vld [vmem:[#allocation2 + $0x128] sm:$0xf]
    %v91 = vld [vmem:[#allocation2 + $0x12c] sm:$0xff]
    %v92 = vld [vmem:[#allocation2 + $0x134] sm:$0xf]
    %v93 = vld [vmem:[#allocation2 + $0x138] sm:$0xff]
    %v94 = vld [vmem:[#allocation2 + $0x140] sm:$0xf]
    %v95 = vld [vmem:[#allocation2 + $0x144] sm:$0xff]
    %v96 = vld [vmem:[#allocation2 + $0x14c] sm:$0xf]
    %v97 = vld [vmem:[#allocation2 + $0x150] sm:$0xff]
    %v98 = vld [vmem:[#allocation2 + $0x158] sm:$0xf]
    %v99 = vld [vmem:[#allocation2 + $0x15c] sm:$0xff]
    %v100 = vld [vmem:[#allocation2 + $0x164] sm:$0xf]
    %v101 = vld [vmem:[#allocation2 + $0x168] sm:$0xff]
    %v102 = vld [vmem:[#allocation2 + $0x170] sm:$0xf]
    %v103 = vld [vmem:[#allocation2 + $0x174] sm:$0xff]
    %v104 = vld [vmem:[#allocation2 + $0x17c] sm:$0xf]
    %v105 = vld [vmem:[#allocation2 + $0x180] sm:$0xff]
    %v106 = vld [vmem:[#allocation2 + $0x188] sm:$0xf]
    %v107 = vld [vmem:[#allocation2 + $0x18c] sm:$0xff]
    %v108 = vld [vmem:[#allocation2 + $0x194] sm:$0xf]
    %v109 = vld [vmem:[#allocation2 + $0x198] sm:$0xff]
    %v110 = vld [vmem:[#allocation2 + $0x1a0] sm:$0xf]
    %v111 = vld [vmem:[#allocation2 + $0x1a4] sm:$0xff]
    %v112 = vld [vmem:[#allocation2 + $0x1ac] sm:$0xf]
    %v113 = vld [vmem:[#allocation2 + $0x1b0] sm:$0xff]
    %v114 = vld [vmem:[#allocation2 + $0x1b8] sm:$0xf]
    %v115 = vld [vmem:[#allocation2 + $0x1bc] sm:$0xff]
    %v116 = vld [vmem:[#allocation2 + $0x1c4] sm:$0xf]
    %v117 = vld [vmem:[#allocation2 + $0x1c8] sm:$0xff]
    %v118 = vld [vmem:[#allocation2 + $0x1d0] sm:$0xf]
    %v119 = vld [vmem:[#allocation2 + $0x1d4] sm:$0xff]
    %v120 = vld [vmem:[#allocation2 + $0x1dc] sm:$0xf]
    %v121 = vld [vmem:[#allocation2 + $0x1e0] sm:$0xff]
    %v122 = vld [vmem:[#allocation2 + $0x1e8] sm:$0xf]
    %v123 = vld [vmem:[#allocation2 + $0x1ec] sm:$0xff]
    %v124 = vld [vmem:[#allocation2 + $0x1f4] sm:$0xf]
    %v125 = vld [vmem:[#allocation2 + $0x1f8] sm:$0xff]
    %v126 = vld [vmem:[#allocation2 + $0x200] sm:$0xf]
    %v127 = vld [vmem:[#allocation2 + $0x204] sm:$0xff]
    %v128 = vld [vmem:[#allocation2 + $0x20c] sm:$0xf]
    %v129 = vld [vmem:[#allocation2 + $0x210] sm:$0xff]
    %v130 = vld [vmem:[#allocation2 + $0x218] sm:$0xf]
    %v131 = vld [vmem:[#allocation2 + $0x21c] sm:$0xff]
    %v132 = vld [vmem:[#allocation2 + $0x224] sm:$0xf]
    %v133 = vld [vmem:[#allocation2 + $0x228] sm:$0xff]
    %v134 = vld [vmem:[#allocation2 + $0x230] sm:$0xf]
    %v135 = vld [vmem:[#allocation2 + $0x234] sm:$0xff]
    %v136 = vld [vmem:[#allocation2 + $0x23c] sm:$0xf]
    %v137 = vld [vmem:[#allocation2 + $0x240] sm:$0xff]
    %v138 = vld [vmem:[#allocation2 + $0x248] sm:$0xf]
    %v139 = vld [vmem:[#allocation2 + $0x24c] sm:$0xff]
    %v140 = vld [vmem:[#allocation2 + $0x254] sm:$0xf]
    %v141 = vld [vmem:[#allocation2 + $0x258] sm:$0xff]
    %v142 = vld [vmem:[#allocation2 + $0x260] sm:$0xf]
    %v143 = vld [vmem:[#allocation2 + $0x264] sm:$0xff]
    %v144 = vld [vmem:[#allocation2 + $0x26c] sm:$0xf]
    %v145 = vld [vmem:[#allocation2 + $0x270] sm:$0xff]
    %v146 = vld [vmem:[#allocation2 + $0x278] sm:$0xf]
    %v147 = vld [vmem:[#allocation2 + $0x27c] sm:$0xff]
    %v148 = vld [vmem:[#allocation2 + $0x284] sm:$0xf]
    %v149 = vld [vmem:[#allocation2 + $0x288] sm:$0xff]
    %v150 = vld [vmem:[#allocation2 + $0x290] sm:$0xf]
    %v151 = vld [vmem:[#allocation2 + $0x294] sm:$0xff]
    %v152 = vld [vmem:[#allocation2 + $0x29c] sm:$0xf]
    %v153 = vld [vmem:[#allocation2 + $0x2a0] sm:$0xff]
    %v154 = vld [vmem:[#allocation2 + $0x2a8] sm:$0xf]
    %v155 = vld [vmem:[#allocation2 + $0x2ac] sm:$0xff]
    %v156 = vld [vmem:[#allocation2 + $0x2b4] sm:$0xf]
    %v157 = vld [vmem:[#allocation2 + $0x2b8] sm:$0xff]
    %v158 = vld [vmem:[#allocation2 + $0x2c0] sm:$0xf]
    %v159 = vld [vmem:[#allocation2 + $0x2c4] sm:$0xff]
    %v160 = vld [vmem:[#allocation2 + $0x2cc] sm:$0xf]
    %v161 = vld [vmem:[#allocation2 + $0x2d0] sm:$0xff]
    %v162 = vld [vmem:[#allocation2 + $0x2d8] sm:$0xf]
    %v163 = vld [vmem:[#allocation2 + $0x2dc] sm:$0xff]
    %v164 = vld [vmem:[#allocation2 + $0x2e4] sm:$0xf]
    %v165 = vld [vmem:[#allocation2 + $0x2e8] sm:$0xff]
    %v166 = vld [vmem:[#allocation2 + $0x2f0] sm:$0xf]
    %v167 = vld [vmem:[#allocation2 + $0x2f4] sm:$0xff]
    %v168 = vld [vmem:[#allocation2 + $0x2fc] sm:$0xf]
    %v169 = vld [vmem:[#allocation5] sm:$0xff]
    %v170 = vld [vmem:[#allocation5 + $0x8] sm:$0xf]
    %v171 = vld [vmem:[#allocation5 + $0xc] sm:$0xff]
    %v172 = vld [vmem:[#allocation5 + $0x14] sm:$0xf]
    %v173 = vld [vmem:[#allocation5 + $0x18] sm:$0xff]
    %v174 = vld [vmem:[#allocation5 + $0x20] sm:$0xf]
    %v175 = vld [vmem:[#allocation5 + $0x24] sm:$0xff]
    %v176 = vld [vmem:[#allocation5 + $0x2c] sm:$0xf]
    %v177 = vld [vmem:[#allocation5 + $0x30] sm:$0xff]
    %v178 = vld [vmem:[#allocation5 + $0x38] sm:$0xf]
    %v179 = vld [vmem:[#allocation5 + $0x3c] sm:$0xff]
    %v180 = vld [vmem:[#allocation5 + $0x44] sm:$0xf]
    %v181 = vld [vmem:[#allocation5 + $0x48] sm:$0xff]
    %v182 = vld [vmem:[#allocation5 + $0x50] sm:$0xf]
    %v183 = vld [vmem:[#allocation5 + $0x54] sm:$0xff]
    %v184 = vld [vmem:[#allocation5 + $0x5c] sm:$0xf]
    %v185 = vld [vmem:[#allocation5 + $0x60] sm:$0xff]
    %v186 = vld [vmem:[#allocation5 + $0x68] sm:$0xf]
    %v187 = vld [vmem:[#allocation5 + $0x6c] sm:$0xff]
    %v188 = vld [vmem:[#allocation5 + $0x74] sm:$0xf]
    %v189 = vld [vmem:[#allocation5 + $0x78] sm:$0xff]
    %v190 = vld [vmem:[#allocation5 + $0x80] sm:$0xf]
    %v191 = vld [vmem:[#allocation5 + $0x84] sm:$0xff]
    %v192 = vld [vmem:[#allocation5 + $0x8c] sm:$0xf]
    %v193 = vld [vmem:[#allocation5 + $0x90] sm:$0xff]
    %v194 = vld [vmem:[#allocation5 + $0x98] sm:$0xf]
    %v195 = vld [vmem:[#allocation5 + $0x9c] sm:$0xff]
    %v196 = vld [vmem:[#allocation5 + $0xa4] sm:$0xf]
    %v197 = vld [vmem:[#allocation5 + $0xa8] sm:$0xff]
    %v198 = vld [vmem:[#allocation5 + $0xb0] sm:$0xf]
    %v199 = vld [vmem:[#allocation5 + $0xb4] sm:$0xff]
    %v200 = vld [vmem:[#allocation5 + $0xbc] sm:$0xf]
    %v201 = vld [vmem:[#allocation5 + $0xc0] sm:$0xff]
    %v202 = vld [vmem:[#allocation5 + $0xc8] sm:$0xf]
    %v203 = vld [vmem:[#allocation5 + $0xcc] sm:$0xff]
    %v204 = vld [vmem:[#allocation5 + $0xd4] sm:$0xf]
    %v205 = vld [vmem:[#allocation5 + $0xd8] sm:$0xff]
    %v206 = vld [vmem:[#allocation5 + $0xe0] sm:$0xf]
    %v207 = vld [vmem:[#allocation5 + $0xe4] sm:$0xff]
    %v208 = vld [vmem:[#allocation5 + $0xec] sm:$0xf]
    %v209 = vld [vmem:[#allocation5 + $0xf0] sm:$0xff]
    %v210 = vld [vmem:[#allocation5 + $0xf8] sm:$0xf]
    %v211 = vld [vmem:[#allocation5 + $0xfc] sm:$0xff]
    %v212 = vld [vmem:[#allocation5 + $0x104] sm:$0xf]
    %v213 = vld [vmem:[#allocation5 + $0x108] sm:$0xff]
    %v214 = vld [vmem:[#allocation5 + $0x110] sm:$0xf]
    %v215 = vld [vmem:[#allocation5 + $0x114] sm:$0xff]
    %v216 = vld [vmem:[#allocation5 + $0x11c] sm:$0xf]
    %v217 = vld [vmem:[#allocation5 + $0x120] sm:$0xff]
    %v218 = vld [vmem:[#allocation5 + $0x128] sm:$0xf]
    %v219 = vld [vmem:[#allocation5 + $0x12c] sm:$0xff]
    %v220 = vld [vmem:[#allocation5 + $0x134] sm:$0xf]
    %v221 = vld [vmem:[#allocation5 + $0x138] sm:$0xff]
    %v222 = vld [vmem:[#allocation5 + $0x140] sm:$0xf]
    %v223 = vld [vmem:[#allocation5 + $0x144] sm:$0xff]
    %v224 = vld [vmem:[#allocation5 + $0x14c] sm:$0xf]
    %v225 = vld [vmem:[#allocation5 + $0x150] sm:$0xff]
    %v226 = vld [vmem:[#allocation5 + $0x158] sm:$0xf]
    %v227 = vld [vmem:[#allocation5 + $0x15c] sm:$0xff]
    %v228 = vld [vmem:[#allocation5 + $0x164] sm:$0xf]
    %v229 = vld [vmem:[#allocation5 + $0x168] sm:$0xff]
    %v230 = vld [vmem:[#allocation5 + $0x170] sm:$0xf]
    %v231 = vld [vmem:[#allocation5 + $0x174] sm:$0xff]
    %v232 = vld [vmem:[#allocation5 + $0x17c] sm:$0xf]
    %v233 = vld [vmem:[#allocation5 + $0x180] sm:$0xff]
    %v234 = vld [vmem:[#allocation5 + $0x188] sm:$0xf]
    %v235 = vld [vmem:[#allocation5 + $0x18c] sm:$0xff]
    %v236 = vld [vmem:[#allocation5 + $0x194] sm:$0xf]
    %v237 = vld [vmem:[#allocation5 + $0x198] sm:$0xff]
    %v238 = vld [vmem:[#allocation5 + $0x1a0] sm:$0xf]
    %v239 = vld [vmem:[#allocation5 + $0x1a4] sm:$0xff]
    %v240 = vld [vmem:[#allocation5 + $0x1ac] sm:$0xf]
    %v241 = vld [vmem:[#allocation5 + $0x1b0] sm:$0xff]
    %v242 = vld [vmem:[#allocation5 + $0x1b8] sm:$0xf]
    %v243 = vld [vmem:[#allocation5 + $0x1bc] sm:$0xff]
    %v244 = vld [vmem:[#allocation5 + $0x1c4] sm:$0xf]
    %v245 = vld [vmem:[#allocation5 + $0x1c8] sm:$0xff]
    %v246 = vld [vmem:[#allocation5 + $0x1d0] sm:$0xf]
    %v247 = vld [vmem:[#allocation5 + $0x1d4] sm:$0xff]
    %v248 = vld [vmem:[#allocation5 + $0x1dc] sm:$0xf]
    %v249 = vld [vmem:[#allocation5 + $0x1e0] sm:$0xff]
    %v250 = vld [vmem:[#allocation5 + $0x1e8] sm:$0xf]
    %v251 = vld [vmem:[#allocation5 + $0x1ec] sm:$0xff]
    %v252 = vld [vmem:[#allocation5 + $0x1f4] sm:$0xf]
    %v253 = vld [vmem:[#allocation5 + $0x1f8] sm:$0xff]
    %v254 = vld [vmem:[#allocation5 + $0x200] sm:$0xf]
    %v255 = vld [vmem:[#allocation5 + $0x204] sm:$0xff]
    %v256 = vld [vmem:[#allocation5 + $0x20c] sm:$0xf]
    %v257 = vld [vmem:[#allocation5 + $0x210] sm:$0xff]
    %v258 = vld [vmem:[#allocation5 + $0x218] sm:$0xf]
    %v259 = vld [vmem:[#allocation5 + $0x21c] sm:$0xff]
    %v260 = vld [vmem:[#allocation5 + $0x224] sm:$0xf]
    %v261 = vld [vmem:[#allocation5 + $0x228] sm:$0xff]
    %v262 = vld [vmem:[#allocation5 + $0x230] sm:$0xf]
    %v263 = vld [vmem:[#allocation5 + $0x234] sm:$0xff]
    %v264 = vld [vmem:[#allocation5 + $0x23c] sm:$0xf]
    %v393 = vunpack.c.l.b16 %v41
    %v394 = vunpack.c.h.b16 %v41
    %v395 = vunpack.c.l.b16 %v42
    %v396 = vunpack.c.l.b16 %v43
    %v397 = vunpack.c.h.b16 %v43
    %v398 = vunpack.c.l.b16 %v44
    %v399 = vunpack.c.l.b16 %v45
    %v400 = vunpack.c.h.b16 %v45
    %v401 = vunpack.c.l.b16 %v46
    %v402 = vunpack.c.l.b16 %v47
    %v403 = vunpack.c.h.b16 %v47
    %v404 = vunpack.c.l.b16 %v48
    %v405 = vunpack.c.l.b16 %v49
    %v406 = vunpack.c.h.b16 %v49
    %v407 = vunpack.c.l.b16 %v50
    %v408 = vunpack.c.l.b16 %v51
    %v409 = vunpack.c.h.b16 %v51
    %v410 = vunpack.c.l.b16 %v52
    %v411 = vunpack.c.l.b16 %v53
    %v412 = vunpack.c.h.b16 %v53
    %v413 = vunpack.c.l.b16 %v54
    %v414 = vunpack.c.l.b16 %v55
    %v415 = vunpack.c.h.b16 %v55
    %v416 = vunpack.c.l.b16 %v56
    %v417 = vunpack.c.l.b16 %v57
    %v418 = vunpack.c.h.b16 %v57
    %v419 = vunpack.c.l.b16 %v58
    %v420 = vunpack.c.l.b16 %v59
    %v421 = vunpack.c.h.b16 %v59
    %v422 = vunpack.c.l.b16 %v60
    %v423 = vunpack.c.l.b16 %v61
    %v424 = vunpack.c.h.b16 %v61
    %v425 = vunpack.c.l.b16 %v62
    %v426 = vunpack.c.l.b16 %v63
    %v427 = vunpack.c.h.b16 %v63
    %v428 = vunpack.c.l.b16 %v64
    %v429 = vunpack.c.l.b16 %v65
    %v430 = vunpack.c.h.b16 %v65
    %v431 = vunpack.c.l.b16 %v66
    %v432 = vunpack.c.l.b16 %v67
    %v433 = vunpack.c.h.b16 %v67
    %v434 = vunpack.c.l.b16 %v68
    %v435 = vunpack.c.l.b16 %v69
    %v436 = vunpack.c.h.b16 %v69
    %v437 = vunpack.c.l.b16 %v70
    %v438 = vunpack.c.l.b16 %v71
    %v439 = vunpack.c.h.b16 %v71
    %v440 = vunpack.c.l.b16 %v72
    %v441 = vunpack.c.l.b16 %v73
    %v442 = vunpack.c.h.b16 %v73
    %v443 = vunpack.c.l.b16 %v74
    %v444 = vunpack.c.l.b16 %v75
    %v445 = vunpack.c.h.b16 %v75
    %v446 = vunpack.c.l.b16 %v76
    %v447 = vunpack.c.l.b16 %v77
    %v448 = vunpack.c.h.b16 %v77
    %v449 = vunpack.c.l.b16 %v78
    %v450 = vunpack.c.l.b16 %v79
    %v451 = vunpack.c.h.b16 %v79
    %v452 = vunpack.c.l.b16 %v80
    %v453 = vunpack.c.l.b16 %v81
    %v454 = vunpack.c.h.b16 %v81
    %v455 = vunpack.c.l.b16 %v82
    %v456 = vunpack.c.l.b16 %v83
    %v457 = vunpack.c.h.b16 %v83
    %v458 = vunpack.c.l.b16 %v84
    %v459 = vunpack.c.l.b16 %v85
    %v460 = vunpack.c.h.b16 %v85
    %v461 = vunpack.c.l.b16 %v86
    %v462 = vunpack.c.l.b16 %v87
    %v463 = vunpack.c.h.b16 %v87
    %v464 = vunpack.c.l.b16 %v88
    %v465 = vunpack.c.l.b16 %v89
    %v466 = vunpack.c.h.b16 %v89
    %v467 = vunpack.c.l.b16 %v90
    %v468 = vunpack.c.l.b16 %v91
    %v469 = vunpack.c.h.b16 %v91
    %v470 = vunpack.c.l.b16 %v92
    %v471 = vunpack.c.l.b16 %v93
    %v472 = vunpack.c.h.b16 %v93
    %v473 = vunpack.c.l.b16 %v94
    %v474 = vunpack.c.l.b16 %v95
    %v475 = vunpack.c.h.b16 %v95
    %v476 = vunpack.c.l.b16 %v96
    %v477 = vunpack.c.l.b16 %v97
    %v478 = vunpack.c.h.b16 %v97
    %v479 = vunpack.c.l.b16 %v98
    %v480 = vunpack.c.l.b16 %v99
    %v481 = vunpack.c.h.b16 %v99
    %v482 = vunpack.c.l.b16 %v100
    %v483 = vunpack.c.l.b16 %v101
    %v484 = vunpack.c.h.b16 %v101
    %v485 = vunpack.c.l.b16 %v102
    %v486 = vunpack.c.l.b16 %v103
    %v487 = vunpack.c.h.b16 %v103
    %v488 = vunpack.c.l.b16 %v104
    %v489 = vunpack.c.l.b16 %v105
    %v490 = vunpack.c.h.b16 %v105
    %v491 = vunpack.c.l.b16 %v106
    %v492 = vunpack.c.l.b16 %v107
    %v493 = vunpack.c.h.b16 %v107
    %v494 = vunpack.c.l.b16 %v108
    %v495 = vunpack.c.l.b16 %v109
    %v496 = vunpack.c.h.b16 %v109
    %v497 = vunpack.c.l.b16 %v110
    %v498 = vunpack.c.l.b16 %v111
    %v499 = vunpack.c.h.b16 %v111
    %v500 = vunpack.c.l.b16 %v112
    %v501 = vunpack.c.l.b16 %v113
    %v502 = vunpack.c.h.b16 %v113
    %v503 = vunpack.c.l.b16 %v114
    %v504 = vunpack.c.l.b16 %v115
    %v505 = vunpack.c.h.b16 %v115
    %v506 = vunpack.c.l.b16 %v116
    %v507 = vunpack.c.l.b16 %v117
    %v508 = vunpack.c.h.b16 %v117
    %v509 = vunpack.c.l.b16 %v118
    %v510 = vunpack.c.l.b16 %v119
    %v511 = vunpack.c.h.b16 %v119
    %v512 = vunpack.c.l.b16 %v120
    %v513 = vunpack.c.l.b16 %v121
    %v514 = vunpack.c.h.b16 %v121
    %v515 = vunpack.c.l.b16 %v122
    %v516 = vunpack.c.l.b16 %v123
    %v517 = vunpack.c.h.b16 %v123
    %v518 = vunpack.c.l.b16 %v124
    %v519 = vunpack.c.l.b16 %v125
    %v520 = vunpack.c.h.b16 %v125
    %v521 = vunpack.c.l.b16 %v126
    %v522 = vunpack.c.l.b16 %v127
    %v523 = vunpack.c.h.b16 %v127
    %v524 = vunpack.c.l.b16 %v128
    %v525 = vunpack.c.l.b16 %v129
    %v526 = vunpack.c.h.b16 %v129
    %v527 = vunpack.c.l.b16 %v130
    %v528 = vunpack.c.l.b16 %v131
    %v529 = vunpack.c.h.b16 %v131
    %v530 = vunpack.c.l.b16 %v132
    %v531 = vunpack.c.l.b16 %v133
    %v532 = vunpack.c.h.b16 %v133
    %v533 = vunpack.c.l.b16 %v134
    %v534 = vunpack.c.l.b16 %v135
    %v535 = vunpack.c.h.b16 %v135
    %v536 = vunpack.c.l.b16 %v136
    %v537 = vunpack.c.l.b16 %v137
    %v538 = vunpack.c.h.b16 %v137
    %v539 = vunpack.c.l.b16 %v138
    %v540 = vunpack.c.l.b16 %v139
    %v541 = vunpack.c.h.b16 %v139
    %v542 = vunpack.c.l.b16 %v140
    %v543 = vunpack.c.l.b16 %v141
    %v544 = vunpack.c.h.b16 %v141
    %v545 = vunpack.c.l.b16 %v142
    %v546 = vunpack.c.l.b16 %v143
    %v547 = vunpack.c.h.b16 %v143
    %v548 = vunpack.c.l.b16 %v144
    %v549 = vunpack.c.l.b16 %v145
    %v550 = vunpack.c.h.b16 %v145
    %v551 = vunpack.c.l.b16 %v146
    %v552 = vunpack.c.l.b16 %v147
    %v553 = vunpack.c.h.b16 %v147
    %v554 = vunpack.c.l.b16 %v148
    %v555 = vunpack.c.l.b16 %v149
    %v556 = vunpack.c.h.b16 %v149
    %v557 = vunpack.c.l.b16 %v150
    %v558 = vunpack.c.l.b16 %v151
    %v559 = vunpack.c.h.b16 %v151
    %v560 = vunpack.c.l.b16 %v152
    %v561 = vunpack.c.l.b16 %v153
    %v562 = vunpack.c.h.b16 %v153
    %v563 = vunpack.c.l.b16 %v154
    %v564 = vunpack.c.l.b16 %v155
    %v565 = vunpack.c.h.b16 %v155
    %v566 = vunpack.c.l.b16 %v156
    %v567 = vunpack.c.l.b16 %v157
    %v568 = vunpack.c.h.b16 %v157
    %v569 = vunpack.c.l.b16 %v158
    %v570 = vunpack.c.l.b16 %v159
    %v571 = vunpack.c.h.b16 %v159
    %v572 = vunpack.c.l.b16 %v160
    %v573 = vunpack.c.l.b16 %v161
    %v574 = vunpack.c.h.b16 %v161
    %v575 = vunpack.c.l.b16 %v162
    %v576 = vunpack.c.l.b16 %v163
    %v577 = vunpack.c.h.b16 %v163
    %v578 = vunpack.c.l.b16 %v164
    %v579 = vunpack.c.l.b16 %v165
    %v580 = vunpack.c.h.b16 %v165
    %v581 = vunpack.c.l.b16 %v166
    %v582 = vunpack.c.l.b16 %v167
    %v583 = vunpack.c.h.b16 %v167
    %v584 = vunpack.c.l.b16 %v168
    %v585 = vpack.c.b16 %v396, %v393
    %v586 = vpack.c.b16 %v397, %v394
    %v587 = vpack.c.b16 %v398, %v395
    %v588 = vpack.c.b16 %v402, %v399
    %v589 = vpack.c.b16 %v403, %v400
    %v590 = vpack.c.b16 %v404, %v401
    %v591 = vpack.c.b16 %v408, %v405
    %v592 = vpack.c.b16 %v409, %v406
    %v593 = vpack.c.b16 %v410, %v407
    %v594 = vpack.c.b16 %v414, %v411
    %v595 = vpack.c.b16 %v415, %v412
    %v596 = vpack.c.b16 %v416, %v413
    %v597 = vpack.c.b16 %v420, %v417
    %v598 = vpack.c.b16 %v421, %v418
    %v599 = vpack.c.b16 %v422, %v419
    %v600 = vpack.c.b16 %v426, %v423
    %v601 = vpack.c.b16 %v427, %v424
    %v602 = vpack.c.b16 %v428, %v425
    %v603 = vpack.c.b16 %v432, %v429
    %v604 = vpack.c.b16 %v433, %v430
    %v605 = vpack.c.b16 %v434, %v431
    %v606 = vpack.c.b16 %v438, %v435
    %v607 = vpack.c.b16 %v439, %v436
    %v608 = vpack.c.b16 %v440, %v437
    %v609 = vpack.c.b16 %v444, %v441
    %v610 = vpack.c.b16 %v445, %v442
    %v611 = vpack.c.b16 %v446, %v443
    %v612 = vpack.c.b16 %v450, %v447
    %v613 = vpack.c.b16 %v451, %v448
    %v614 = vpack.c.b16 %v452, %v449
    %v615 = vpack.c.b16 %v456, %v453
    %v616 = vpack.c.b16 %v457, %v454
    %v617 = vpack.c.b16 %v458, %v455
    %v618 = vpack.c.b16 %v462, %v459
    %v619 = vpack.c.b16 %v463, %v460
    %v620 = vpack.c.b16 %v464, %v461
    %v621 = vpack.c.b16 %v468, %v465
    %v622 = vpack.c.b16 %v469, %v466
    %v623 = vpack.c.b16 %v470, %v467
    %v624 = vpack.c.b16 %v474, %v471
    %v625 = vpack.c.b16 %v475, %v472
    %v626 = vpack.c.b16 %v476, %v473
    %v627 = vpack.c.b16 %v480, %v477
    %v628 = vpack.c.b16 %v481, %v478
    %v629 = vpack.c.b16 %v482, %v479
    %v630 = vpack.c.b16 %v486, %v483
    %v631 = vpack.c.b16 %v487, %v484
    %v632 = vpack.c.b16 %v488, %v485
    %v633 = vpack.c.b16 %v492, %v489
    %v634 = vpack.c.b16 %v493, %v490
    %v635 = vpack.c.b16 %v494, %v491
    %v636 = vpack.c.b16 %v498, %v495
    %v637 = vpack.c.b16 %v499, %v496
    %v638 = vpack.c.b16 %v500, %v497
    %v639 = vpack.c.b16 %v504, %v501
    %v640 = vpack.c.b16 %v505, %v502
    %v641 = vpack.c.b16 %v506, %v503
    %v642 = vpack.c.b16 %v510, %v507
    %v643 = vpack.c.b16 %v511, %v508
    %v644 = vpack.c.b16 %v512, %v509
    %v645 = vpack.c.b16 %v516, %v513
    %v646 = vpack.c.b16 %v517, %v514
    %v647 = vpack.c.b16 %v518, %v515
    %v648 = vpack.c.b16 %v522, %v519
    %v649 = vpack.c.b16 %v523, %v520
    %v650 = vpack.c.b16 %v524, %v521
    %v651 = vpack.c.b16 %v528, %v525
    %v652 = vpack.c.b16 %v529, %v526
    %v653 = vpack.c.b16 %v530, %v527
    %v654 = vpack.c.b16 %v534, %v531
    %v655 = vpack.c.b16 %v535, %v532
    %v656 = vpack.c.b16 %v536, %v533
    %v657 = vpack.c.b16 %v540, %v537
    %v658 = vpack.c.b16 %v541, %v538
    %v659 = vpack.c.b16 %v542, %v539
    %v660 = vpack.c.b16 %v546, %v543
    %v661 = vpack.c.b16 %v547, %v544
    %v662 = vpack.c.b16 %v548, %v545
    %v663 = vpack.c.b16 %v552, %v549
    %v664 = vpack.c.b16 %v553, %v550
    %v665 = vpack.c.b16 %v554, %v551
    %v666 = vpack.c.b16 %v558, %v555
    %v667 = vpack.c.b16 %v559, %v556
    %v668 = vpack.c.b16 %v560, %v557
    %v669 = vpack.c.b16 %v564, %v561
    %v670 = vpack.c.b16 %v565, %v562
    %v671 = vpack.c.b16 %v566, %v563
    %v672 = vpack.c.b16 %v570, %v567
    %v673 = vpack.c.b16 %v571, %v568
    %v674 = vpack.c.b16 %v572, %v569
    %v675 = vpack.c.b16 %v576, %v573
    %v676 = vpack.c.b16 %v577, %v574
    %v677 = vpack.c.b16 %v578, %v575
    %v678 = vpack.c.b16 %v582, %v579
    %v679 = vpack.c.b16 %v583, %v580
    %v680 = vpack.c.b16 %v584, %v581
    %v873 = vunpack.c.l.b16 %v169
    %v874 = vunpack.c.h.b16 %v169
    %v875 = vunpack.c.l.b16 %v170
    %v876 = vunpack.c.l.b16 %v171
    %v877 = vunpack.c.h.b16 %v171
    %v878 = vunpack.c.l.b16 %v172
    %v879 = vunpack.c.l.b16 %v173
    %v880 = vunpack.c.h.b16 %v173
    %v881 = vunpack.c.l.b16 %v174
    %v882 = vunpack.c.l.b16 %v175
    %v883 = vunpack.c.h.b16 %v175
    %v884 = vunpack.c.l.b16 %v176
    %v885 = vunpack.c.l.b16 %v177
    %v886 = vunpack.c.h.b16 %v177
    %v887 = vunpack.c.l.b16 %v178
    %v888 = vunpack.c.l.b16 %v179
    %v889 = vunpack.c.h.b16 %v179
    %v890 = vunpack.c.l.b16 %v180
    %v891 = vunpack.c.l.b16 %v181
    %v892 = vunpack.c.h.b16 %v181
    %v893 = vunpack.c.l.b16 %v182
    %v894 = vunpack.c.l.b16 %v183
    %v895 = vunpack.c.h.b16 %v183
    %v896 = vunpack.c.l.b16 %v184
    %v897 = vunpack.c.l.b16 %v185
    %v898 = vunpack.c.h.b16 %v185
    %v899 = vunpack.c.l.b16 %v186
    %v900 = vunpack.c.l.b16 %v187
    %v901 = vunpack.c.h.b16 %v187
    %v902 = vunpack.c.l.b16 %v188
    %v903 = vunpack.c.l.b16 %v189
    %v904 = vunpack.c.h.b16 %v189
    %v905 = vunpack.c.l.b16 %v190
    %v906 = vunpack.c.l.b16 %v191
    %v907 = vunpack.c.h.b16 %v191
    %v908 = vunpack.c.l.b16 %v192
    %v909 = vunpack.c.l.b16 %v193
    %v910 = vunpack.c.h.b16 %v193
    %v911 = vunpack.c.l.b16 %v194
    %v912 = vunpack.c.l.b16 %v195
    %v913 = vunpack.c.h.b16 %v195
    %v914 = vunpack.c.l.b16 %v196
    %v915 = vunpack.c.l.b16 %v197
    %v916 = vunpack.c.h.b16 %v197
    %v917 = vunpack.c.l.b16 %v198
    %v918 = vunpack.c.l.b16 %v199
    %v919 = vunpack.c.h.b16 %v199
    %v920 = vunpack.c.l.b16 %v200
    %v921 = vunpack.c.l.b16 %v201
    %v922 = vunpack.c.h.b16 %v201
    %v923 = vunpack.c.l.b16 %v202
    %v924 = vunpack.c.l.b16 %v203
    %v925 = vunpack.c.h.b16 %v203
    %v926 = vunpack.c.l.b16 %v204
    %v927 = vunpack.c.l.b16 %v205
    %v928 = vunpack.c.h.b16 %v205
    %v929 = vunpack.c.l.b16 %v206
    %v930 = vunpack.c.l.b16 %v207
    %v931 = vunpack.c.h.b16 %v207
    %v932 = vunpack.c.l.b16 %v208
    %v933 = vunpack.c.l.b16 %v209
    %v934 = vunpack.c.h.b16 %v209
    %v935 = vunpack.c.l.b16 %v210
    %v936 = vunpack.c.l.b16 %v211
    %v937 = vunpack.c.h.b16 %v211
    %v938 = vunpack.c.l.b16 %v212
    %v939 = vunpack.c.l.b16 %v213
    %v940 = vunpack.c.h.b16 %v213
    %v941 = vunpack.c.l.b16 %v214
    %v942 = vunpack.c.l.b16 %v215
    %v943 = vunpack.c.h.b16 %v215
    %v944 = vunpack.c.l.b16 %v216
    %v945 = vunpack.c.l.b16 %v217
    %v946 = vunpack.c.h.b16 %v217
    %v947 = vunpack.c.l.b16 %v218
    %v948 = vunpack.c.l.b16 %v219
    %v949 = vunpack.c.h.b16 %v219
    %v950 = vunpack.c.l.b16 %v220
    %v951 = vunpack.c.l.b16 %v221
    %v952 = vunpack.c.h.b16 %v221
    %v953 = vunpack.c.l.b16 %v222
    %v954 = vunpack.c.l.b16 %v223
    %v955 = vunpack.c.h.b16 %v223
    %v956 = vunpack.c.l.b16 %v224
    %v957 = vunpack.c.l.b16 %v225
    %v958 = vunpack.c.h.b16 %v225
    %v959 = vunpack.c.l.b16 %v226
    %v960 = vunpack.c.l.b16 %v227
    %v961 = vunpack.c.h.b16 %v227
    %v962 = vunpack.c.l.b16 %v228
    %v963 = vunpack.c.l.b16 %v229
    %v964 = vunpack.c.h.b16 %v229
    %v965 = vunpack.c.l.b16 %v230
    %v966 = vunpack.c.l.b16 %v231
    %v967 = vunpack.c.h.b16 %v231
    %v968 = vunpack.c.l.b16 %v232
    %v969 = vunpack.c.l.b16 %v233
    %v970 = vunpack.c.h.b16 %v233
    %v971 = vunpack.c.l.b16 %v234
    %v972 = vunpack.c.l.b16 %v235
    %v973 = vunpack.c.h.b16 %v235
    %v974 = vunpack.c.l.b16 %v236
    %v975 = vunpack.c.l.b16 %v237
    %v976 = vunpack.c.h.b16 %v237
    %v977 = vunpack.c.l.b16 %v238
    %v978 = vunpack.c.l.b16 %v239
    %v979 = vunpack.c.h.b16 %v239
    %v980 = vunpack.c.l.b16 %v240
    %v981 = vunpack.c.l.b16 %v241
    %v982 = vunpack.c.h.b16 %v241
    %v983 = vunpack.c.l.b16 %v242
    %v984 = vunpack.c.l.b16 %v243
    %v985 = vunpack.c.h.b16 %v243
    %v986 = vunpack.c.l.b16 %v244
    %v987 = vunpack.c.l.b16 %v245
    %v988 = vunpack.c.h.b16 %v245
    %v989 = vunpack.c.l.b16 %v246
    %v990 = vunpack.c.l.b16 %v247
    %v991 = vunpack.c.h.b16 %v247
    %v992 = vunpack.c.l.b16 %v248
    %v993 = vunpack.c.l.b16 %v249
    %v994 = vunpack.c.h.b16 %v249
    %v995 = vunpack.c.l.b16 %v250
    %v996 = vunpack.c.l.b16 %v251
    %v997 = vunpack.c.h.b16 %v251
    %v998 = vunpack.c.l.b16 %v252
    %v999 = vunpack.c.l.b16 %v253
    %v1000 = vunpack.c.h.b16 %v253
    %v1001 = vunpack.c.l.b16 %v254
    %v1002 = vunpack.c.l.b16 %v255
    %v1003 = vunpack.c.h.b16 %v255
    %v1004 = vunpack.c.l.b16 %v256
    %v1005 = vunpack.c.l.b16 %v257
    %v1006 = vunpack.c.h.b16 %v257
    %v1007 = vunpack.c.l.b16 %v258
    %v1008 = vunpack.c.l.b16 %v259
    %v1009 = vunpack.c.h.b16 %v259
    %v1010 = vunpack.c.l.b16 %v260
    %v1011 = vunpack.c.l.b16 %v261
    %v1012 = vunpack.c.h.b16 %v261
    %v1013 = vunpack.c.l.b16 %v262
    %v1014 = vunpack.c.l.b16 %v263
    %v1015 = vunpack.c.h.b16 %v263
    %v1016 = vunpack.c.l.b16 %v264
    %v1017 = vpack.c.b16 %v876, %v873
    %v1018 = vpack.c.b16 %v877, %v874
    %v1019 = vpack.c.b16 %v878, %v875
    %v1020 = vpack.c.b16 %v882, %v879
    %v1021 = vpack.c.b16 %v883, %v880
    %v1022 = vpack.c.b16 %v884, %v881
    %v1023 = vpack.c.b16 %v888, %v885
    %v1024 = vpack.c.b16 %v889, %v886
    %v1025 = vpack.c.b16 %v890, %v887
    %v1026 = vpack.c.b16 %v894, %v891
    %v1027 = vpack.c.b16 %v895, %v892
    %v1028 = vpack.c.b16 %v896, %v893
    %v1029 = vpack.c.b16 %v900, %v897
    %v1030 = vpack.c.b16 %v901, %v898
    %v1031 = vpack.c.b16 %v902, %v899
    %v1032 = vpack.c.b16 %v906, %v903
    %v1033 = vpack.c.b16 %v907, %v904
    %v1034 = vpack.c.b16 %v908, %v905
    %v1035 = vpack.c.b16 %v912, %v909
    %v1036 = vpack.c.b16 %v913, %v910
    %v1037 = vpack.c.b16 %v914, %v911
    %v1038 = vpack.c.b16 %v918, %v915
    %v1039 = vpack.c.b16 %v919, %v916
    %v1040 = vpack.c.b16 %v920, %v917
    %v1041 = vpack.c.b16 %v924, %v921
    %v1042 = vpack.c.b16 %v925, %v922
    %v1043 = vpack.c.b16 %v926, %v923
    %v1044 = vpack.c.b16 %v930, %v927
    %v1045 = vpack.c.b16 %v931, %v928
    %v1046 = vpack.c.b16 %v932, %v929
    %v1047 = vpack.c.b16 %v936, %v933
    %v1048 = vpack.c.b16 %v937, %v934
    %v1049 = vpack.c.b16 %v938, %v935
    %v1050 = vpack.c.b16 %v942, %v939
    %v1051 = vpack.c.b16 %v943, %v940
    %v1052 = vpack.c.b16 %v944, %v941
    %v1053 = vpack.c.b16 %v948, %v945
    %v1054 = vpack.c.b16 %v949, %v946
    %v1055 = vpack.c.b16 %v950, %v947
    %v1056 = vpack.c.b16 %v954, %v951
    %v1057 = vpack.c.b16 %v955, %v952
    %v1058 = vpack.c.b16 %v956, %v953
    %v1059 = vpack.c.b16 %v960, %v957
    %v1060 = vpack.c.b16 %v961, %v958
    %v1061 = vpack.c.b16 %v962, %v959
    %v1062 = vpack.c.b16 %v966, %v963
    %v1063 = vpack.c.b16 %v967, %v964
    %v1064 = vpack.c.b16 %v968, %v965
    %v1065 = vpack.c.b16 %v972, %v969
    %v1066 = vpack.c.b16 %v973, %v970
    %v1067 = vpack.c.b16 %v974, %v971
    %v1068 = vpack.c.b16 %v978, %v975
    %v1069 = vpack.c.b16 %v979, %v976
    %v1070 = vpack.c.b16 %v980, %v977
    %v1071 = vpack.c.b16 %v984, %v981
    %v1072 = vpack.c.b16 %v985, %v982
    %v1073 = vpack.c.b16 %v986, %v983
    %v1074 = vpack.c.b16 %v990, %v987
    %v1075 = vpack.c.b16 %v991, %v988
    %v1076 = vpack.c.b16 %v992, %v989
    %v1077 = vpack.c.b16 %v996, %v993
    %v1078 = vpack.c.b16 %v997, %v994
    %v1079 = vpack.c.b16 %v998, %v995
    %v1080 = vpack.c.b16 %v1002, %v999
    %v1081 = vpack.c.b16 %v1003, %v1000
    %v1082 = vpack.c.b16 %v1004, %v1001
    %v1083 = vpack.c.b16 %v1008, %v1005
    %v1084 = vpack.c.b16 %v1009, %v1006
    %v1085 = vpack.c.b16 %v1010, %v1007
    %v1086 = vpack.c.b16 %v1014, %v1011
    %v1087 = vpack.c.b16 %v1015, %v1012
    %v1088 = vpack.c.b16 %v1016, %v1013
    %1161 = vmatprep.subr.bf16.mxu0 %v1018
    %1162 = vmatpush1.bf16.msra.mxu0 %v1017
    %1163 = vmatprep.subr.bf16.mxu0 %v1021
    %1164 = vmatpush1.bf16.msra.mxu0 %v1020
    %1165 = vmatprep.subr.bf16.mxu0 %v1024
    %1166 = vmatpush1.bf16.msra.mxu0 %v1023
    %1167 = vmatprep.subr.bf16.mxu0 %v1027
    %1168 = vmatpush1.bf16.msra.mxu0 %v1026
    %1169 = vmatprep.subr.bf16.mxu0 %v1030
    %1170 = vmatpush1.bf16.msra.mxu0 %v1029
    %1171 = vmatprep.subr.bf16.mxu0 %v1033
    %1172 = vmatpush1.bf16.msra.mxu0 %v1032
    %1173 = vmatprep.subr.bf16.mxu0 %v1036
    %1174 = vmatpush1.bf16.msra.mxu0 %v1035
    %1175 = vmatprep.subr.bf16.mxu0 %v1039
    %1176 = vmatpush1.bf16.msra.mxu0 %v1038
    %1177 = vmatprep.subr.bf16.mxu0 %v1042
    %1178 = vmatpush1.bf16.msra.mxu0 %v1041
    %1179 = vmatprep.subr.bf16.mxu0 %v1045
    %1180 = vmatpush1.bf16.msra.mxu0 %v1044
    %1181 = vmatprep.subr.bf16.mxu0 %v1048
    %1182 = vmatpush1.bf16.msra.mxu0 %v1047
    %1183 = vmatprep.subr.bf16.mxu0 %v1051
    %1184 = vmatpush1.bf16.msra.mxu0 %v1050
    %1185 = vmatprep.subr.bf16.mxu0 %v1054
    %1186 = vmatpush1.bf16.msra.mxu0 %v1053
    %1187 = vmatprep.subr.bf16.mxu0 %v1057
    %1188 = vmatpush1.bf16.msra.mxu0 %v1056
    %1189 = vmatprep.subr.bf16.mxu0 %v1060
    %1190 = vmatpush1.bf16.msra.mxu0 %v1059
    %1191 = vmatprep.subr.bf16.mxu0 %v1063
    %1192 = vmatpush1.bf16.msra.mxu0 %v1062
    %1193 = vmatprep.mubr.bf16.mxu0 %v586
    %1194 = vmatmul.mubr.bf16.gmra.mrb[0].mxu0 %v585
    %v1195 = vpop.f32.mrb[0].mxu0
    %v1196 = vadd.f32 0.0, %v1195
    %v1197 = vpop.f32.mrb[0].mxu0
    %v1198 = vadd.f32 0.0, %v1197
    %v1199 = vpop.f32.mrb[0].mxu0
    %v1200 = vadd.f32 0.0, %v1199
    %v1201 = vpop.f32.mrb[0].mxu0
    %v1202 = vadd.f32 0.0, %v1201
    %1203 = vmatprep.mubr.bf16.mxu0 %v589
    %1204 = vmatmul.mubr.bf16.gmra.mrb[0].mxu0 %v588
    %v1205 = vpop.f32.mrb[0].mxu0
    %v1206 = vadd.f32 0.0, %v1205
    %v1207 = vpop.f32.mrb[0].mxu0
    %v1208 = vadd.f32 0.0, %v1207
    %v1209 = vpop.f32.mrb[0].mxu0
    %v1210 = vadd.f32 0.0, %v1209
    %v1211 = vpop.f32.mrb[0].mxu0
    %v1212 = vadd.f32 0.0, %v1211
    %1213 = vmatprep.mubr.bf16.mxu0 %v592
    %1214 = vmatmul.mubr.bf16.gmra.mrb[0].mxu0 %v591
    %v1215 = vpop.f32.mrb[0].mxu0
    %v1216 = vadd.f32 0.0, %v1215
    %v1217 = vpop.f32.mrb[0].mxu0
    %v1218 = vadd.f32 0.0, %v1217
    %v1219 = vpop.f32.mrb[0].mxu0
    %v1220 = vadd.f32 0.0, %v1219
    %v1221 = vpop.f32.mrb[0].mxu0
    %v1222 = vadd.f32 0.0, %v1221
    %1223 = vmatprep.mubr.bf16.mxu0 %v595
    %1224 = vmatmul.mubr.bf16.gmra.mrb[0].mxu0 %v594
    %v1225 = vpop.f32.mrb[0].mxu0
    %v1226 = vadd.f32 0.0, %v1225
    %v1227 = vpop.f32.mrb[0].mxu0
    %v1228 = vadd.f32 0.0, %v1227
    %v1229 = vpop.f32.mrb[0].mxu0
    %v1230 = vadd.f32 0.0, %v1229
    %v1231 = vpop.f32.mrb[0].mxu0
    %v1232 = vadd.f32 0.0, %v1231
    %1233 = vmatprep.mubr.bf16.mxu0 %v598
    %1234 = vmatmul.mubr.bf16.gmra.mrb[0].mxu0 %v597
    %v1235 = vpop.f32.mrb[0].mxu0
    %v1236 = vadd.f32 0.0, %v1235
    %v1237 = vpop.f32.mrb[0].mxu0
    %v1238 = vadd.f32 0.0, %v1237
    %v1239 = vpop.f32.mrb[0].mxu0
    %v1240 = vadd.f32 0.0, %v1239
    %v1241 = vpop.f32.mrb[0].mxu0
    %v1242 = vadd.f32 0.0, %v1241
    %1243 = vmatprep.mubr.bf16.mxu0 %v601
    %1244 = vmatmul.mubr.bf16.gmra.mrb[0].mxu0 %v600
    %v1245 = vpop.f32.mrb[0].mxu0
    %v1246 = vadd.f32 0.0, %v1245
    %v1247 = vpop.f32.mrb[0].mxu0
    %v1248 = vadd.f32 0.0, %v1247
    %v1249 = vpop.f32.mrb[0].mxu0
    %v1250 = vadd.f32 0.0, %v1249
    %v1251 = vpop.f32.mrb[0].mxu0
    %v1252 = vadd.f32 0.0, %v1251
    %1253 = vmatprep.mubr.bf16.mxu0 %v604
    %1254 = vmatmul.mubr.bf16.gmra.mrb[0].mxu0 %v603
    %v1255 = vpop.f32.mrb[0].mxu0
    %v1256 = vadd.f32 0.0, %v1255
    %v1257 = vpop.f32.mrb[0].mxu0
    %v1258 = vadd.f32 0.0, %v1257
    %v1259 = vpop.f32.mrb[0].mxu0
    %v1260 = vadd.f32 0.0, %v1259
    %v1261 = vpop.f32.mrb[0].mxu0
    %v1262 = vadd.f32 0.0, %v1261
    %1263 = vmatprep.mubr.bf16.mxu0 %v607
    %1264 = vmatmul.mubr.bf16.gmra.mrb[0].mxu0 %v606
    %v1265 = vpop.f32.mrb[0].mxu0
    %v1266 = vadd.f32 0.0, %v1265
    %v1267 = vpop.f32.mrb[0].mxu0
    %v1268 = vadd.f32 0.0, %v1267
    %v1269 = vpop.f32.mrb[0].mxu0
    %v1270 = vadd.f32 0.0, %v1269
    %v1271 = vpop.f32.mrb[0].mxu0
    %v1272 = vadd.f32 0.0, %v1271
    %1273 = vmatprep.mubr.bf16.mxu0 %v610
    %1274 = vmatmul.mubr.bf16.gmra.mrb[0].mxu0 %v609
    %v1275 = vpop.f32.mrb[0].mxu0
    %v1276 = vadd.f32 0.0, %v1275
    %v1277 = vpop.f32.mrb[0].mxu0
    %v1278 = vadd.f32 0.0, %v1277
    %v1279 = vpop.f32.mrb[0].mxu0
    %v1280 = vadd.f32 0.0, %v1279
    %v1281 = vpop.f32.mrb[0].mxu0
    %v1282 = vadd.f32 0.0, %v1281
    %1283 = vmatprep.mubr.bf16.mxu0 %v613
    %1284 = vmatmul.mubr.bf16.gmra.mrb[0].mxu0 %v612
    %v1285 = vpop.f32.mrb[0].mxu0
    %v1286 = vadd.f32 0.0, %v1285
    %v1287 = vpop.f32.mrb[0].mxu0
    %v1288 = vadd.f32 0.0, %v1287
    %v1289 = vpop.f32.mrb[0].mxu0
    %v1290 = vadd.f32 0.0, %v1289
    %v1291 = vpop.f32.mrb[0].mxu0
    %v1292 = vadd.f32 0.0, %v1291
    %1293 = vmatprep.mubr.bf16.mxu0 %v616
    %1294 = vmatmul.mubr.bf16.gmra.mrb[0].mxu0 %v615
    %v1295 = vpop.f32.mrb[0].mxu0
    %v1296 = vadd.f32 0.0, %v1295
    %v1297 = vpop.f32.mrb[0].mxu0
    %v1298 = vadd.f32 0.0, %v1297
    %v1299 = vpop.f32.mrb[0].mxu0
    %v1300 = vadd.f32 0.0, %v1299
    %v1301 = vpop.f32.mrb[0].mxu0
    %v1302 = vadd.f32 0.0, %v1301
    %1303 = vmatprep.mubr.bf16.mxu0 %v619
    %1304 = vmatmul.mubr.bf16.gmra.mrb[0].mxu0 %v618
    %v1305 = vpop.f32.mrb[0].mxu0
    %v1306 = vadd.f32 0.0, %v1305
    %v1307 = vpop.f32.mrb[0].mxu0
    %v1308 = vadd.f32 0.0, %v1307
    %v1309 = vpop.f32.mrb[0].mxu0
    %v1310 = vadd.f32 0.0, %v1309
    %v1311 = vpop.f32.mrb[0].mxu0
    %v1312 = vadd.f32 0.0, %v1311
    %1313 = vmatprep.mubr.bf16.mxu0 %v622
    %1314 = vmatmul.mubr.bf16.gmra.mrb[0].mxu0 %v621
    %v1315 = vpop.f32.mrb[0].mxu0
    %v1316 = vadd.f32 0.0, %v1315
    %v1317 = vpop.f32.mrb[0].mxu0
    %v1318 = vadd.f32 0.0, %v1317
    %v1319 = vpop.f32.mrb[0].mxu0
    %v1320 = vadd.f32 0.0, %v1319
    %v1321 = vpop.f32.mrb[0].mxu0
    %v1322 = vadd.f32 0.0, %v1321
    %1323 = vmatprep.mubr.bf16.mxu0 %v625
    %1324 = vmatmul.mubr.bf16.gmra.mrb[0].mxu0 %v624
    %v1325 = vpop.f32.mrb[0].mxu0
    %v1326 = vadd.f32 0.0, %v1325
    %v1327 = vpop.f32.mrb[0].mxu0
    %v1328 = vadd.f32 0.0, %v1327
    %v1329 = vpop.f32.mrb[0].mxu0
    %v1330 = vadd.f32 0.0, %v1329
    %v1331 = vpop.f32.mrb[0].mxu0
    %v1332 = vadd.f32 0.0, %v1331
    %1333 = vmatprep.mubr.bf16.mxu0 %v628
    %1334 = vmatmul.mubr.bf16.gmra.mrb[0].mxu0 %v627
    %v1335 = vpop.f32.mrb[0].mxu0
    %v1336 = vadd.f32 0.0, %v1335
    %v1337 = vpop.f32.mrb[0].mxu0
    %v1338 = vadd.f32 0.0, %v1337
    %v1339 = vpop.f32.mrb[0].mxu0
    %v1340 = vadd.f32 0.0, %v1339
    %v1341 = vpop.f32.mrb[0].mxu0
    %v1342 = vadd.f32 0.0, %v1341
    %1343 = vmatprep.mubr.bf16.mxu0 %v631
    %1344 = vmatmul.mubr.bf16.gmra.mrb[0].mxu0 %v630
    %v1345 = vpop.f32.mrb[0].mxu0
    %v1346 = vadd.f32 0.0, %v1345
    %v1347 = vpop.f32.mrb[0].mxu0
    %v1348 = vadd.f32 0.0, %v1347
    %v1349 = vpop.f32.mrb[0].mxu0
    %v1350 = vadd.f32 0.0, %v1349
    %v1351 = vpop.f32.mrb[0].mxu0
    %v1352 = vadd.f32 0.0, %v1351
    %1353 = vmatprep.mubr.bf16.mxu0 %v634
    %1354 = vmatmul.mubr.bf16.gmra.mrb[0].mxu0 %v633
    %v1355 = vpop.f32.mrb[0].mxu0
    %v1356 = vadd.f32 0.0, %v1355
    %v1357 = vpop.f32.mrb[0].mxu0
    %v1358 = vadd.f32 0.0, %v1357
    %v1359 = vpop.f32.mrb[0].mxu0
    %v1360 = vadd.f32 0.0, %v1359
    %v1361 = vpop.f32.mrb[0].mxu0
    %v1362 = vadd.f32 0.0, %v1361
    %1363 = vmatprep.mubr.bf16.mxu0 %v637
    %1364 = vmatmul.mubr.bf16.gmra.mrb[0].mxu0 %v636
    %v1365 = vpop.f32.mrb[0].mxu0
    %v1366 = vadd.f32 0.0, %v1365
    %v1367 = vpop.f32.mrb[0].mxu0
    %v1368 = vadd.f32 0.0, %v1367
    %v1369 = vpop.f32.mrb[0].mxu0
    %v1370 = vadd.f32 0.0, %v1369
    %v1371 = vpop.f32.mrb[0].mxu0
    %v1372 = vadd.f32 0.0, %v1371
    %1373 = vmatprep.mubr.bf16.mxu0 %v640
    %1374 = vmatmul.mubr.bf16.gmra.mrb[0].mxu0 %v639
    %v1375 = vpop.f32.mrb[0].mxu0
    %v1376 = vadd.f32 0.0, %v1375
    %v1377 = vpop.f32.mrb[0].mxu0
    %v1378 = vadd.f32 0.0, %v1377
    %v1379 = vpop.f32.mrb[0].mxu0
    %v1380 = vadd.f32 0.0, %v1379
    %v1381 = vpop.f32.mrb[0].mxu0
    %v1382 = vadd.f32 0.0, %v1381
    %1383 = vmatprep.mubr.bf16.mxu0 %v643
    %1384 = vmatmul.mubr.bf16.gmra.mrb[0].mxu0 %v642
    %v1385 = vpop.f32.mrb[0].mxu0
    %v1386 = vadd.f32 0.0, %v1385
    %v1387 = vpop.f32.mrb[0].mxu0
    %v1388 = vadd.f32 0.0, %v1387
    %v1389 = vpop.f32.mrb[0].mxu0
    %v1390 = vadd.f32 0.0, %v1389
    %v1391 = vpop.f32.mrb[0].mxu0
    %v1392 = vadd.f32 0.0, %v1391
    %1393 = vmatprep.mubr.bf16.mxu0 %v646
    %1394 = vmatmul.mubr.bf16.gmra.mrb[0].mxu0 %v645
    %v1395 = vpop.f32.mrb[0].mxu0
    %v1396 = vadd.f32 0.0, %v1395
    %v1397 = vpop.f32.mrb[0].mxu0
    %v1398 = vadd.f32 0.0, %v1397
    %v1399 = vpop.f32.mrb[0].mxu0
    %v1400 = vadd.f32 0.0, %v1399
    %v1401 = vpop.f32.mrb[0].mxu0
    %v1402 = vadd.f32 0.0, %v1401
    %1403 = vmatprep.mubr.bf16.mxu0 %v649
    %1404 = vmatmul.mubr.bf16.gmra.mrb[0].mxu0 %v648
    %v1405 = vpop.f32.mrb[0].mxu0
    %v1406 = vadd.f32 0.0, %v1405
    %v1407 = vpop.f32.mrb[0].mxu0
    %v1408 = vadd.f32 0.0, %v1407
    %v1409 = vpop.f32.mrb[0].mxu0
    %v1410 = vadd.f32 0.0, %v1409
    %v1411 = vpop.f32.mrb[0].mxu0
    %v1412 = vadd.f32 0.0, %v1411
    %1413 = vmatprep.mubr.bf16.mxu0 %v652
    %1414 = vmatmul.mubr.bf16.gmra.mrb[0].mxu0 %v651
    %v1415 = vpop.f32.mrb[0].mxu0
    %v1416 = vadd.f32 0.0, %v1415
    %v1417 = vpop.f32.mrb[0].mxu0
    %v1418 = vadd.f32 0.0, %v1417
    %v1419 = vpop.f32.mrb[0].mxu0
    %v1420 = vadd.f32 0.0, %v1419
    %v1421 = vpop.f32.mrb[0].mxu0
    %v1422 = vadd.f32 0.0, %v1421
    %1423 = vmatprep.mubr.bf16.mxu0 %v655
    %1424 = vmatmul.mubr.bf16.gmra.mrb[0].mxu0 %v654
    %v1425 = vpop.f32.mrb[0].mxu0
    %v1426 = vadd.f32 0.0, %v1425
    %v1427 = vpop.f32.mrb[0].mxu0
    %v1428 = vadd.f32 0.0, %v1427
    %v1429 = vpop.f32.mrb[0].mxu0
    %v1430 = vadd.f32 0.0, %v1429
    %v1431 = vpop.f32.mrb[0].mxu0
    %v1432 = vadd.f32 0.0, %v1431
    %1433 = vmatprep.mubr.bf16.mxu0 %v658
    %1434 = vmatmul.mubr.bf16.gmra.mrb[0].mxu0 %v657
    %v1435 = vpop.f32.mrb[0].mxu0
    %v1436 = vadd.f32 0.0, %v1435
    %v1437 = vpop.f32.mrb[0].mxu0
    %v1438 = vadd.f32 0.0, %v1437
    %v1439 = vpop.f32.mrb[0].mxu0
    %v1440 = vadd.f32 0.0, %v1439
    %v1441 = vpop.f32.mrb[0].mxu0
    %v1442 = vadd.f32 0.0, %v1441
    %1443 = vmatprep.mubr.bf16.mxu0 %v661
    %1444 = vmatmul.mubr.bf16.gmra.mrb[0].mxu0 %v660
    %v1445 = vpop.f32.mrb[0].mxu0
    %v1446 = vadd.f32 0.0, %v1445
    %v1447 = vpop.f32.mrb[0].mxu0
    %v1448 = vadd.f32 0.0, %v1447
    %v1449 = vpop.f32.mrb[0].mxu0
    %v1450 = vadd.f32 0.0, %v1449
    %v1451 = vpop.f32.mrb[0].mxu0
    %v1452 = vadd.f32 0.0, %v1451
    %1453 = vmatprep.mubr.bf16.mxu0 %v664
    %1454 = vmatmul.mubr.bf16.gmra.mrb[0].mxu0 %v663
    %v1455 = vpop.f32.mrb[0].mxu0
    %v1456 = vadd.f32 0.0, %v1455
    %v1457 = vpop.f32.mrb[0].mxu0
    %v1458 = vadd.f32 0.0, %v1457
    %v1459 = vpop.f32.mrb[0].mxu0
    %v1460 = vadd.f32 0.0, %v1459
    %v1461 = vpop.f32.mrb[0].mxu0
    %v1462 = vadd.f32 0.0, %v1461
    %1463 = vmatprep.mubr.bf16.mxu0 %v667
    %1464 = vmatmul.mubr.bf16.gmra.mrb[0].mxu0 %v666
    %v1465 = vpop.f32.mrb[0].mxu0
    %v1466 = vadd.f32 0.0, %v1465
    %v1467 = vpop.f32.mrb[0].mxu0
    %v1468 = vadd.f32 0.0, %v1467
    %v1469 = vpop.f32.mrb[0].mxu0
    %v1470 = vadd.f32 0.0, %v1469
    %v1471 = vpop.f32.mrb[0].mxu0
    %v1472 = vadd.f32 0.0, %v1471
    %1473 = vmatprep.mubr.bf16.mxu0 %v670
    %1474 = vmatmul.mubr.bf16.gmra.mrb[0].mxu0 %v669
    %v1475 = vpop.f32.mrb[0].mxu0
    %v1476 = vadd.f32 0.0, %v1475
    %v1477 = vpop.f32.mrb[0].mxu0
    %v1478 = vadd.f32 0.0, %v1477
    %v1479 = vpop.f32.mrb[0].mxu0
    %v1480 = vadd.f32 0.0, %v1479
    %v1481 = vpop.f32.mrb[0].mxu0
    %v1482 = vadd.f32 0.0, %v1481
    %1483 = vmatprep.mubr.bf16.mxu0 %v673
    %1484 = vmatmul.mubr.bf16.gmra.mrb[0].mxu0 %v672
    %v1485 = vpop.f32.mrb[0].mxu0
    %v1486 = vadd.f32 0.0, %v1485
    %v1487 = vpop.f32.mrb[0].mxu0
    %v1488 = vadd.f32 0.0, %v1487
    %v1489 = vpop.f32.mrb[0].mxu0
    %v1490 = vadd.f32 0.0, %v1489
    %v1491 = vpop.f32.mrb[0].mxu0
    %v1492 = vadd.f32 0.0, %v1491
    %1493 = vmatprep.mubr.bf16.mxu0 %v676
    %1494 = vmatmul.mubr.bf16.gmra.mrb[0].mxu0 %v675
    %v1495 = vpop.f32.mrb[0].mxu0
    %v1496 = vadd.f32 0.0, %v1495
    %v1497 = vpop.f32.mrb[0].mxu0
    %v1498 = vadd.f32 0.0, %v1497
    %v1499 = vpop.f32.mrb[0].mxu0
    %v1500 = vadd.f32 0.0, %v1499
    %v1501 = vpop.f32.mrb[0].mxu0
    %v1502 = vadd.f32 0.0, %v1501
    %1503 = vmatprep.mubr.bf16.mxu0 %v679
    %1504 = vmatmul.mubr.bf16.gmra.mrb[0].mxu0 %v678
    %v1505 = vpop.f32.mrb[0].mxu0
    %v1506 = vadd.f32 0.0, %v1505
    %v1507 = vpop.f32.mrb[0].mxu0
    %v1508 = vadd.f32 0.0, %v1507
    %v1509 = vpop.f32.mrb[0].mxu0
    %v1510 = vadd.f32 0.0, %v1509
    %v1511 = vpop.f32.mrb[0].mxu0
    %v1512 = vadd.f32 0.0, %v1511
    %1513 = vdwg.mxu0
    %1514 = vmatprep.subr.bf16.mxu0 %v1066
    %1515 = vmatpush1.bf16.msra.mxu0 %v1065
    %1516 = vmatprep.subr.bf16.mxu0 %v1069
    %1517 = vmatpush1.bf16.msra.mxu0 %v1068
    %1518 = vmatprep.subr.bf16.mxu0 %v1072
    %1519 = vmatpush1.bf16.msra.mxu0 %v1071
    %1520 = vmatprep.subr.bf16.mxu0 %v1075
    %1521 = vmatpush1.bf16.msra.mxu0 %v1074
    %1522 = vmatprep.subr.bf16.mxu0 %v1078
    %1523 = vmatpush1.bf16.msra.mxu0 %v1077
    %1524 = vmatprep.subr.bf16.mxu0 %v1081
    %1525 = vmatpush1.bf16.msra.mxu0 %v1080
    %1526 = vmatprep.subr.bf16.mxu0 %v1084
    %1527 = vmatpush1.bf16.msra.mxu0 %v1083
    %1528 = vmatprep.subr.bf16.mxu0 %v1087
    %1529 = vmatpush1.bf16.msra.mxu0 %v1086
    %1530 = vmatprep.subr.bf16.mxu0 0
    %1531 = vmatpush1.bf16.msra.mxu0 0
    %1532 = vmatprep.subr.bf16.mxu0 0
    %1533 = vmatpush1.bf16.msra.mxu0 0
    %1534 = vmatprep.subr.bf16.mxu0 0
    %1535 = vmatpush1.bf16.msra.mxu0 0
    %1536 = vmatprep.subr.bf16.mxu0 0
    %1537 = vmatpush1.bf16.msra.mxu0 0
    %1538 = vmatprep.subr.bf16.mxu0 0
    %1539 = vmatpush1.bf16.msra.mxu0 0
    %1540 = vmatprep.subr.bf16.mxu0 0
    %1541 = vmatpush1.bf16.msra.mxu0 0
    %1542 = vmatprep.subr.bf16.mxu0 0
    %1543 = vmatpush1.bf16.msra.mxu0 0
    %1544 = vmatprep.subr.bf16.mxu0 0
    %1545 = vmatpush1.bf16.msra.mxu0 0
    %1546 = vmatprep.mubr.bf16.mxu0 0
    %1547 = vmatmul.mubr.bf16.gmra.mrb[0].mxu0 %v587
    %v1548 = vpop.f32.mrb[0].mxu0
    %v1549 = vadd.f32 %v1196, %v1548
    %v1550 = vpop.f32.mrb[0].mxu0
    %v1551 = vadd.f32 %v1198, %v1550
    %v1552 = vpop.f32.mrb[0].mxu0
    %v1553 = vadd.f32 %v1200, %v1552
    %v1554 = vpop.f32.mrb[0].mxu0
    %v1555 = vadd.f32 %v1202, %v1554
    %1556 = vmatprep.mubr.bf16.mxu0 0
    %1557 = vmatmul.mubr.bf16.gmra.mrb[0].mxu0 %v590
    %v1558 = vpop.f32.mrb[0].mxu0
    %v1559 = vadd.f32 %v1206, %v1558
    %v1560 = vpop.f32.mrb[0].mxu0
    %v1561 = vadd.f32 %v1208, %v1560
    %v1562 = vpop.f32.mrb[0].mxu0
    %v1563 = vadd.f32 %v1210, %v1562
    %v1564 = vpop.f32.mrb[0].mxu0
    %v1565 = vadd.f32 %v1212, %v1564
    %1566 = vmatprep.mubr.bf16.mxu0 0
    %1567 = vmatmul.mubr.bf16.gmra.mrb[0].mxu0 %v593
    %v1568 = vpop.f32.mrb[0].mxu0
    %v1569 = vadd.f32 %v1216, %v1568
    %v1570 = vpop.f32.mrb[0].mxu0
    %v1571 = vadd.f32 %v1218, %v1570
    %v1572 = vpop.f32.mrb[0].mxu0
    %v1573 = vadd.f32 %v1220, %v1572
    %v1574 = vpop.f32.mrb[0].mxu0
    %v1575 = vadd.f32 %v1222, %v1574
    %1576 = vmatprep.mubr.bf16.mxu0 0
    %1577 = vmatmul.mubr.bf16.gmra.mrb[0].mxu0 %v596
    %v1578 = vpop.f32.mrb[0].mxu0
    %v1579 = vadd.f32 %v1226, %v1578
    %v1580 = vpop.f32.mrb[0].mxu0
    %v1581 = vadd.f32 %v1228, %v1580
    %v1582 = vpop.f32.mrb[0].mxu0
    %v1583 = vadd.f32 %v1230, %v1582
    %v1584 = vpop.f32.mrb[0].mxu0
    %v1585 = vadd.f32 %v1232, %v1584
    %1586 = vmatprep.mubr.bf16.mxu0 0
    %1587 = vmatmul.mubr.bf16.gmra.mrb[0].mxu0 %v599
    %v1588 = vpop.f32.mrb[0].mxu0
    %v1589 = vadd.f32 %v1236, %v1588
    %v1590 = vpop.f32.mrb[0].mxu0
    %v1591 = vadd.f32 %v1238, %v1590
    %v1592 = vpop.f32.mrb[0].mxu0
    %v1593 = vadd.f32 %v1240, %v1592
    %v1594 = vpop.f32.mrb[0].mxu0
    %v1595 = vadd.f32 %v1242, %v1594
    %1596 = vmatprep.mubr.bf16.mxu0 0
    %1597 = vmatmul.mubr.bf16.gmra.mrb[0].mxu0 %v602
    %v1598 = vpop.f32.mrb[0].mxu0
    %v1599 = vadd.f32 %v1246, %v1598
    %v1600 = vpop.f32.mrb[0].mxu0
    %v1601 = vadd.f32 %v1248, %v1600
    %v1602 = vpop.f32.mrb[0].mxu0
    %v1603 = vadd.f32 %v1250, %v1602
    %v1604 = vpop.f32.mrb[0].mxu0
    %v1605 = vadd.f32 %v1252, %v1604
    %1606 = vmatprep.mubr.bf16.mxu0 0
    %1607 = vmatmul.mubr.bf16.gmra.mrb[0].mxu0 %v605
    %v1608 = vpop.f32.mrb[0].mxu0
    %v1609 = vadd.f32 %v1256, %v1608
    %v1610 = vpop.f32.mrb[0].mxu0
    %v1611 = vadd.f32 %v1258, %v1610
    %v1612 = vpop.f32.mrb[0].mxu0
    %v1613 = vadd.f32 %v1260, %v1612
    %v1614 = vpop.f32.mrb[0].mxu0
    %v1615 = vadd.f32 %v1262, %v1614
    %1616 = vmatprep.mubr.bf16.mxu0 0
    %1617 = vmatmul.mubr.bf16.gmra.mrb[0].mxu0 %v608
    %v1618 = vpop.f32.mrb[0].mxu0
    %v1619 = vadd.f32 %v1266, %v1618
    %v1620 = vpop.f32.mrb[0].mxu0
    %v1621 = vadd.f32 %v1268, %v1620
    %v1622 = vpop.f32.mrb[0].mxu0
    %v1623 = vadd.f32 %v1270, %v1622
    %v1624 = vpop.f32.mrb[0].mxu0
    %v1625 = vadd.f32 %v1272, %v1624
    %1626 = vmatprep.mubr.bf16.mxu0 0
    %1627 = vmatmul.mubr.bf16.gmra.mrb[0].mxu0 %v611
    %v1628 = vpop.f32.mrb[0].mxu0
    %v1629 = vadd.f32 %v1276, %v1628
    %v1630 = vpop.f32.mrb[0].mxu0
    %v1631 = vadd.f32 %v1278, %v1630
    %v1632 = vpop.f32.mrb[0].mxu0
    %v1633 = vadd.f32 %v1280, %v1632
    %v1634 = vpop.f32.mrb[0].mxu0
    %v1635 = vadd.f32 %v1282, %v1634
    %1636 = vmatprep.mubr.bf16.mxu0 0
    %1637 = vmatmul.mubr.bf16.gmra.mrb[0].mxu0 %v614
    %v1638 = vpop.f32.mrb[0].mxu0
    %v1639 = vadd.f32 %v1286, %v1638
    %v1640 = vpop.f32.mrb[0].mxu0
    %v1641 = vadd.f32 %v1288, %v1640
    %v1642 = vpop.f32.mrb[0].mxu0
    %v1643 = vadd.f32 %v1290, %v1642
    %v1644 = vpop.f32.mrb[0].mxu0
    %v1645 = vadd.f32 %v1292, %v1644
    %1646 = vmatprep.mubr.bf16.mxu0 0
    %1647 = vmatmul.mubr.bf16.gmra.mrb[0].mxu0 %v617
    %v1648 = vpop.f32.mrb[0].mxu0
    %v1649 = vadd.f32 %v1296, %v1648
    %v1650 = vpop.f32.mrb[0].mxu0
    %v1651 = vadd.f32 %v1298, %v1650
    %v1652 = vpop.f32.mrb[0].mxu0
    %v1653 = vadd.f32 %v1300, %v1652
    %v1654 = vpop.f32.mrb[0].mxu0
    %v1655 = vadd.f32 %v1302, %v1654
    %1656 = vmatprep.mubr.bf16.mxu0 0
    %1657 = vmatmul.mubr.bf16.gmra.mrb[0].mxu0 %v620
    %v1658 = vpop.f32.mrb[0].mxu0
    %v1659 = vadd.f32 %v1306, %v1658
    %v1660 = vpop.f32.mrb[0].mxu0
    %v1661 = vadd.f32 %v1308, %v1660
    %v1662 = vpop.f32.mrb[0].mxu0
    %v1663 = vadd.f32 %v1310, %v1662
    %v1664 = vpop.f32.mrb[0].mxu0
    %v1665 = vadd.f32 %v1312, %v1664
    %1666 = vmatprep.mubr.bf16.mxu0 0
    %1667 = vmatmul.mubr.bf16.gmra.mrb[0].mxu0 %v623
    %v1668 = vpop.f32.mrb[0].mxu0
    %v1669 = vadd.f32 %v1316, %v1668
    %v1670 = vpop.f32.mrb[0].mxu0
    %v1671 = vadd.f32 %v1318, %v1670
    %v1672 = vpop.f32.mrb[0].mxu0
    %v1673 = vadd.f32 %v1320, %v1672
    %v1674 = vpop.f32.mrb[0].mxu0
    %v1675 = vadd.f32 %v1322, %v1674
    %1676 = vmatprep.mubr.bf16.mxu0 0
    %1677 = vmatmul.mubr.bf16.gmra.mrb[0].mxu0 %v626
    %v1678 = vpop.f32.mrb[0].mxu0
    %v1679 = vadd.f32 %v1326, %v1678
    %v1680 = vpop.f32.mrb[0].mxu0
    %v1681 = vadd.f32 %v1328, %v1680
    %v1682 = vpop.f32.mrb[0].mxu0
    %v1683 = vadd.f32 %v1330, %v1682
    %v1684 = vpop.f32.mrb[0].mxu0
    %v1685 = vadd.f32 %v1332, %v1684
    %1686 = vmatprep.mubr.bf16.mxu0 0
    %1687 = vmatmul.mubr.bf16.gmra.mrb[0].mxu0 %v629
    %v1688 = vpop.f32.mrb[0].mxu0
    %v1689 = vadd.f32 %v1336, %v1688
    %v1690 = vpop.f32.mrb[0].mxu0
    %v1691 = vadd.f32 %v1338, %v1690
    %v1692 = vpop.f32.mrb[0].mxu0
    %v1693 = vadd.f32 %v1340, %v1692
    %v1694 = vpop.f32.mrb[0].mxu0
    %v1695 = vadd.f32 %v1342, %v1694
    %1696 = vmatprep.mubr.bf16.mxu0 0
    %1697 = vmatmul.mubr.bf16.gmra.mrb[0].mxu0 %v632
    %v1698 = vpop.f32.mrb[0].mxu0
    %v1699 = vadd.f32 %v1346, %v1698
    %v1700 = vpop.f32.mrb[0].mxu0
    %v1701 = vadd.f32 %v1348, %v1700
    %v1702 = vpop.f32.mrb[0].mxu0
    %v1703 = vadd.f32 %v1350, %v1702
    %v1704 = vpop.f32.mrb[0].mxu0
    %v1705 = vadd.f32 %v1352, %v1704
    %1706 = vmatprep.mubr.bf16.mxu0 0
    %1707 = vmatmul.mubr.bf16.gmra.mrb[0].mxu0 %v635
    %v1708 = vpop.f32.mrb[0].mxu0
    %v1709 = vadd.f32 %v1356, %v1708
    %v1710 = vpop.f32.mrb[0].mxu0
    %v1711 = vadd.f32 %v1358, %v1710
    %v1712 = vpop.f32.mrb[0].mxu0
    %v1713 = vadd.f32 %v1360, %v1712
    %v1714 = vpop.f32.mrb[0].mxu0
    %v1715 = vadd.f32 %v1362, %v1714
    %1716 = vmatprep.mubr.bf16.mxu0 0
    %1717 = vmatmul.mubr.bf16.gmra.mrb[0].mxu0 %v638
    %v1718 = vpop.f32.mrb[0].mxu0
    %v1719 = vadd.f32 %v1366, %v1718
    %v1720 = vpop.f32.mrb[0].mxu0
    %v1721 = vadd.f32 %v1368, %v1720
    %v1722 = vpop.f32.mrb[0].mxu0
    %v1723 = vadd.f32 %v1370, %v1722
    %v1724 = vpop.f32.mrb[0].mxu0
    %v1725 = vadd.f32 %v1372, %v1724
    %1726 = vmatprep.mubr.bf16.mxu0 0
    %1727 = vmatmul.mubr.bf16.gmra.mrb[0].mxu0 %v641
    %v1728 = vpop.f32.mrb[0].mxu0
    %v1729 = vadd.f32 %v1376, %v1728
    %v1730 = vpop.f32.mrb[0].mxu0
    %v1731 = vadd.f32 %v1378, %v1730
    %v1732 = vpop.f32.mrb[0].mxu0
    %v1733 = vadd.f32 %v1380, %v1732
    %v1734 = vpop.f32.mrb[0].mxu0
    %v1735 = vadd.f32 %v1382, %v1734
    %1736 = vmatprep.mubr.bf16.mxu0 0
    %1737 = vmatmul.mubr.bf16.gmra.mrb[0].mxu0 %v644
    %v1738 = vpop.f32.mrb[0].mxu0
    %v1739 = vadd.f32 %v1386, %v1738
    %v1740 = vpop.f32.mrb[0].mxu0
    %v1741 = vadd.f32 %v1388, %v1740
    %v1742 = vpop.f32.mrb[0].mxu0
    %v1743 = vadd.f32 %v1390, %v1742
    %v1744 = vpop.f32.mrb[0].mxu0
    %v1745 = vadd.f32 %v1392, %v1744
    %1746 = vmatprep.mubr.bf16.mxu0 0
    %1747 = vmatmul.mubr.bf16.gmra.mrb[0].mxu0 %v647
    %v1748 = vpop.f32.mrb[0].mxu0
    %v1749 = vadd.f32 %v1396, %v1748
    %v1750 = vpop.f32.mrb[0].mxu0
    %v1751 = vadd.f32 %v1398, %v1750
    %v1752 = vpop.f32.mrb[0].mxu0
    %v1753 = vadd.f32 %v1400, %v1752
    %v1754 = vpop.f32.mrb[0].mxu0
    %v1755 = vadd.f32 %v1402, %v1754
    %1756 = vmatprep.mubr.bf16.mxu0 0
    %1757 = vmatmul.mubr.bf16.gmra.mrb[0].mxu0 %v650
    %v1758 = vpop.f32.mrb[0].mxu0
    %v1759 = vadd.f32 %v1406, %v1758
    %v1760 = vpop.f32.mrb[0].mxu0
    %v1761 = vadd.f32 %v1408, %v1760
    %v1762 = vpop.f32.mrb[0].mxu0
    %v1763 = vadd.f32 %v1410, %v1762
    %v1764 = vpop.f32.mrb[0].mxu0
    %v1765 = vadd.f32 %v1412, %v1764
    %1766 = vmatprep.mubr.bf16.mxu0 0
    %1767 = vmatmul.mubr.bf16.gmra.mrb[0].mxu0 %v653
    %v1768 = vpop.f32.mrb[0].mxu0
    %v1769 = vadd.f32 %v1416, %v1768
    %v1770 = vpop.f32.mrb[0].mxu0
    %v1771 = vadd.f32 %v1418, %v1770
    %v1772 = vpop.f32.mrb[0].mxu0
    %v1773 = vadd.f32 %v1420, %v1772
    %v1774 = vpop.f32.mrb[0].mxu0
    %v1775 = vadd.f32 %v1422, %v1774
    %1776 = vmatprep.mubr.bf16.mxu0 0
    %1777 = vmatmul.mubr.bf16.gmra.mrb[0].mxu0 %v656
    %v1778 = vpop.f32.mrb[0].mxu0
    %v1779 = vadd.f32 %v1426, %v1778
    %v1780 = vpop.f32.mrb[0].mxu0
    %v1781 = vadd.f32 %v1428, %v1780
    %v1782 = vpop.f32.mrb[0].mxu0
    %v1783 = vadd.f32 %v1430, %v1782
    %v1784 = vpop.f32.mrb[0].mxu0
    %v1785 = vadd.f32 %v1432, %v1784
    %1786 = vmatprep.mubr.bf16.mxu0 0
    %1787 = vmatmul.mubr.bf16.gmra.mrb[0].mxu0 %v659
    %v1788 = vpop.f32.mrb[0].mxu0
    %v1789 = vadd.f32 %v1436, %v1788
    %v1790 = vpop.f32.mrb[0].mxu0
    %v1791 = vadd.f32 %v1438, %v1790
    %v1792 = vpop.f32.mrb[0].mxu0
    %v1793 = vadd.f32 %v1440, %v1792
    %v1794 = vpop.f32.mrb[0].mxu0
    %v1795 = vadd.f32 %v1442, %v1794
    %1796 = vmatprep.mubr.bf16.mxu0 0
    %1797 = vmatmul.mubr.bf16.gmra.mrb[0].mxu0 %v662
    %v1798 = vpop.f32.mrb[0].mxu0
    %v1799 = vadd.f32 %v1446, %v1798
    %v1800 = vpop.f32.mrb[0].mxu0
    %v1801 = vadd.f32 %v1448, %v1800
    %v1802 = vpop.f32.mrb[0].mxu0
    %v1803 = vadd.f32 %v1450, %v1802
    %v1804 = vpop.f32.mrb[0].mxu0
    %v1805 = vadd.f32 %v1452, %v1804
    %1806 = vmatprep.mubr.bf16.mxu0 0
    %1807 = vmatmul.mubr.bf16.gmra.mrb[0].mxu0 %v665
    %v1808 = vpop.f32.mrb[0].mxu0
    %v1809 = vadd.f32 %v1456, %v1808
    %v1810 = vpop.f32.mrb[0].mxu0
    %v1811 = vadd.f32 %v1458, %v1810
    %v1812 = vpop.f32.mrb[0].mxu0
    %v1813 = vadd.f32 %v1460, %v1812
    %v1814 = vpop.f32.mrb[0].mxu0
    %v1815 = vadd.f32 %v1462, %v1814
    %1816 = vmatprep.mubr.bf16.mxu0 0
    %1817 = vmatmul.mubr.bf16.gmra.mrb[0].mxu0 %v668
    %v1818 = vpop.f32.mrb[0].mxu0
    %v1819 = vadd.f32 %v1466, %v1818
    %v1820 = vpop.f32.mrb[0].mxu0
    %v1821 = vadd.f32 %v1468, %v1820
    %v1822 = vpop.f32.mrb[0].mxu0
    %v1823 = vadd.f32 %v1470, %v1822
    %v1824 = vpop.f32.mrb[0].mxu0
    %v1825 = vadd.f32 %v1472, %v1824
    %1826 = vmatprep.mubr.bf16.mxu0 0
    %1827 = vmatmul.mubr.bf16.gmra.mrb[0].mxu0 %v671
    %v1828 = vpop.f32.mrb[0].mxu0
    %v1829 = vadd.f32 %v1476, %v1828
    %v1830 = vpop.f32.mrb[0].mxu0
    %v1831 = vadd.f32 %v1478, %v1830
    %v1832 = vpop.f32.mrb[0].mxu0
    %v1833 = vadd.f32 %v1480, %v1832
    %v1834 = vpop.f32.mrb[0].mxu0
    %v1835 = vadd.f32 %v1482, %v1834
    %1836 = vmatprep.mubr.bf16.mxu0 0
    %1837 = vmatmul.mubr.bf16.gmra.mrb[0].mxu0 %v674
    %v1838 = vpop.f32.mrb[0].mxu0
    %v1839 = vadd.f32 %v1486, %v1838
    %v1840 = vpop.f32.mrb[0].mxu0
    %v1841 = vadd.f32 %v1488, %v1840
    %v1842 = vpop.f32.mrb[0].mxu0
    %v1843 = vadd.f32 %v1490, %v1842
    %v1844 = vpop.f32.mrb[0].mxu0
    %v1845 = vadd.f32 %v1492, %v1844
    %1846 = vmatprep.mubr.bf16.mxu0 0
    %1847 = vmatmul.mubr.bf16.gmra.mrb[0].mxu0 %v677
    %v1848 = vpop.f32.mrb[0].mxu0
    %v1849 = vadd.f32 %v1496, %v1848
    %v1850 = vpop.f32.mrb[0].mxu0
    %v1851 = vadd.f32 %v1498, %v1850
    %v1852 = vpop.f32.mrb[0].mxu0
    %v1853 = vadd.f32 %v1500, %v1852
    %v1854 = vpop.f32.mrb[0].mxu0
    %v1855 = vadd.f32 %v1502, %v1854
    %1856 = vmatprep.mubr.bf16.mxu0 0
    %1857 = vmatmul.mubr.bf16.gmra.mrb[0].mxu0 %v680
    %v1858 = vpop.f32.mrb[0].mxu0
    %v1859 = vadd.f32 %v1506, %v1858
    %v1860 = vpop.f32.mrb[0].mxu0
    %v1861 = vadd.f32 %v1508, %v1860
    %v1862 = vpop.f32.mrb[0].mxu0
    %v1863 = vadd.f32 %v1510, %v1862
    %v1864 = vpop.f32.mrb[0].mxu0
    %v1865 = vadd.f32 %v1512, %v1864
    %1866 = vdwg.mxu0
    %1867 = vmatprep.subr.bf16.mxu0 0
    %1868 = vmatpush1.bf16.msra.mxu0 %v1019
    %1869 = vmatprep.subr.bf16.mxu0 0
    %1870 = vmatpush1.bf16.msra.mxu0 %v1022
    %1871 = vmatprep.subr.bf16.mxu0 0
    %1872 = vmatpush1.bf16.msra.mxu0 %v1025
    %1873 = vmatprep.subr.bf16.mxu0 0
    %1874 = vmatpush1.bf16.msra.mxu0 %v1028
    %1875 = vmatprep.subr.bf16.mxu0 0
    %1876 = vmatpush1.bf16.msra.mxu0 %v1031
    %1877 = vmatprep.subr.bf16.mxu0 0
    %1878 = vmatpush1.bf16.msra.mxu0 %v1034
    %1879 = vmatprep.subr.bf16.mxu0 0
    %1880 = vmatpush1.bf16.msra.mxu0 %v1037
    %1881 = vmatprep.subr.bf16.mxu0 0
    %1882 = vmatpush1.bf16.msra.mxu0 %v1040
    %1883 = vmatprep.subr.bf16.mxu0 0
    %1884 = vmatpush1.bf16.msra.mxu0 %v1043
    %1885 = vmatprep.subr.bf16.mxu0 0
    %1886 = vmatpush1.bf16.msra.mxu0 %v1046
    %1887 = vmatprep.subr.bf16.mxu0 0
    %1888 = vmatpush1.bf16.msra.mxu0 %v1049
    %1889 = vmatprep.subr.bf16.mxu0 0
    %1890 = vmatpush1.bf16.msra.mxu0 %v1052
    %1891 = vmatprep.subr.bf16.mxu0 0
    %1892 = vmatpush1.bf16.msra.mxu0 %v1055
    %1893 = vmatprep.subr.bf16.mxu0 0
    %1894 = vmatpush1.bf16.msra.mxu0 %v1058
    %1895 = vmatprep.subr.bf16.mxu0 0
    %1896 = vmatpush1.bf16.msra.mxu0 %v1061
    %1897 = vmatprep.subr.bf16.mxu0 0
    %1898 = vmatpush1.bf16.msra.mxu0 %v1064
    %1899 = vmatprep.mubr.bf16.mxu0 %v586
    %1900 = vmatmul.mubr.bf16.gmra.mrb[0].mxu0 %v585
    %v1901 = vpop.f32.mrb[0].mxu0
    %v1902 = vadd.f32 0.0, %v1901
    %v1903 = vpop.f32.mrb[0].mxu0
    %v1904 = vpop.f32.mrb[0].mxu0
    %v1905 = vadd.f32 0.0, %v1904
    %v1906 = vpop.f32.mrb[0].mxu0
    %1907 = vmatprep.mubr.bf16.mxu0 %v589
    %1908 = vmatmul.mubr.bf16.gmra.mrb[0].mxu0 %v588
    %v1909 = vpop.f32.mrb[0].mxu0
    %v1910 = vadd.f32 0.0, %v1909
    %v1911 = vpop.f32.mrb[0].mxu0
    %v1912 = vpop.f32.mrb[0].mxu0
    %v1913 = vadd.f32 0.0, %v1912
    %v1914 = vpop.f32.mrb[0].mxu0
    %1915 = vmatprep.mubr.bf16.mxu0 %v592
    %1916 = vmatmul.mubr.bf16.gmra.mrb[0].mxu0 %v591
    %v1917 = vpop.f32.mrb[0].mxu0
    %v1918 = vadd.f32 0.0, %v1917
    %v1919 = vpop.f32.mrb[0].mxu0
    %v1920 = vpop.f32.mrb[0].mxu0
    %v1921 = vadd.f32 0.0, %v1920
    %v1922 = vpop.f32.mrb[0].mxu0
    %1923 = vmatprep.mubr.bf16.mxu0 %v595
    %1924 = vmatmul.mubr.bf16.gmra.mrb[0].mxu0 %v594
    %v1925 = vpop.f32.mrb[0].mxu0
    %v1926 = vadd.f32 0.0, %v1925
    %v1927 = vpop.f32.mrb[0].mxu0
    %v1928 = vpop.f32.mrb[0].mxu0
    %v1929 = vadd.f32 0.0, %v1928
    %v1930 = vpop.f32.mrb[0].mxu0
    %1931 = vmatprep.mubr.bf16.mxu0 %v598
    %1932 = vmatmul.mubr.bf16.gmra.mrb[0].mxu0 %v597
    %v1933 = vpop.f32.mrb[0].mxu0
    %v1934 = vadd.f32 0.0, %v1933
    %v1935 = vpop.f32.mrb[0].mxu0
    %v1936 = vpop.f32.mrb[0].mxu0
    %v1937 = vadd.f32 0.0, %v1936
    %v1938 = vpop.f32.mrb[0].mxu0
    %1939 = vmatprep.mubr.bf16.mxu0 %v601
    %1940 = vmatmul.mubr.bf16.gmra.mrb[0].mxu0 %v600
    %v1941 = vpop.f32.mrb[0].mxu0
    %v1942 = vadd.f32 0.0, %v1941
    %v1943 = vpop.f32.mrb[0].mxu0
    %v1944 = vpop.f32.mrb[0].mxu0
    %v1945 = vadd.f32 0.0, %v1944
    %v1946 = vpop.f32.mrb[0].mxu0
    %1947 = vmatprep.mubr.bf16.mxu0 %v604
    %1948 = vmatmul.mubr.bf16.gmra.mrb[0].mxu0 %v603
    %v1949 = vpop.f32.mrb[0].mxu0
    %v1950 = vadd.f32 0.0, %v1949
    %v1951 = vpop.f32.mrb[0].mxu0
    %v1952 = vpop.f32.mrb[0].mxu0
    %v1953 = vadd.f32 0.0, %v1952
    %v1954 = vpop.f32.mrb[0].mxu0
    %1955 = vmatprep.mubr.bf16.mxu0 %v607
    %1956 = vmatmul.mubr.bf16.gmra.mrb[0].mxu0 %v606
    %v1957 = vpop.f32.mrb[0].mxu0
    %v1958 = vadd.f32 0.0, %v1957
    %v1959 = vpop.f32.mrb[0].mxu0
    %v1960 = vpop.f32.mrb[0].mxu0
    %v1961 = vadd.f32 0.0, %v1960
    %v1962 = vpop.f32.mrb[0].mxu0
    %1963 = vmatprep.mubr.bf16.mxu0 %v610
    %1964 = vmatmul.mubr.bf16.gmra.mrb[0].mxu0 %v609
    %v1965 = vpop.f32.mrb[0].mxu0
    %v1966 = vadd.f32 0.0, %v1965
    %v1967 = vpop.f32.mrb[0].mxu0
    %v1968 = vpop.f32.mrb[0].mxu0
    %v1969 = vadd.f32 0.0, %v1968
    %v1970 = vpop.f32.mrb[0].mxu0
    %1971 = vmatprep.mubr.bf16.mxu0 %v613
    %1972 = vmatmul.mubr.bf16.gmra.mrb[0].mxu0 %v612
    %v1973 = vpop.f32.mrb[0].mxu0
    %v1974 = vadd.f32 0.0, %v1973
    %v1975 = vpop.f32.mrb[0].mxu0
    %v1976 = vpop.f32.mrb[0].mxu0
    %v1977 = vadd.f32 0.0, %v1976
    %v1978 = vpop.f32.mrb[0].mxu0
    %1979 = vmatprep.mubr.bf16.mxu0 %v616
    %1980 = vmatmul.mubr.bf16.gmra.mrb[0].mxu0 %v615
    %v1981 = vpop.f32.mrb[0].mxu0
    %v1982 = vadd.f32 0.0, %v1981
    %v1983 = vpop.f32.mrb[0].mxu0
    %v1984 = vpop.f32.mrb[0].mxu0
    %v1985 = vadd.f32 0.0, %v1984
    %v1986 = vpop.f32.mrb[0].mxu0
    %1987 = vmatprep.mubr.bf16.mxu0 %v619
    %1988 = vmatmul.mubr.bf16.gmra.mrb[0].mxu0 %v618
    %v1989 = vpop.f32.mrb[0].mxu0
    %v1990 = vadd.f32 0.0, %v1989
    %v1991 = vpop.f32.mrb[0].mxu0
    %v1992 = vpop.f32.mrb[0].mxu0
    %v1993 = vadd.f32 0.0, %v1992
    %v1994 = vpop.f32.mrb[0].mxu0
    %1995 = vmatprep.mubr.bf16.mxu0 %v622
    %1996 = vmatmul.mubr.bf16.gmra.mrb[0].mxu0 %v621
    %v1997 = vpop.f32.mrb[0].mxu0
    %v1998 = vadd.f32 0.0, %v1997
    %v1999 = vpop.f32.mrb[0].mxu0
    %v2000 = vpop.f32.mrb[0].mxu0
    %v2001 = vadd.f32 0.0, %v2000
    %v2002 = vpop.f32.mrb[0].mxu0
    %2003 = vmatprep.mubr.bf16.mxu0 %v625
    %2004 = vmatmul.mubr.bf16.gmra.mrb[0].mxu0 %v624
    %v2005 = vpop.f32.mrb[0].mxu0
    %v2006 = vadd.f32 0.0, %v2005
    %v2007 = vpop.f32.mrb[0].mxu0
    %v2008 = vpop.f32.mrb[0].mxu0
    %v2009 = vadd.f32 0.0, %v2008
    %v2010 = vpop.f32.mrb[0].mxu0
    %2011 = vmatprep.mubr.bf16.mxu0 %v628
    %2012 = vmatmul.mubr.bf16.gmra.mrb[0].mxu0 %v627
    %v2013 = vpop.f32.mrb[0].mxu0
    %v2014 = vadd.f32 0.0, %v2013
    %v2015 = vpop.f32.mrb[0].mxu0
    %v2016 = vpop.f32.mrb[0].mxu0
    %v2017 = vadd.f32 0.0, %v2016
    %v2018 = vpop.f32.mrb[0].mxu0
    %2019 = vmatprep.mubr.bf16.mxu0 %v631
    %2020 = vmatmul.mubr.bf16.gmra.mrb[0].mxu0 %v630
    %v2021 = vpop.f32.mrb[0].mxu0
    %v2022 = vadd.f32 0.0, %v2021
    %v2023 = vpop.f32.mrb[0].mxu0
    %v2024 = vpop.f32.mrb[0].mxu0
    %v2025 = vadd.f32 0.0, %v2024
    %v2026 = vpop.f32.mrb[0].mxu0
    %2027 = vmatprep.mubr.bf16.mxu0 %v634
    %2028 = vmatmul.mubr.bf16.gmra.mrb[0].mxu0 %v633
    %v2029 = vpop.f32.mrb[0].mxu0
    %v2030 = vadd.f32 0.0, %v2029
    %v2031 = vpop.f32.mrb[0].mxu0
    %v2032 = vpop.f32.mrb[0].mxu0
    %v2033 = vadd.f32 0.0, %v2032
    %v2034 = vpop.f32.mrb[0].mxu0
    %2035 = vmatprep.mubr.bf16.mxu0 %v637
    %2036 = vmatmul.mubr.bf16.gmra.mrb[0].mxu0 %v636
    %v2037 = vpop.f32.mrb[0].mxu0
    %v2038 = vadd.f32 0.0, %v2037
    %v2039 = vpop.f32.mrb[0].mxu0
    %v2040 = vpop.f32.mrb[0].mxu0
    %v2041 = vadd.f32 0.0, %v2040
    %v2042 = vpop.f32.mrb[0].mxu0
    %2043 = vmatprep.mubr.bf16.mxu0 %v640
    %2044 = vmatmul.mubr.bf16.gmra.mrb[0].mxu0 %v639
    %v2045 = vpop.f32.mrb[0].mxu0
    %v2046 = vadd.f32 0.0, %v2045
    %v2047 = vpop.f32.mrb[0].mxu0
    %v2048 = vpop.f32.mrb[0].mxu0
    %v2049 = vadd.f32 0.0, %v2048
    %v2050 = vpop.f32.mrb[0].mxu0
    %2051 = vmatprep.mubr.bf16.mxu0 %v643
    %2052 = vmatmul.mubr.bf16.gmra.mrb[0].mxu0 %v642
    %v2053 = vpop.f32.mrb[0].mxu0
    %v2054 = vadd.f32 0.0, %v2053
    %v2055 = vpop.f32.mrb[0].mxu0
    %v2056 = vpop.f32.mrb[0].mxu0
    %v2057 = vadd.f32 0.0, %v2056
    %v2058 = vpop.f32.mrb[0].mxu0
    %2059 = vmatprep.mubr.bf16.mxu0 %v646
    %2060 = vmatmul.mubr.bf16.gmra.mrb[0].mxu0 %v645
    %v2061 = vpop.f32.mrb[0].mxu0
    %v2062 = vadd.f32 0.0, %v2061
    %v2063 = vpop.f32.mrb[0].mxu0
    %v2064 = vpop.f32.mrb[0].mxu0
    %v2065 = vadd.f32 0.0, %v2064
    %v2066 = vpop.f32.mrb[0].mxu0
    %2067 = vmatprep.mubr.bf16.mxu0 %v649
    %2068 = vmatmul.mubr.bf16.gmra.mrb[0].mxu0 %v648
    %v2069 = vpop.f32.mrb[0].mxu0
    %v2070 = vadd.f32 0.0, %v2069
    %v2071 = vpop.f32.mrb[0].mxu0
    %v2072 = vpop.f32.mrb[0].mxu0
    %v2073 = vadd.f32 0.0, %v2072
    %v2074 = vpop.f32.mrb[0].mxu0
    %2075 = vmatprep.mubr.bf16.mxu0 %v652
    %2076 = vmatmul.mubr.bf16.gmra.mrb[0].mxu0 %v651
    %v2077 = vpop.f32.mrb[0].mxu0
    %v2078 = vadd.f32 0.0, %v2077
    %v2079 = vpop.f32.mrb[0].mxu0
    %v2080 = vpop.f32.mrb[0].mxu0
    %v2081 = vadd.f32 0.0, %v2080
    %v2082 = vpop.f32.mrb[0].mxu0
    %2083 = vmatprep.mubr.bf16.mxu0 %v655
    %2084 = vmatmul.mubr.bf16.gmra.mrb[0].mxu0 %v654
    %v2085 = vpop.f32.mrb[0].mxu0
    %v2086 = vadd.f32 0.0, %v2085
    %v2087 = vpop.f32.mrb[0].mxu0
    %v2088 = vpop.f32.mrb[0].mxu0
    %v2089 = vadd.f32 0.0, %v2088
    %v2090 = vpop.f32.mrb[0].mxu0
    %2091 = vmatprep.mubr.bf16.mxu0 %v658
    %2092 = vmatmul.mubr.bf16.gmra.mrb[0].mxu0 %v657
    %v2093 = vpop.f32.mrb[0].mxu0
    %v2094 = vadd.f32 0.0, %v2093
    %v2095 = vpop.f32.mrb[0].mxu0
    %v2096 = vpop.f32.mrb[0].mxu0
    %v2097 = vadd.f32 0.0, %v2096
    %v2098 = vpop.f32.mrb[0].mxu0
    %2099 = vmatprep.mubr.bf16.mxu0 %v661
    %2100 = vmatmul.mubr.bf16.gmra.mrb[0].mxu0 %v660
    %v2101 = vpop.f32.mrb[0].mxu0
    %v2102 = vadd.f32 0.0, %v2101
    %v2103 = vpop.f32.mrb[0].mxu0
    %v2104 = vpop.f32.mrb[0].mxu0
    %v2105 = vadd.f32 0.0, %v2104
    %v2106 = vpop.f32.mrb[0].mxu0
    %2107 = vmatprep.mubr.bf16.mxu0 %v664
    %2108 = vmatmul.mubr.bf16.gmra.mrb[0].mxu0 %v663
    %v2109 = vpop.f32.mrb[0].mxu0
    %v2110 = vadd.f32 0.0, %v2109
    %v2111 = vpop.f32.mrb[0].mxu0
    %v2112 = vpop.f32.mrb[0].mxu0
    %v2113 = vadd.f32 0.0, %v2112
    %v2114 = vpop.f32.mrb[0].mxu0
    %2115 = vmatprep.mubr.bf16.mxu0 %v667
    %2116 = vmatmul.mubr.bf16.gmra.mrb[0].mxu0 %v666
    %v2117 = vpop.f32.mrb[0].mxu0
    %v2118 = vadd.f32 0.0, %v2117
    %v2119 = vpop.f32.mrb[0].mxu0
    %v2120 = vpop.f32.mrb[0].mxu0
    %v2121 = vadd.f32 0.0, %v2120
    %v2122 = vpop.f32.mrb[0].mxu0
    %2123 = vmatprep.mubr.bf16.mxu0 %v670
    %2124 = vmatmul.mubr.bf16.gmra.mrb[0].mxu0 %v669
    %v2125 = vpop.f32.mrb[0].mxu0
    %v2126 = vadd.f32 0.0, %v2125
    %v2127 = vpop.f32.mrb[0].mxu0
    %v2128 = vpop.f32.mrb[0].mxu0
    %v2129 = vadd.f32 0.0, %v2128
    %v2130 = vpop.f32.mrb[0].mxu0
    %2131 = vmatprep.mubr.bf16.mxu0 %v673
    %2132 = vmatmul.mubr.bf16.gmra.mrb[0].mxu0 %v672
    %v2133 = vpop.f32.mrb[0].mxu0
    %v2134 = vadd.f32 0.0, %v2133
    %v2135 = vpop.f32.mrb[0].mxu0
    %v2136 = vpop.f32.mrb[0].mxu0
    %v2137 = vadd.f32 0.0, %v2136
    %v2138 = vpop.f32.mrb[0].mxu0
    %2139 = vmatprep.mubr.bf16.mxu0 %v676
    %2140 = vmatmul.mubr.bf16.gmra.mrb[0].mxu0 %v675
    %v2141 = vpop.f32.mrb[0].mxu0
    %v2142 = vadd.f32 0.0, %v2141
    %v2143 = vpop.f32.mrb[0].mxu0
    %v2144 = vpop.f32.mrb[0].mxu0
    %v2145 = vadd.f32 0.0, %v2144
    %v2146 = vpop.f32.mrb[0].mxu0
    %2147 = vmatprep.mubr.bf16.mxu0 %v679
    %2148 = vmatmul.mubr.bf16.gmra.mrb[0].mxu0 %v678
    %v2149 = vpop.f32.mrb[0].mxu0
    %v2150 = vadd.f32 0.0, %v2149
    %v2151 = vpop.f32.mrb[0].mxu0
    %v2152 = vpop.f32.mrb[0].mxu0
    %v2153 = vadd.f32 0.0, %v2152
    %v2154 = vpop.f32.mrb[0].mxu0
    %2155 = vdwg.mxu0
    %2156 = vmatprep.subr.bf16.mxu0 0
    %2157 = vmatpush1.bf16.msra.mxu0 %v1067
    %2158 = vmatprep.subr.bf16.mxu0 0
    %2159 = vmatpush1.bf16.msra.mxu0 %v1070
    %2160 = vmatprep.subr.bf16.mxu0 0
    %2161 = vmatpush1.bf16.msra.mxu0 %v1073
    %2162 = vmatprep.subr.bf16.mxu0 0
    %2163 = vmatpush1.bf16.msra.mxu0 %v1076
    %2164 = vmatprep.subr.bf16.mxu0 0
    %2165 = vmatpush1.bf16.msra.mxu0 %v1079
    %2166 = vmatprep.subr.bf16.mxu0 0
    %2167 = vmatpush1.bf16.msra.mxu0 %v1082
    %2168 = vmatprep.subr.bf16.mxu0 0
    %2169 = vmatpush1.bf16.msra.mxu0 %v1085
    %2170 = vmatprep.subr.bf16.mxu0 0
    %2171 = vmatpush1.bf16.msra.mxu0 %v1088
    %2172 = vmatprep.subr.bf16.mxu0 0
    %2173 = vmatpush1.bf16.msra.mxu0 0
    %2174 = vmatprep.subr.bf16.mxu0 0
    %2175 = vmatpush1.bf16.msra.mxu0 0
    %2176 = vmatprep.subr.bf16.mxu0 0
    %2177 = vmatpush1.bf16.msra.mxu0 0
    %2178 = vmatprep.subr.bf16.mxu0 0
    %2179 = vmatpush1.bf16.msra.mxu0 0
    %2180 = vmatprep.subr.bf16.mxu0 0
    %2181 = vmatpush1.bf16.msra.mxu0 0
    %2182 = vmatprep.subr.bf16.mxu0 0
    %2183 = vmatpush1.bf16.msra.mxu0 0
    %2184 = vmatprep.subr.bf16.mxu0 0
    %2185 = vmatpush1.bf16.msra.mxu0 0
    %2186 = vmatprep.subr.bf16.mxu0 0
    %2187 = vmatpush1.bf16.msra.mxu0 0
    %2188 = vmatprep.mubr.bf16.mxu0 0
    %2189 = vmatmul.mubr.bf16.gmra.mrb[0].mxu0 %v587
    %v2190 = vpop.f32.mrb[0].mxu0
    %v2191 = vadd.f32 %v1902, %v2190
    %v2192 = vpop.f32.mrb[0].mxu0
    %v2193 = vpop.f32.mrb[0].mxu0
    %v2194 = vadd.f32 %v1905, %v2193
    %v2195 = vpop.f32.mrb[0].mxu0
    %2196 = vmatprep.mubr.bf16.mxu0 0
    %2197 = vmatmul.mubr.bf16.gmra.mrb[0].mxu0 %v590
    %v2198 = vpop.f32.mrb[0].mxu0
    %v2199 = vadd.f32 %v1910, %v2198
    %v2200 = vpop.f32.mrb[0].mxu0
    %v2201 = vpop.f32.mrb[0].mxu0
    %v2202 = vadd.f32 %v1913, %v2201
    %v2203 = vpop.f32.mrb[0].mxu0
    %2204 = vmatprep.mubr.bf16.mxu0 0
    %2205 = vmatmul.mubr.bf16.gmra.mrb[0].mxu0 %v593
    %v2206 = vpop.f32.mrb[0].mxu0
    %v2207 = vadd.f32 %v1918, %v2206
    %v2208 = vpop.f32.mrb[0].mxu0
    %v2209 = vpop.f32.mrb[0].mxu0
    %v2210 = vadd.f32 %v1921, %v2209
    %v2211 = vpop.f32.mrb[0].mxu0
    %2212 = vmatprep.mubr.bf16.mxu0 0
    %2213 = vmatmul.mubr.bf16.gmra.mrb[0].mxu0 %v596
    %v2214 = vpop.f32.mrb[0].mxu0
    %v2215 = vadd.f32 %v1926, %v2214
    %v2216 = vpop.f32.mrb[0].mxu0
    %v2217 = vpop.f32.mrb[0].mxu0
    %v2218 = vadd.f32 %v1929, %v2217
    %v2219 = vpop.f32.mrb[0].mxu0
    %2220 = vmatprep.mubr.bf16.mxu0 0
    %2221 = vmatmul.mubr.bf16.gmra.mrb[0].mxu0 %v599
    %v2222 = vpop.f32.mrb[0].mxu0
    %v2223 = vadd.f32 %v1934, %v2222
    %v2224 = vpop.f32.mrb[0].mxu0
    %v2225 = vpop.f32.mrb[0].mxu0
    %v2226 = vadd.f32 %v1937, %v2225
    %v2227 = vpop.f32.mrb[0].mxu0
    %2228 = vmatprep.mubr.bf16.mxu0 0
    %2229 = vmatmul.mubr.bf16.gmra.mrb[0].mxu0 %v602
    %v2230 = vpop.f32.mrb[0].mxu0
    %v2231 = vadd.f32 %v1942, %v2230
    %v2232 = vpop.f32.mrb[0].mxu0
    %v2233 = vpop.f32.mrb[0].mxu0
    %v2234 = vadd.f32 %v1945, %v2233
    %v2235 = vpop.f32.mrb[0].mxu0
    %2236 = vmatprep.mubr.bf16.mxu0 0
    %2237 = vmatmul.mubr.bf16.gmra.mrb[0].mxu0 %v605
    %v2238 = vpop.f32.mrb[0].mxu0
    %v2239 = vadd.f32 %v1950, %v2238
    %v2240 = vpop.f32.mrb[0].mxu0
    %v2241 = vpop.f32.mrb[0].mxu0
    %v2242 = vadd.f32 %v1953, %v2241
    %v2243 = vpop.f32.mrb[0].mxu0
    %2244 = vmatprep.mubr.bf16.mxu0 0
    %2245 = vmatmul.mubr.bf16.gmra.mrb[0].mxu0 %v608
    %v2246 = vpop.f32.mrb[0].mxu0
    %v2247 = vadd.f32 %v1958, %v2246
    %v2248 = vpop.f32.mrb[0].mxu0
    %v2249 = vpop.f32.mrb[0].mxu0
    %v2250 = vadd.f32 %v1961, %v2249
    %v2251 = vpop.f32.mrb[0].mxu0
    %2252 = vmatprep.mubr.bf16.mxu0 0
    %2253 = vmatmul.mubr.bf16.gmra.mrb[0].mxu0 %v611
    %v2254 = vpop.f32.mrb[0].mxu0
    %v2255 = vadd.f32 %v1966, %v2254
    %v2256 = vpop.f32.mrb[0].mxu0
    %v2257 = vpop.f32.mrb[0].mxu0
    %v2258 = vadd.f32 %v1969, %v2257
    %v2259 = vpop.f32.mrb[0].mxu0
    %2260 = vmatprep.mubr.bf16.mxu0 0
    %2261 = vmatmul.mubr.bf16.gmra.mrb[0].mxu0 %v614
    %v2262 = vpop.f32.mrb[0].mxu0
    %v2263 = vadd.f32 %v1974, %v2262
    %v2264 = vpop.f32.mrb[0].mxu0
    %v2265 = vpop.f32.mrb[0].mxu0
    %v2266 = vadd.f32 %v1977, %v2265
    %v2267 = vpop.f32.mrb[0].mxu0
    %2268 = vmatprep.mubr.bf16.mxu0 0
    %2269 = vmatmul.mubr.bf16.gmra.mrb[0].mxu0 %v617
    %v2270 = vpop.f32.mrb[0].mxu0
    %v2271 = vadd.f32 %v1982, %v2270
    %v2272 = vpop.f32.mrb[0].mxu0
    %v2273 = vpop.f32.mrb[0].mxu0
    %v2274 = vadd.f32 %v1985, %v2273
    %v2275 = vpop.f32.mrb[0].mxu0
    %2276 = vmatprep.mubr.bf16.mxu0 0
    %2277 = vmatmul.mubr.bf16.gmra.mrb[0].mxu0 %v620
    %v2278 = vpop.f32.mrb[0].mxu0
    %v2279 = vadd.f32 %v1990, %v2278
    %v2280 = vpop.f32.mrb[0].mxu0
    %v2281 = vpop.f32.mrb[0].mxu0
    %v2282 = vadd.f32 %v1993, %v2281
    %v2283 = vpop.f32.mrb[0].mxu0
    %2284 = vmatprep.mubr.bf16.mxu0 0
    %2285 = vmatmul.mubr.bf16.gmra.mrb[0].mxu0 %v623
    %v2286 = vpop.f32.mrb[0].mxu0
    %v2287 = vadd.f32 %v1998, %v2286
    %v2288 = vpop.f32.mrb[0].mxu0
    %v2289 = vpop.f32.mrb[0].mxu0
    %v2290 = vadd.f32 %v2001, %v2289
    %v2291 = vpop.f32.mrb[0].mxu0
    %2292 = vmatprep.mubr.bf16.mxu0 0
    %2293 = vmatmul.mubr.bf16.gmra.mrb[0].mxu0 %v626
    %v2294 = vpop.f32.mrb[0].mxu0
    %v2295 = vadd.f32 %v2006, %v2294
    %v2296 = vpop.f32.mrb[0].mxu0
    %v2297 = vpop.f32.mrb[0].mxu0
    %v2298 = vadd.f32 %v2009, %v2297
    %v2299 = vpop.f32.mrb[0].mxu0
    %2300 = vmatprep.mubr.bf16.mxu0 0
    %2301 = vmatmul.mubr.bf16.gmra.mrb[0].mxu0 %v629
    %v2302 = vpop.f32.mrb[0].mxu0
    %v2303 = vadd.f32 %v2014, %v2302
    %v2304 = vpop.f32.mrb[0].mxu0
    %v2305 = vpop.f32.mrb[0].mxu0
    %v2306 = vadd.f32 %v2017, %v2305
    %v2307 = vpop.f32.mrb[0].mxu0
    %2308 = vmatprep.mubr.bf16.mxu0 0
    %2309 = vmatmul.mubr.bf16.gmra.mrb[0].mxu0 %v632
    %v2310 = vpop.f32.mrb[0].mxu0
    %v2311 = vadd.f32 %v2022, %v2310
    %v2312 = vpop.f32.mrb[0].mxu0
    %v2313 = vpop.f32.mrb[0].mxu0
    %v2314 = vadd.f32 %v2025, %v2313
    %v2315 = vpop.f32.mrb[0].mxu0
    %2316 = vmatprep.mubr.bf16.mxu0 0
    %2317 = vmatmul.mubr.bf16.gmra.mrb[0].mxu0 %v635
    %v2318 = vpop.f32.mrb[0].mxu0
    %v2319 = vadd.f32 %v2030, %v2318
    %v2320 = vpop.f32.mrb[0].mxu0
    %v2321 = vpop.f32.mrb[0].mxu0
    %v2322 = vadd.f32 %v2033, %v2321
    %v2323 = vpop.f32.mrb[0].mxu0
    %2324 = vmatprep.mubr.bf16.mxu0 0
    %2325 = vmatmul.mubr.bf16.gmra.mrb[0].mxu0 %v638
    %v2326 = vpop.f32.mrb[0].mxu0
    %v2327 = vadd.f32 %v2038, %v2326
    %v2328 = vpop.f32.mrb[0].mxu0
    %v2329 = vpop.f32.mrb[0].mxu0
    %v2330 = vadd.f32 %v2041, %v2329
    %v2331 = vpop.f32.mrb[0].mxu0
    %2332 = vmatprep.mubr.bf16.mxu0 0
    %2333 = vmatmul.mubr.bf16.gmra.mrb[0].mxu0 %v641
    %v2334 = vpop.f32.mrb[0].mxu0
    %v2335 = vadd.f32 %v2046, %v2334
    %v2336 = vpop.f32.mrb[0].mxu0
    %v2337 = vpop.f32.mrb[0].mxu0
    %v2338 = vadd.f32 %v2049, %v2337
    %v2339 = vpop.f32.mrb[0].mxu0
    %2340 = vmatprep.mubr.bf16.mxu0 0
    %2341 = vmatmul.mubr.bf16.gmra.mrb[0].mxu0 %v644
    %v2342 = vpop.f32.mrb[0].mxu0
    %v2343 = vadd.f32 %v2054, %v2342
    %v2344 = vpop.f32.mrb[0].mxu0
    %v2345 = vpop.f32.mrb[0].mxu0
    %v2346 = vadd.f32 %v2057, %v2345
    %v2347 = vpop.f32.mrb[0].mxu0
    %2348 = vmatprep.mubr.bf16.mxu0 0
    %2349 = vmatmul.mubr.bf16.gmra.mrb[0].mxu0 %v647
    %v2350 = vpop.f32.mrb[0].mxu0
    %v2351 = vadd.f32 %v2062, %v2350
    %v2352 = vpop.f32.mrb[0].mxu0
    %v2353 = vpop.f32.mrb[0].mxu0
    %v2354 = vadd.f32 %v2065, %v2353
    %v2355 = vpop.f32.mrb[0].mxu0
    %2356 = vmatprep.mubr.bf16.mxu0 0
    %2357 = vmatmul.mubr.bf16.gmra.mrb[0].mxu0 %v650
    %v2358 = vpop.f32.mrb[0].mxu0
    %v2359 = vadd.f32 %v2070, %v2358
    %v2360 = vpop.f32.mrb[0].mxu0
    %v2361 = vpop.f32.mrb[0].mxu0
    %v2362 = vadd.f32 %v2073, %v2361
    %v2363 = vpop.f32.mrb[0].mxu0
    %2364 = vmatprep.mubr.bf16.mxu0 0
    %2365 = vmatmul.mubr.bf16.gmra.mrb[0].mxu0 %v653
    %v2366 = vpop.f32.mrb[0].mxu0
    %v2367 = vadd.f32 %v2078, %v2366
    %v2368 = vpop.f32.mrb[0].mxu0
    %v2369 = vpop.f32.mrb[0].mxu0
    %v2370 = vadd.f32 %v2081, %v2369
    %v2371 = vpop.f32.mrb[0].mxu0
    %2372 = vmatprep.mubr.bf16.mxu0 0
    %2373 = vmatmul.mubr.bf16.gmra.mrb[0].mxu0 %v656
    %v2374 = vpop.f32.mrb[0].mxu0
    %v2375 = vadd.f32 %v2086, %v2374
    %v2376 = vpop.f32.mrb[0].mxu0
    %v2377 = vpop.f32.mrb[0].mxu0
    %v2378 = vadd.f32 %v2089, %v2377
    %v2379 = vpop.f32.mrb[0].mxu0
    %2380 = vmatprep.mubr.bf16.mxu0 0
    %2381 = vmatmul.mubr.bf16.gmra.mrb[0].mxu0 %v659
    %v2382 = vpop.f32.mrb[0].mxu0
    %v2383 = vadd.f32 %v2094, %v2382
    %v2384 = vpop.f32.mrb[0].mxu0
    %v2385 = vpop.f32.mrb[0].mxu0
    %v2386 = vadd.f32 %v2097, %v2385
    %v2387 = vpop.f32.mrb[0].mxu0
    %2388 = vmatprep.mubr.bf16.mxu0 0
    %2389 = vmatmul.mubr.bf16.gmra.mrb[0].mxu0 %v662
    %v2390 = vpop.f32.mrb[0].mxu0
    %v2391 = vadd.f32 %v2102, %v2390
    %v2392 = vpop.f32.mrb[0].mxu0
    %v2393 = vpop.f32.mrb[0].mxu0
    %v2394 = vadd.f32 %v2105, %v2393
    %v2395 = vpop.f32.mrb[0].mxu0
    %2396 = vmatprep.mubr.bf16.mxu0 0
    %2397 = vmatmul.mubr.bf16.gmra.mrb[0].mxu0 %v665
    %v2398 = vpop.f32.mrb[0].mxu0
    %v2399 = vadd.f32 %v2110, %v2398
    %v2400 = vpop.f32.mrb[0].mxu0
    %v2401 = vpop.f32.mrb[0].mxu0
    %v2402 = vadd.f32 %v2113, %v2401
    %v2403 = vpop.f32.mrb[0].mxu0
    %2404 = vmatprep.mubr.bf16.mxu0 0
    %2405 = vmatmul.mubr.bf16.gmra.mrb[0].mxu0 %v668
    %v2406 = vpop.f32.mrb[0].mxu0
    %v2407 = vadd.f32 %v2118, %v2406
    %v2408 = vpop.f32.mrb[0].mxu0
    %v2409 = vpop.f32.mrb[0].mxu0
    %v2410 = vadd.f32 %v2121, %v2409
    %v2411 = vpop.f32.mrb[0].mxu0
    %2412 = vmatprep.mubr.bf16.mxu0 0
    %2413 = vmatmul.mubr.bf16.gmra.mrb[0].mxu0 %v671
    %v2414 = vpop.f32.mrb[0].mxu0
    %v2415 = vadd.f32 %v2126, %v2414
    %v2416 = vpop.f32.mrb[0].mxu0
    %v2417 = vpop.f32.mrb[0].mxu0
    %v2418 = vadd.f32 %v2129, %v2417
    %v2419 = vpop.f32.mrb[0].mxu0
    %2420 = vmatprep.mubr.bf16.mxu0 0
    %2421 = vmatmul.mubr.bf16.gmra.mrb[0].mxu0 %v674
    %v2422 = vpop.f32.mrb[0].mxu0
    %v2423 = vadd.f32 %v2134, %v2422
    %v2424 = vpop.f32.mrb[0].mxu0
    %v2425 = vpop.f32.mrb[0].mxu0
    %v2426 = vadd.f32 %v2137, %v2425
    %v2427 = vpop.f32.mrb[0].mxu0
    %2428 = vmatprep.mubr.bf16.mxu0 0
    %2429 = vmatmul.mubr.bf16.gmra.mrb[0].mxu0 %v677
    %v2430 = vpop.f32.mrb[0].mxu0
    %v2431 = vadd.f32 %v2142, %v2430
    %v2432 = vpop.f32.mrb[0].mxu0
    %v2433 = vpop.f32.mrb[0].mxu0
    %v2434 = vadd.f32 %v2145, %v2433
    %v2435 = vpop.f32.mrb[0].mxu0
    %2436 = vmatprep.mubr.bf16.mxu0 0
    %2437 = vmatmul.mubr.bf16.gmra.mrb[0].mxu0 %v680
    %v2438 = vpop.f32.mrb[0].mxu0
    %v2439 = vadd.f32 %v2150, %v2438
    %v2440 = vpop.f32.mrb[0].mxu0
    %v2441 = vpop.f32.mrb[0].mxu0
    %v2442 = vadd.f32 %v2153, %v2441
    %v2443 = vpop.f32.mrb[0].mxu0
    %2444 = vdwg.mxu0
    %v2445 = vpack.c.bf16 %v1553, %v1549
    %v2446 = vpack.c.bf16 %v1555, %v1551
    %v2447 = vpack.c.bf16 %v2194, %v2191
    %v2448 = vpack.c.bf16 %v1563, %v1559
    %v2449 = vpack.c.bf16 %v1565, %v1561
    %v2450 = vpack.c.bf16 %v2202, %v2199
    %v2451 = vpack.c.bf16 %v1573, %v1569
    %v2452 = vpack.c.bf16 %v1575, %v1571
    %v2453 = vpack.c.bf16 %v2210, %v2207
    %v2454 = vpack.c.bf16 %v1583, %v1579
    %v2455 = vpack.c.bf16 %v1585, %v1581
    %v2456 = vpack.c.bf16 %v2218, %v2215
    %v2457 = vpack.c.bf16 %v1593, %v1589
    %v2458 = vpack.c.bf16 %v1595, %v1591
    %v2459 = vpack.c.bf16 %v2226, %v2223
    %v2460 = vpack.c.bf16 %v1603, %v1599
    %v2461 = vpack.c.bf16 %v1605, %v1601
    %v2462 = vpack.c.bf16 %v2234, %v2231
    %v2463 = vpack.c.bf16 %v1613, %v1609
    %v2464 = vpack.c.bf16 %v1615, %v1611
    %v2465 = vpack.c.bf16 %v2242, %v2239
    %v2466 = vpack.c.bf16 %v1623, %v1619
    %v2467 = vpack.c.bf16 %v1625, %v1621
    %v2468 = vpack.c.bf16 %v2250, %v2247
    %v2469 = vpack.c.bf16 %v1633, %v1629
    %v2470 = vpack.c.bf16 %v1635, %v1631
    %v2471 = vpack.c.bf16 %v2258, %v2255
    %v2472 = vpack.c.bf16 %v1643, %v1639
    %v2473 = vpack.c.bf16 %v1645, %v1641
    %v2474 = vpack.c.bf16 %v2266, %v2263
    %v2475 = vpack.c.bf16 %v1653, %v1649
    %v2476 = vpack.c.bf16 %v1655, %v1651
    %v2477 = vpack.c.bf16 %v2274, %v2271
    %v2478 = vpack.c.bf16 %v1663, %v1659
    %v2479 = vpack.c.bf16 %v1665, %v1661
    %v2480 = vpack.c.bf16 %v2282, %v2279
    %v2481 = vpack.c.bf16 %v1673, %v1669
    %v2482 = vpack.c.bf16 %v1675, %v1671
    %v2483 = vpack.c.bf16 %v2290, %v2287
    %v2484 = vpack.c.bf16 %v1683, %v1679
    %v2485 = vpack.c.bf16 %v1685, %v1681
    %v2486 = vpack.c.bf16 %v2298, %v2295
    %v2487 = vpack.c.bf16 %v1693, %v1689
    %v2488 = vpack.c.bf16 %v1695, %v1691
    %v2489 = vpack.c.bf16 %v2306, %v2303
    %v2490 = vpack.c.bf16 %v1703, %v1699
    %v2491 = vpack.c.bf16 %v1705, %v1701
    %v2492 = vpack.c.bf16 %v2314, %v2311
    %v2493 = vpack.c.bf16 %v1713, %v1709
    %v2494 = vpack.c.bf16 %v1715, %v1711
    %v2495 = vpack.c.bf16 %v2322, %v2319
    %v2496 = vpack.c.bf16 %v1723, %v1719
    %v2497 = vpack.c.bf16 %v1725, %v1721
    %v2498 = vpack.c.bf16 %v2330, %v2327
    %v2499 = vpack.c.bf16 %v1733, %v1729
    %v2500 = vpack.c.bf16 %v1735, %v1731
    %v2501 = vpack.c.bf16 %v2338, %v2335
    %v2502 = vpack.c.bf16 %v1743, %v1739
    %v2503 = vpack.c.bf16 %v1745, %v1741
    %v2504 = vpack.c.bf16 %v2346, %v2343
    %v2505 = vpack.c.bf16 %v1753, %v1749
    %v2506 = vpack.c.bf16 %v1755, %v1751
    %v2507 = vpack.c.bf16 %v2354, %v2351
    %v2508 = vpack.c.bf16 %v1763, %v1759
    %v2509 = vpack.c.bf16 %v1765, %v1761
    %v2510 = vpack.c.bf16 %v2362, %v2359
    %v2511 = vpack.c.bf16 %v1773, %v1769
    %v2512 = vpack.c.bf16 %v1775, %v1771
    %v2513 = vpack.c.bf16 %v2370, %v2367
    %v2514 = vpack.c.bf16 %v1783, %v1779
    %v2515 = vpack.c.bf16 %v1785, %v1781
    %v2516 = vpack.c.bf16 %v2378, %v2375
    %v2517 = vpack.c.bf16 %v1793, %v1789
    %v2518 = vpack.c.bf16 %v1795, %v1791
    %v2519 = vpack.c.bf16 %v2386, %v2383
    %v2520 = vpack.c.bf16 %v1803, %v1799
    %v2521 = vpack.c.bf16 %v1805, %v1801
    %v2522 = vpack.c.bf16 %v2394, %v2391
    %v2523 = vpack.c.bf16 %v1813, %v1809
    %v2524 = vpack.c.bf16 %v1815, %v1811
    %v2525 = vpack.c.bf16 %v2402, %v2399
    %v2526 = vpack.c.bf16 %v1823, %v1819
    %v2527 = vpack.c.bf16 %v1825, %v1821
    %v2528 = vpack.c.bf16 %v2410, %v2407
    %v2529 = vpack.c.bf16 %v1833, %v1829
    %v2530 = vpack.c.bf16 %v1835, %v1831
    %v2531 = vpack.c.bf16 %v2418, %v2415
    %v2532 = vpack.c.bf16 %v1843, %v1839
    %v2533 = vpack.c.bf16 %v1845, %v1841
    %v2534 = vpack.c.bf16 %v2426, %v2423
    %v2535 = vpack.c.bf16 %v1853, %v1849
    %v2536 = vpack.c.bf16 %v1855, %v1851
    %v2537 = vpack.c.bf16 %v2434, %v2431
    %v2538 = vpack.c.bf16 %v1863, %v1859
    %v2539 = vpack.c.bf16 %v1865, %v1861
    %v2540 = vpack.c.bf16 %v2442, %v2439
    %vm2541 = vcmask 523264
    %v2543 = vsel %vm2541, %v2445, 0
    %v2546 = vsel %vm2541, %v2448, 0
    %v2549 = vsel %vm2541, %v2451, 0
    %v2552 = vsel %vm2541, %v2454, 0
    %v2555 = vsel %vm2541, %v2446, 0
    %v2558 = vsel %vm2541, %v2449, 0
    %v2561 = vsel %vm2541, %v2452, 0
    %v2564 = vsel %vm2541, %v2455, 0
    %2566 = vmatprep.subr.bf16.mxu0 0
    %2567 = vmatpush1.bf16.xpose.msra.mxu0 %v2555
    %2568 = vmatprep.subr.bf16.mxu0 0
    %2569 = vmatpush1.bf16.xpose.msra.mxu0 %v2558
    %2570 = vmatprep.subr.bf16.mxu0 0
    %2571 = vmatpush1.bf16.xpose.msra.mxu0 %v2561
    %2572 = vmatprep.subr.bf16.mxu0 0
    %2573 = vmatpush1.bf16.xpose.msra.mxu0 %v2564
    %2574 = vmatprep.subr.bf16.mxu0 0
    %2575 = vmatpush1.bf16.xpose.msra.mxu0 0
    %2576 = vmatprep.subr.bf16.mxu0 0
    %2577 = vmatpush1.bf16.xpose.msra.mxu0 0
    %2578 = vmatprep.subr.bf16.mxu0 0
    %2579 = vmatpush1.bf16.xpose.msra.mxu0 0
    %2580 = vmatprep.subr.bf16.mxu0 0
    %2581 = vmatpush1.bf16.xpose.msra.mxu0 0
    %2582 = vmatprep.subr.bf16.mxu0 0
    %2583 = vmatpush1.bf16.xpose.msra.mxu0 0
    %2584 = vmatprep.subr.bf16.mxu0 0
    %2585 = vmatpush1.bf16.xpose.msra.mxu0 0
    %2586 = vmatprep.subr.bf16.mxu0 0
    %2587 = vmatpush1.bf16.xpose.msra.mxu0 0
    %2588 = vmatprep.subr.bf16.mxu0 0
    %2589 = vmatpush1.bf16.xpose.msra.mxu0 0
    %2590 = vmatprep.subr.bf16.mxu0 0
    %2591 = vmatpush1.bf16.xpose.msra.mxu0 0
    %2592 = vmatprep.subr.bf16.mxu0 0
    %2593 = vmatpush1.bf16.xpose.msra.mxu0 0
    %2594 = vmatprep.subr.bf16.mxu0 0
    %2595 = vmatpush1.bf16.xpose.msra.mxu0 0
    %2596 = vmatprep.subr.bf16.mxu0 0
    %2597 = vmatpush1.bf16.xpose.msra.mxu0 0
    %2598 = vmatprep.mubr.bf16.mxu0 0
    %2599 = vmatmul.mubr.bf16.gmra.mrb[0].mxu0 %v2543
    %v2600 = vpop.f32.mrb[0].mxu0
    %v2601 = vadd.f32 0.0, %v2600
    %v2602 = vpop.f32.mrb[0].mxu0
    %v2603 = vpop.f32.mrb[0].mxu0
    %v2604 = vadd.f32 0.0, %v2603
    %v2605 = vpop.f32.mrb[0].mxu0
    %2606 = vmatprep.mubr.bf16.mxu0 0
    %2607 = vmatmul.mubr.bf16.gmra.mrb[0].mxu0 %v2546
    %v2608 = vpop.f32.mrb[0].mxu0
    %v2609 = vadd.f32 0.0, %v2608
    %v2610 = vpop.f32.mrb[0].mxu0
    %v2611 = vpop.f32.mrb[0].mxu0
    %v2612 = vadd.f32 0.0, %v2611
    %v2613 = vpop.f32.mrb[0].mxu0
    %2614 = vmatprep.mubr.bf16.mxu0 0
    %2615 = vmatmul.mubr.bf16.gmra.mrb[0].mxu0 %v2549
    %v2616 = vpop.f32.mrb[0].mxu0
    %v2617 = vadd.f32 0.0, %v2616
    %v2618 = vpop.f32.mrb[0].mxu0
    %v2619 = vpop.f32.mrb[0].mxu0
    %v2620 = vadd.f32 0.0, %v2619
    %v2621 = vpop.f32.mrb[0].mxu0
    %2622 = vmatprep.mubr.bf16.mxu0 0
    %2623 = vmatmul.mubr.bf16.gmra.mrb[0].mxu0 %v2552
    %v2624 = vpop.f32.mrb[0].mxu0
    %v2625 = vadd.f32 0.0, %v2624
    %v2626 = vpop.f32.mrb[0].mxu0
    %v2627 = vpop.f32.mrb[0].mxu0
    %v2628 = vadd.f32 0.0, %v2627
    %v2629 = vpop.f32.mrb[0].mxu0
    %2630 = vdwg.mxu0
    %v2632 = vsel %vm2541, %v2457, 0
    %v2635 = vsel %vm2541, %v2460, 0
    %v2638 = vsel %vm2541, %v2463, 0
    %v2641 = vsel %vm2541, %v2466, 0
    %v2644 = vsel %vm2541, %v2458, 0
    %v2647 = vsel %vm2541, %v2461, 0
    %v2650 = vsel %vm2541, %v2464, 0
    %v2653 = vsel %vm2541, %v2467, 0
    %2655 = vmatprep.subr.bf16.mxu0 0
    %2656 = vmatpush1.bf16.xpose.msra.mxu0 %v2644
    %2657 = vmatprep.subr.bf16.mxu0 0
    %2658 = vmatpush1.bf16.xpose.msra.mxu0 %v2647
    %2659 = vmatprep.subr.bf16.mxu0 0
    %2660 = vmatpush1.bf16.xpose.msra.mxu0 %v2650
    %2661 = vmatprep.subr.bf16.mxu0 0
    %2662 = vmatpush1.bf16.xpose.msra.mxu0 %v2653
    %2663 = vmatprep.subr.bf16.mxu0 0
    %2664 = vmatpush1.bf16.xpose.msra.mxu0 0
    %2665 = vmatprep.subr.bf16.mxu0 0
    %2666 = vmatpush1.bf16.xpose.msra.mxu0 0
    %2667 = vmatprep.subr.bf16.mxu0 0
    %2668 = vmatpush1.bf16.xpose.msra.mxu0 0
    %2669 = vmatprep.subr.bf16.mxu0 0
    %2670 = vmatpush1.bf16.xpose.msra.mxu0 0
    %2671 = vmatprep.subr.bf16.mxu0 0
    %2672 = vmatpush1.bf16.xpose.msra.mxu0 0
    %2673 = vmatprep.subr.bf16.mxu0 0
    %2674 = vmatpush1.bf16.xpose.msra.mxu0 0
    %2675 = vmatprep.subr.bf16.mxu0 0
    %2676 = vmatpush1.bf16.xpose.msra.mxu0 0
    %2677 = vmatprep.subr.bf16.mxu0 0
    %2678 = vmatpush1.bf16.xpose.msra.mxu0 0
    %2679 = vmatprep.subr.bf16.mxu0 0
    %2680 = vmatpush1.bf16.xpose.msra.mxu0 0
    %2681 = vmatprep.subr.bf16.mxu0 0
    %2682 = vmatpush1.bf16.xpose.msra.mxu0 0
    %2683 = vmatprep.subr.bf16.mxu0 0
    %2684 = vmatpush1.bf16.xpose.msra.mxu0 0
    %2685 = vmatprep.subr.bf16.mxu0 0
    %2686 = vmatpush1.bf16.xpose.msra.mxu0 0
    %2687 = vmatprep.mubr.bf16.mxu0 0
    %2688 = vmatmul.mubr.bf16.gmra.mrb[0].mxu0 %v2632
    %v2689 = vpop.f32.mrb[0].mxu0
    %v2690 = vadd.f32 0.0, %v2689
    %v2691 = vpop.f32.mrb[0].mxu0
    %v2692 = vpop.f32.mrb[0].mxu0
    %v2693 = vadd.f32 0.0, %v2692
    %v2694 = vpop.f32.mrb[0].mxu0
    %2695 = vmatprep.mubr.bf16.mxu0 0
    %2696 = vmatmul.mubr.bf16.gmra.mrb[0].mxu0 %v2635
    %v2697 = vpop.f32.mrb[0].mxu0
    %v2698 = vadd.f32 0.0, %v2697
    %v2699 = vpop.f32.mrb[0].mxu0
    %v2700 = vpop.f32.mrb[0].mxu0
    %v2701 = vadd.f32 0.0, %v2700
    %v2702 = vpop.f32.mrb[0].mxu0
    %2703 = vmatprep.mubr.bf16.mxu0 0
    %2704 = vmatmul.mubr.bf16.gmra.mrb[0].mxu0 %v2638
    %v2705 = vpop.f32.mrb[0].mxu0
    %v2706 = vadd.f32 0.0, %v2705
    %v2707 = vpop.f32.mrb[0].mxu0
    %v2708 = vpop.f32.mrb[0].mxu0
    %v2709 = vadd.f32 0.0, %v2708
    %v2710 = vpop.f32.mrb[0].mxu0
    %2711 = vmatprep.mubr.bf16.mxu0 0
    %2712 = vmatmul.mubr.bf16.gmra.mrb[0].mxu0 %v2641
    %v2713 = vpop.f32.mrb[0].mxu0
    %v2714 = vadd.f32 0.0, %v2713
    %v2715 = vpop.f32.mrb[0].mxu0
    %v2716 = vpop.f32.mrb[0].mxu0
    %v2717 = vadd.f32 0.0, %v2716
    %v2718 = vpop.f32.mrb[0].mxu0
    %2719 = vdwg.mxu0
    %v2721 = vsel %vm2541, %v2469, 0
    %v2724 = vsel %vm2541, %v2472, 0
    %v2727 = vsel %vm2541, %v2475, 0
    %v2730 = vsel %vm2541, %v2478, 0
    %v2733 = vsel %vm2541, %v2470, 0
    %v2736 = vsel %vm2541, %v2473, 0
    %v2739 = vsel %vm2541, %v2476, 0
    %v2742 = vsel %vm2541, %v2479, 0
    %2744 = vmatprep.subr.bf16.mxu0 0
    %2745 = vmatpush1.bf16.xpose.msra.mxu0 %v2733
    %2746 = vmatprep.subr.bf16.mxu0 0
    %2747 = vmatpush1.bf16.xpose.msra.mxu0 %v2736
    %2748 = vmatprep.subr.bf16.mxu0 0
    %2749 = vmatpush1.bf16.xpose.msra.mxu0 %v2739
    %2750 = vmatprep.subr.bf16.mxu0 0
    %2751 = vmatpush1.bf16.xpose.msra.mxu0 %v2742
    %2752 = vmatprep.subr.bf16.mxu0 0
    %2753 = vmatpush1.bf16.xpose.msra.mxu0 0
    %2754 = vmatprep.subr.bf16.mxu0 0
    %2755 = vmatpush1.bf16.xpose.msra.mxu0 0
    %2756 = vmatprep.subr.bf16.mxu0 0
    %2757 = vmatpush1.bf16.xpose.msra.mxu0 0
    %2758 = vmatprep.subr.bf16.mxu0 0
    %2759 = vmatpush1.bf16.xpose.msra.mxu0 0
    %2760 = vmatprep.subr.bf16.mxu0 0
    %2761 = vmatpush1.bf16.xpose.msra.mxu0 0
    %2762 = vmatprep.subr.bf16.mxu0 0
    %2763 = vmatpush1.bf16.xpose.msra.mxu0 0
    %2764 = vmatprep.subr.bf16.mxu0 0
    %2765 = vmatpush1.bf16.xpose.msra.mxu0 0
    %2766 = vmatprep.subr.bf16.mxu0 0
    %2767 = vmatpush1.bf16.xpose.msra.mxu0 0
    %2768 = vmatprep.subr.bf16.mxu0 0
    %2769 = vmatpush1.bf16.xpose.msra.mxu0 0
    %2770 = vmatprep.subr.bf16.mxu0 0
    %2771 = vmatpush1.bf16.xpose.msra.mxu0 0
    %2772 = vmatprep.subr.bf16.mxu0 0
    %2773 = vmatpush1.bf16.xpose.msra.mxu0 0
    %2774 = vmatprep.subr.bf16.mxu0 0
    %2775 = vmatpush1.bf16.xpose.msra.mxu0 0
    %2776 = vmatprep.mubr.bf16.mxu0 0
    %2777 = vmatmul.mubr.bf16.gmra.mrb[0].mxu0 %v2721
    %v2778 = vpop.f32.mrb[0].mxu0
    %v2779 = vadd.f32 0.0, %v2778
    %v2780 = vpop.f32.mrb[0].mxu0
    %v2781 = vpop.f32.mrb[0].mxu0
    %v2782 = vadd.f32 0.0, %v2781
    %v2783 = vpop.f32.mrb[0].mxu0
    %2784 = vmatprep.mubr.bf16.mxu0 0
    %2785 = vmatmul.mubr.bf16.gmra.mrb[0].mxu0 %v2724
    %v2786 = vpop.f32.mrb[0].mxu0
    %v2787 = vadd.f32 0.0, %v2786
    %v2788 = vpop.f32.mrb[0].mxu0
    %v2789 = vpop.f32.mrb[0].mxu0
    %v2790 = vadd.f32 0.0, %v2789
    %v2791 = vpop.f32.mrb[0].mxu0
    %2792 = vmatprep.mubr.bf16.mxu0 0
    %2793 = vmatmul.mubr.bf16.gmra.mrb[0].mxu0 %v2727
    %v2794 = vpop.f32.mrb[0].mxu0
    %v2795 = vadd.f32 0.0, %v2794
    %v2796 = vpop.f32.mrb[0].mxu0
    %v2797 = vpop.f32.mrb[0].mxu0
    %v2798 = vadd.f32 0.0, %v2797
    %v2799 = vpop.f32.mrb[0].mxu0
    %2800 = vmatprep.mubr.bf16.mxu0 0
    %2801 = vmatmul.mubr.bf16.gmra.mrb[0].mxu0 %v2730
    %v2802 = vpop.f32.mrb[0].mxu0
    %v2803 = vadd.f32 0.0, %v2802
    %v2804 = vpop.f32.mrb[0].mxu0
    %v2805 = vpop.f32.mrb[0].mxu0
    %v2806 = vadd.f32 0.0, %v2805
    %v2807 = vpop.f32.mrb[0].mxu0
    %2808 = vdwg.mxu0
    %v2810 = vsel %vm2541, %v2481, 0
    %v2813 = vsel %vm2541, %v2484, 0
    %v2816 = vsel %vm2541, %v2487, 0
    %v2819 = vsel %vm2541, %v2490, 0
    %v2822 = vsel %vm2541, %v2482, 0
    %v2825 = vsel %vm2541, %v2485, 0
    %v2828 = vsel %vm2541, %v2488, 0
    %v2831 = vsel %vm2541, %v2491, 0
    %2833 = vmatprep.subr.bf16.mxu0 0
    %2834 = vmatpush1.bf16.xpose.msra.mxu0 %v2822
    %2835 = vmatprep.subr.bf16.mxu0 0
    %2836 = vmatpush1.bf16.xpose.msra.mxu0 %v2825
    %2837 = vmatprep.subr.bf16.mxu0 0
    %2838 = vmatpush1.bf16.xpose.msra.mxu0 %v2828
    %2839 = vmatprep.subr.bf16.mxu0 0
    %2840 = vmatpush1.bf16.xpose.msra.mxu0 %v2831
    %2841 = vmatprep.subr.bf16.mxu0 0
    %2842 = vmatpush1.bf16.xpose.msra.mxu0 0
    %2843 = vmatprep.subr.bf16.mxu0 0
    %2844 = vmatpush1.bf16.xpose.msra.mxu0 0
    %2845 = vmatprep.subr.bf16.mxu0 0
    %2846 = vmatpush1.bf16.xpose.msra.mxu0 0
    %2847 = vmatprep.subr.bf16.mxu0 0
    %2848 = vmatpush1.bf16.xpose.msra.mxu0 0
    %2849 = vmatprep.subr.bf16.mxu0 0
    %2850 = vmatpush1.bf16.xpose.msra.mxu0 0
    %2851 = vmatprep.subr.bf16.mxu0 0
    %2852 = vmatpush1.bf16.xpose.msra.mxu0 0
    %2853 = vmatprep.subr.bf16.mxu0 0
    %2854 = vmatpush1.bf16.xpose.msra.mxu0 0
    %2855 = vmatprep.subr.bf16.mxu0 0
    %2856 = vmatpush1.bf16.xpose.msra.mxu0 0
    %2857 = vmatprep.subr.bf16.mxu0 0
    %2858 = vmatpush1.bf16.xpose.msra.mxu0 0
    %2859 = vmatprep.subr.bf16.mxu0 0
    %2860 = vmatpush1.bf16.xpose.msra.mxu0 0
    %2861 = vmatprep.subr.bf16.mxu0 0
    %2862 = vmatpush1.bf16.xpose.msra.mxu0 0
    %2863 = vmatprep.subr.bf16.mxu0 0
    %2864 = vmatpush1.bf16.xpose.msra.mxu0 0
    %2865 = vmatprep.mubr.bf16.mxu0 0
    %2866 = vmatmul.mubr.bf16.gmra.mrb[0].mxu0 %v2810
    %v2867 = vpop.f32.mrb[0].mxu0
    %v2868 = vadd.f32 0.0, %v2867
    %v2869 = vpop.f32.mrb[0].mxu0
    %v2870 = vpop.f32.mrb[0].mxu0
    %v2871 = vadd.f32 0.0, %v2870
    %v2872 = vpop.f32.mrb[0].mxu0
    %2873 = vmatprep.mubr.bf16.mxu0 0
    %2874 = vmatmul.mubr.bf16.gmra.mrb[0].mxu0 %v2813
    %v2875 = vpop.f32.mrb[0].mxu0
    %v2876 = vadd.f32 0.0, %v2875
    %v2877 = vpop.f32.mrb[0].mxu0
    %v2878 = vpop.f32.mrb[0].mxu0
    %v2879 = vadd.f32 0.0, %v2878
    %v2880 = vpop.f32.mrb[0].mxu0
    %2881 = vmatprep.mubr.bf16.mxu0 0
    %2882 = vmatmul.mubr.bf16.gmra.mrb[0].mxu0 %v2816
    %v2883 = vpop.f32.mrb[0].mxu0
    %v2884 = vadd.f32 0.0, %v2883
    %v2885 = vpop.f32.mrb[0].mxu0
    %v2886 = vpop.f32.mrb[0].mxu0
    %v2887 = vadd.f32 0.0, %v2886
    %v2888 = vpop.f32.mrb[0].mxu0
    %2889 = vmatprep.mubr.bf16.mxu0 0
    %2890 = vmatmul.mubr.bf16.gmra.mrb[0].mxu0 %v2819
    %v2891 = vpop.f32.mrb[0].mxu0
    %v2892 = vadd.f32 0.0, %v2891
    %v2893 = vpop.f32.mrb[0].mxu0
    %v2894 = vpop.f32.mrb[0].mxu0
    %v2895 = vadd.f32 0.0, %v2894
    %v2896 = vpop.f32.mrb[0].mxu0
    %2897 = vdwg.mxu0
    %v2899 = vsel %vm2541, %v2493, 0
    %v2902 = vsel %vm2541, %v2496, 0
    %v2905 = vsel %vm2541, %v2499, 0
    %v2908 = vsel %vm2541, %v2502, 0
    %v2911 = vsel %vm2541, %v2494, 0
    %v2914 = vsel %vm2541, %v2497, 0
    %v2917 = vsel %vm2541, %v2500, 0
    %v2920 = vsel %vm2541, %v2503, 0
    %2922 = vmatprep.subr.bf16.mxu0 0
    %2923 = vmatpush1.bf16.xpose.msra.mxu0 %v2911
    %2924 = vmatprep.subr.bf16.mxu0 0
    %2925 = vmatpush1.bf16.xpose.msra.mxu0 %v2914
    %2926 = vmatprep.subr.bf16.mxu0 0
    %2927 = vmatpush1.bf16.xpose.msra.mxu0 %v2917
    %2928 = vmatprep.subr.bf16.mxu0 0
    %2929 = vmatpush1.bf16.xpose.msra.mxu0 %v2920
    %2930 = vmatprep.subr.bf16.mxu0 0
    %2931 = vmatpush1.bf16.xpose.msra.mxu0 0
    %2932 = vmatprep.subr.bf16.mxu0 0
    %2933 = vmatpush1.bf16.xpose.msra.mxu0 0
    %2934 = vmatprep.subr.bf16.mxu0 0
    %2935 = vmatpush1.bf16.xpose.msra.mxu0 0
    %2936 = vmatprep.subr.bf16.mxu0 0
    %2937 = vmatpush1.bf16.xpose.msra.mxu0 0
    %2938 = vmatprep.subr.bf16.mxu0 0
    %2939 = vmatpush1.bf16.xpose.msra.mxu0 0
    %2940 = vmatprep.subr.bf16.mxu0 0
    %2941 = vmatpush1.bf16.xpose.msra.mxu0 0
    %2942 = vmatprep.subr.bf16.mxu0 0
    %2943 = vmatpush1.bf16.xpose.msra.mxu0 0
    %2944 = vmatprep.subr.bf16.mxu0 0
    %2945 = vmatpush1.bf16.xpose.msra.mxu0 0
    %2946 = vmatprep.subr.bf16.mxu0 0
    %2947 = vmatpush1.bf16.xpose.msra.mxu0 0
    %2948 = vmatprep.subr.bf16.mxu0 0
    %2949 = vmatpush1.bf16.xpose.msra.mxu0 0
    %2950 = vmatprep.subr.bf16.mxu0 0
    %2951 = vmatpush1.bf16.xpose.msra.mxu0 0
    %2952 = vmatprep.subr.bf16.mxu0 0
    %2953 = vmatpush1.bf16.xpose.msra.mxu0 0
    %2954 = vmatprep.mubr.bf16.mxu0 0
    %2955 = vmatmul.mubr.bf16.gmra.mrb[0].mxu0 %v2899
    %v2956 = vpop.f32.mrb[0].mxu0
    %v2957 = vadd.f32 0.0, %v2956
    %v2958 = vpop.f32.mrb[0].mxu0
    %v2959 = vpop.f32.mrb[0].mxu0
    %v2960 = vadd.f32 0.0, %v2959
    %v2961 = vpop.f32.mrb[0].mxu0
    %2962 = vmatprep.mubr.bf16.mxu0 0
    %2963 = vmatmul.mubr.bf16.gmra.mrb[0].mxu0 %v2902
    %v2964 = vpop.f32.mrb[0].mxu0
    %v2965 = vadd.f32 0.0, %v2964
    %v2966 = vpop.f32.mrb[0].mxu0
    %v2967 = vpop.f32.mrb[0].mxu0
    %v2968 = vadd.f32 0.0, %v2967
    %v2969 = vpop.f32.mrb[0].mxu0
    %2970 = vmatprep.mubr.bf16.mxu0 0
    %2971 = vmatmul.mubr.bf16.gmra.mrb[0].mxu0 %v2905
    %v2972 = vpop.f32.mrb[0].mxu0
    %v2973 = vadd.f32 0.0, %v2972
    %v2974 = vpop.f32.mrb[0].mxu0
    %v2975 = vpop.f32.mrb[0].mxu0
    %v2976 = vadd.f32 0.0, %v2975
    %v2977 = vpop.f32.mrb[0].mxu0
    %2978 = vmatprep.mubr.bf16.mxu0 0
    %2979 = vmatmul.mubr.bf16.gmra.mrb[0].mxu0 %v2908
    %v2980 = vpop.f32.mrb[0].mxu0
    %v2981 = vadd.f32 0.0, %v2980
    %v2982 = vpop.f32.mrb[0].mxu0
    %v2983 = vpop.f32.mrb[0].mxu0
    %v2984 = vadd.f32 0.0, %v2983
    %v2985 = vpop.f32.mrb[0].mxu0
    %2986 = vdwg.mxu0
    %v2988 = vsel %vm2541, %v2505, 0
    %v2991 = vsel %vm2541, %v2508, 0
    %v2994 = vsel %vm2541, %v2511, 0
    %v2997 = vsel %vm2541, %v2514, 0
    %v3000 = vsel %vm2541, %v2506, 0
    %v3003 = vsel %vm2541, %v2509, 0
    %v3006 = vsel %vm2541, %v2512, 0
    %v3009 = vsel %vm2541, %v2515, 0
    %3011 = vmatprep.subr.bf16.mxu0 0
    %3012 = vmatpush1.bf16.xpose.msra.mxu0 %v3000
    %3013 = vmatprep.subr.bf16.mxu0 0
    %3014 = vmatpush1.bf16.xpose.msra.mxu0 %v3003
    %3015 = vmatprep.subr.bf16.mxu0 0
    %3016 = vmatpush1.bf16.xpose.msra.mxu0 %v3006
    %3017 = vmatprep.subr.bf16.mxu0 0
    %3018 = vmatpush1.bf16.xpose.msra.mxu0 %v3009
    %3019 = vmatprep.subr.bf16.mxu0 0
    %3020 = vmatpush1.bf16.xpose.msra.mxu0 0
    %3021 = vmatprep.subr.bf16.mxu0 0
    %3022 = vmatpush1.bf16.xpose.msra.mxu0 0
    %3023 = vmatprep.subr.bf16.mxu0 0
    %3024 = vmatpush1.bf16.xpose.msra.mxu0 0
    %3025 = vmatprep.subr.bf16.mxu0 0
    %3026 = vmatpush1.bf16.xpose.msra.mxu0 0
    %3027 = vmatprep.subr.bf16.mxu0 0
    %3028 = vmatpush1.bf16.xpose.msra.mxu0 0
    %3029 = vmatprep.subr.bf16.mxu0 0
    %3030 = vmatpush1.bf16.xpose.msra.mxu0 0
    %3031 = vmatprep.subr.bf16.mxu0 0
    %3032 = vmatpush1.bf16.xpose.msra.mxu0 0
    %3033 = vmatprep.subr.bf16.mxu0 0
    %3034 = vmatpush1.bf16.xpose.msra.mxu0 0
    %3035 = vmatprep.subr.bf16.mxu0 0
    %3036 = vmatpush1.bf16.xpose.msra.mxu0 0
    %3037 = vmatprep.subr.bf16.mxu0 0
    %3038 = vmatpush1.bf16.xpose.msra.mxu0 0
    %3039 = vmatprep.subr.bf16.mxu0 0
    %3040 = vmatpush1.bf16.xpose.msra.mxu0 0
    %3041 = vmatprep.subr.bf16.mxu0 0
    %3042 = vmatpush1.bf16.xpose.msra.mxu0 0
    %3043 = vmatprep.mubr.bf16.mxu0 0
    %3044 = vmatmul.mubr.bf16.gmra.mrb[0].mxu0 %v2988
    %v3045 = vpop.f32.mrb[0].mxu0
    %v3046 = vadd.f32 0.0, %v3045
    %v3047 = vpop.f32.mrb[0].mxu0
    %v3048 = vpop.f32.mrb[0].mxu0
    %v3049 = vadd.f32 0.0, %v3048
    %v3050 = vpop.f32.mrb[0].mxu0
    %3051 = vmatprep.mubr.bf16.mxu0 0
    %3052 = vmatmul.mubr.bf16.gmra.mrb[0].mxu0 %v2991
    %v3053 = vpop.f32.mrb[0].mxu0
    %v3054 = vadd.f32 0.0, %v3053
    %v3055 = vpop.f32.mrb[0].mxu0
    %v3056 = vpop.f32.mrb[0].mxu0
    %v3057 = vadd.f32 0.0, %v3056
    %v3058 = vpop.f32.mrb[0].mxu0
    %3059 = vmatprep.mubr.bf16.mxu0 0
    %3060 = vmatmul.mubr.bf16.gmra.mrb[0].mxu0 %v2994
    %v3061 = vpop.f32.mrb[0].mxu0
    %v3062 = vadd.f32 0.0, %v3061
    %v3063 = vpop.f32.mrb[0].mxu0
    %v3064 = vpop.f32.mrb[0].mxu0
    %v3065 = vadd.f32 0.0, %v3064
    %v3066 = vpop.f32.mrb[0].mxu0
    %3067 = vmatprep.mubr.bf16.mxu0 0
    %3068 = vmatmul.mubr.bf16.gmra.mrb[0].mxu0 %v2997
    %v3069 = vpop.f32.mrb[0].mxu0
    %v3070 = vadd.f32 0.0, %v3069
    %v3071 = vpop.f32.mrb[0].mxu0
    %v3072 = vpop.f32.mrb[0].mxu0
    %v3073 = vadd.f32 0.0, %v3072
    %v3074 = vpop.f32.mrb[0].mxu0
    %3075 = vdwg.mxu0
    %v3077 = vsel %vm2541, %v2517, 0
    %v3080 = vsel %vm2541, %v2520, 0
    %v3083 = vsel %vm2541, %v2523, 0
    %v3086 = vsel %vm2541, %v2526, 0
    %v3089 = vsel %vm2541, %v2518, 0
    %v3092 = vsel %vm2541, %v2521, 0
    %v3095 = vsel %vm2541, %v2524, 0
    %v3098 = vsel %vm2541, %v2527, 0
    %3100 = vmatprep.subr.bf16.mxu0 0
    %3101 = vmatpush1.bf16.xpose.msra.mxu0 %v3089
    %3102 = vmatprep.subr.bf16.mxu0 0
    %3103 = vmatpush1.bf16.xpose.msra.mxu0 %v3092
    %3104 = vmatprep.subr.bf16.mxu0 0
    %3105 = vmatpush1.bf16.xpose.msra.mxu0 %v3095
    %3106 = vmatprep.subr.bf16.mxu0 0
    %3107 = vmatpush1.bf16.xpose.msra.mxu0 %v3098
    %3108 = vmatprep.subr.bf16.mxu0 0
    %3109 = vmatpush1.bf16.xpose.msra.mxu0 0
    %3110 = vmatprep.subr.bf16.mxu0 0
    %3111 = vmatpush1.bf16.xpose.msra.mxu0 0
    %3112 = vmatprep.subr.bf16.mxu0 0
    %3113 = vmatpush1.bf16.xpose.msra.mxu0 0
    %3114 = vmatprep.subr.bf16.mxu0 0
    %3115 = vmatpush1.bf16.xpose.msra.mxu0 0
    %3116 = vmatprep.subr.bf16.mxu0 0
    %3117 = vmatpush1.bf16.xpose.msra.mxu0 0
    %3118 = vmatprep.subr.bf16.mxu0 0
    %3119 = vmatpush1.bf16.xpose.msra.mxu0 0
    %3120 = vmatprep.subr.bf16.mxu0 0
    %3121 = vmatpush1.bf16.xpose.msra.mxu0 0
    %3122 = vmatprep.subr.bf16.mxu0 0
    %3123 = vmatpush1.bf16.xpose.msra.mxu0 0
    %3124 = vmatprep.subr.bf16.mxu0 0
    %3125 = vmatpush1.bf16.xpose.msra.mxu0 0
    %3126 = vmatprep.subr.bf16.mxu0 0
    %3127 = vmatpush1.bf16.xpose.msra.mxu0 0
    %3128 = vmatprep.subr.bf16.mxu0 0
    %3129 = vmatpush1.bf16.xpose.msra.mxu0 0
    %3130 = vmatprep.subr.bf16.mxu0 0
    %3131 = vmatpush1.bf16.xpose.msra.mxu0 0
    %3132 = vmatprep.mubr.bf16.mxu0 0
    %3133 = vmatmul.mubr.bf16.gmra.mrb[0].mxu0 %v3077
    %v3134 = vpop.f32.mrb[0].mxu0
    %v3135 = vadd.f32 0.0, %v3134
    %v3136 = vpop.f32.mrb[0].mxu0
    %v3137 = vpop.f32.mrb[0].mxu0
    %v3138 = vadd.f32 0.0, %v3137
    %v3139 = vpop.f32.mrb[0].mxu0
    %3140 = vmatprep.mubr.bf16.mxu0 0
    %3141 = vmatmul.mubr.bf16.gmra.mrb[0].mxu0 %v3080
    %v3142 = vpop.f32.mrb[0].mxu0
    %v3143 = vadd.f32 0.0, %v3142
    %v3144 = vpop.f32.mrb[0].mxu0
    %v3145 = vpop.f32.mrb[0].mxu0
    %v3146 = vadd.f32 0.0, %v3145
    %v3147 = vpop.f32.mrb[0].mxu0
    %3148 = vmatprep.mubr.bf16.mxu0 0
    %3149 = vmatmul.mubr.bf16.gmra.mrb[0].mxu0 %v3083
    %v3150 = vpop.f32.mrb[0].mxu0
    %v3151 = vadd.f32 0.0, %v3150
    %v3152 = vpop.f32.mrb[0].mxu0
    %v3153 = vpop.f32.mrb[0].mxu0
    %v3154 = vadd.f32 0.0, %v3153
    %v3155 = vpop.f32.mrb[0].mxu0
    %3156 = vmatprep.mubr.bf16.mxu0 0
    %3157 = vmatmul.mubr.bf16.gmra.mrb[0].mxu0 %v3086
    %v3158 = vpop.f32.mrb[0].mxu0
    %v3159 = vadd.f32 0.0, %v3158
    %v3160 = vpop.f32.mrb[0].mxu0
    %v3161 = vpop.f32.mrb[0].mxu0
    %v3162 = vadd.f32 0.0, %v3161
    %v3163 = vpop.f32.mrb[0].mxu0
    %3164 = vdwg.mxu0
    %v3166 = vsel %vm2541, %v2529, 0
    %v3169 = vsel %vm2541, %v2532, 0
    %v3172 = vsel %vm2541, %v2535, 0
    %v3175 = vsel %vm2541, %v2538, 0
    %v3178 = vsel %vm2541, %v2530, 0
    %v3181 = vsel %vm2541, %v2533, 0
    %v3184 = vsel %vm2541, %v2536, 0
    %v3187 = vsel %vm2541, %v2539, 0
    %3189 = vmatprep.subr.bf16.mxu0 0
    %3190 = vmatpush1.bf16.xpose.msra.mxu0 %v3178
    %3191 = vmatprep.subr.bf16.mxu0 0
    %3192 = vmatpush1.bf16.xpose.msra.mxu0 %v3181
    %3193 = vmatprep.subr.bf16.mxu0 0
    %3194 = vmatpush1.bf16.xpose.msra.mxu0 %v3184
    %3195 = vmatprep.subr.bf16.mxu0 0
    %3196 = vmatpush1.bf16.xpose.msra.mxu0 %v3187
    %3197 = vmatprep.subr.bf16.mxu0 0
    %3198 = vmatpush1.bf16.xpose.msra.mxu0 0
    %3199 = vmatprep.subr.bf16.mxu0 0
    %3200 = vmatpush1.bf16.xpose.msra.mxu0 0
    %3201 = vmatprep.subr.bf16.mxu0 0
    %3202 = vmatpush1.bf16.xpose.msra.mxu0 0
    %3203 = vmatprep.subr.bf16.mxu0 0
    %3204 = vmatpush1.bf16.xpose.msra.mxu0 0
    %3205 = vmatprep.subr.bf16.mxu0 0
    %3206 = vmatpush1.bf16.xpose.msra.mxu0 0
    %3207 = vmatprep.subr.bf16.mxu0 0
    %3208 = vmatpush1.bf16.xpose.msra.mxu0 0
    %3209 = vmatprep.subr.bf16.mxu0 0
    %3210 = vmatpush1.bf16.xpose.msra.mxu0 0
    %3211 = vmatprep.subr.bf16.mxu0 0
    %3212 = vmatpush1.bf16.xpose.msra.mxu0 0
    %3213 = vmatprep.subr.bf16.mxu0 0
    %3214 = vmatpush1.bf16.xpose.msra.mxu0 0
    %3215 = vmatprep.subr.bf16.mxu0 0
    %3216 = vmatpush1.bf16.xpose.msra.mxu0 0
    %3217 = vmatprep.subr.bf16.mxu0 0
    %3218 = vmatpush1.bf16.xpose.msra.mxu0 0
    %3219 = vmatprep.subr.bf16.mxu0 0
    %3220 = vmatpush1.bf16.xpose.msra.mxu0 0
    %3221 = vmatprep.mubr.bf16.mxu0 0
    %3222 = vmatmul.mubr.bf16.gmra.mrb[0].mxu0 %v3166
    %v3223 = vpop.f32.mrb[0].mxu0
    %v3224 = vadd.f32 0.0, %v3223
    %v3225 = vpop.f32.mrb[0].mxu0
    %v3226 = vpop.f32.mrb[0].mxu0
    %v3227 = vadd.f32 0.0, %v3226
    %v3228 = vpop.f32.mrb[0].mxu0
    %3229 = vmatprep.mubr.bf16.mxu0 0
    %3230 = vmatmul.mubr.bf16.gmra.mrb[0].mxu0 %v3169
    %v3231 = vpop.f32.mrb[0].mxu0
    %v3232 = vadd.f32 0.0, %v3231
    %v3233 = vpop.f32.mrb[0].mxu0
    %v3234 = vpop.f32.mrb[0].mxu0
    %v3235 = vadd.f32 0.0, %v3234
    %v3236 = vpop.f32.mrb[0].mxu0
    %3237 = vmatprep.mubr.bf16.mxu0 0
    %3238 = vmatmul.mubr.bf16.gmra.mrb[0].mxu0 %v3172
    %v3239 = vpop.f32.mrb[0].mxu0
    %v3240 = vadd.f32 0.0, %v3239
    %v3241 = vpop.f32.mrb[0].mxu0
    %v3242 = vpop.f32.mrb[0].mxu0
    %v3243 = vadd.f32 0.0, %v3242
    %v3244 = vpop.f32.mrb[0].mxu0
    %3245 = vmatprep.mubr.bf16.mxu0 0
    %3246 = vmatmul.mubr.bf16.gmra.mrb[0].mxu0 %v3175
    %v3247 = vpop.f32.mrb[0].mxu0
    %v3248 = vadd.f32 0.0, %v3247
    %v3249 = vpop.f32.mrb[0].mxu0
    %v3250 = vpop.f32.mrb[0].mxu0
    %v3251 = vadd.f32 0.0, %v3250
    %v3252 = vpop.f32.mrb[0].mxu0
    %3253 = vdwg.mxu0
    %v3254 = vlaneseq
    %v3255 = vshrl.u32 %v3254, 7
    %v3256 = vadd.s32 %v3255, 8
    %v3257 = vadd.s32 %v3255, 16
    %v3258 = vadd.s32 %v3255, 24
    %v3259 = vadd.s32 %v3255, 32
    %v3260 = vadd.s32 %v3255, 40
    %v3261 = vadd.s32 %v3255, 48
    %v3262 = vadd.s32 %v3255, 56
    %v3263 = vlaneseq
    %v3264 = vand.u32 %v3263, 127
    %vm3265 = vcmp.ge.s32.totalorder %v3255, %v3264
    %vm3266 = vcmp.ge.s32.totalorder %v3256, %v3264
    %vm3267 = vcmp.ge.s32.totalorder %v3257, %v3264
    %vm3268 = vcmp.ge.s32.totalorder %v3258, %v3264
    %vm3269 = vcmp.ge.s32.totalorder %v3259, %v3264
    %vm3270 = vcmp.ge.s32.totalorder %v3260, %v3264
    %vm3271 = vcmp.ge.s32.totalorder %v3261, %v3264
    %vm3272 = vcmp.ge.s32.totalorder %v3262, %v3264
    %v3273 = vsel %vm3265, 1, 0
    %v3274 = vsel %vm3266, 1, 0
    %v3275 = vsel %vm3267, 1, 0
    %v3276 = vsel %vm3268, 1, 0
    %v3277 = vsel %vm3269, 1, 0
    %v3278 = vsel %vm3270, 1, 0
    %v3279 = vsel %vm3271, 1, 0
    %v3280 = vsel %vm3272, 1, 0
    %vm3281 = vcmp.eq.s32.totalorder %v3273, 1
    %vm3282 = vcmp.eq.s32.totalorder %v3274, 1
    %vm3283 = vcmp.eq.s32.totalorder %v3275, 1
    %vm3284 = vcmp.eq.s32.totalorder %v3276, 1
    %vm3285 = vcmp.eq.s32.totalorder %v3277, 1
    %vm3286 = vcmp.eq.s32.totalorder %v3278, 1
    %vm3287 = vcmp.eq.s32.totalorder %v3279, 1
    %vm3288 = vcmp.eq.s32.totalorder %v3280, 1
    %v3289 = vsel %vm3281, %v2601, -1e+30
    %v3290 = vsel %vm3282, %v2604, -1e+30
    %v3291 = vsel %vm3283, %v2609, -1e+30
    %v3292 = vsel %vm3284, %v2612, -1e+30
    %v3293 = vsel %vm3285, %v2617, -1e+30
    %v3294 = vsel %vm3286, %v2620, -1e+30
    %v3295 = vsel %vm3287, %v2625, -1e+30
    %v3296 = vsel %vm3288, %v2628, -1e+30
    %v3297 = vsel %vm3281, %v2690, -1e+30
    %v3298 = vsel %vm3282, %v2693, -1e+30
    %v3299 = vsel %vm3283, %v2698, -1e+30
    %v3300 = vsel %vm3284, %v2701, -1e+30
    %v3301 = vsel %vm3285, %v2706, -1e+30
    %v3302 = vsel %vm3286, %v2709, -1e+30
    %v3303 = vsel %vm3287, %v2714, -1e+30
    %v3304 = vsel %vm3288, %v2717, -1e+30
    %v3305 = vsel %vm3281, %v2779, -1e+30
    %v3306 = vsel %vm3282, %v2782, -1e+30
    %v3307 = vsel %vm3283, %v2787, -1e+30
    %v3308 = vsel %vm3284, %v2790, -1e+30
    %v3309 = vsel %vm3285, %v2795, -1e+30
    %v3310 = vsel %vm3286, %v2798, -1e+30
    %v3311 = vsel %vm3287, %v2803, -1e+30
    %v3312 = vsel %vm3288, %v2806, -1e+30
    %v3313 = vsel %vm3281, %v2868, -1e+30
    %v3314 = vsel %vm3282, %v2871, -1e+30
    %v3315 = vsel %vm3283, %v2876, -1e+30
    %v3316 = vsel %vm3284, %v2879, -1e+30
    %v3317 = vsel %vm3285, %v2884, -1e+30
    %v3318 = vsel %vm3286, %v2887, -1e+30
    %v3319 = vsel %vm3287, %v2892, -1e+30
    %v3320 = vsel %vm3288, %v2895, -1e+30
    %v3321 = vsel %vm3281, %v2957, -1e+30
    %v3322 = vsel %vm3282, %v2960, -1e+30
    %v3323 = vsel %vm3283, %v2965, -1e+30
    %v3324 = vsel %vm3284, %v2968, -1e+30
    %v3325 = vsel %vm3285, %v2973, -1e+30
    %v3326 = vsel %vm3286, %v2976, -1e+30
    %v3327 = vsel %vm3287, %v2981, -1e+30
    %v3328 = vsel %vm3288, %v2984, -1e+30
    %v3329 = vsel %vm3281, %v3046, -1e+30
    %v3330 = vsel %vm3282, %v3049, -1e+30
    %v3331 = vsel %vm3283, %v3054, -1e+30
    %v3332 = vsel %vm3284, %v3057, -1e+30
    %v3333 = vsel %vm3285, %v3062, -1e+30
    %v3334 = vsel %vm3286, %v3065, -1e+30
    %v3335 = vsel %vm3287, %v3070, -1e+30
    %v3336 = vsel %vm3288, %v3073, -1e+30
    %v3337 = vsel %vm3281, %v3135, -1e+30
    %v3338 = vsel %vm3282, %v3138, -1e+30
    %v3339 = vsel %vm3283, %v3143, -1e+30
    %v3340 = vsel %vm3284, %v3146, -1e+30
    %v3341 = vsel %vm3285, %v3151, -1e+30
    %v3342 = vsel %vm3286, %v3154, -1e+30
    %v3343 = vsel %vm3287, %v3159, -1e+30
    %v3344 = vsel %vm3288, %v3162, -1e+30
    %v3345 = vsel %vm3281, %v3224, -1e+30
    %v3346 = vsel %vm3282, %v3227, -1e+30
    %v3347 = vsel %vm3283, %v3232, -1e+30
    %v3348 = vsel %vm3284, %v3235, -1e+30
    %v3349 = vsel %vm3285, %v3240, -1e+30
    %v3350 = vsel %vm3286, %v3243, -1e+30
    %v3351 = vsel %vm3287, %v3248, -1e+30
    %v3352 = vsel %vm3288, %v3251, -1e+30
    %v3353 = vsel %vm2541, %v3289, -inf
    %3354 = vmax.xlane.f32.xlu0 %v3353
    %v3355 = vpop.xlane.xlu0 %3354
    %v3356 = vsel %vm2541, %v3290, -inf
    %3357 = vmax.xlane.f32.xlu0 %v3356
    %v3358 = vpop.xlane.xlu0 %3357
    %v3359 = vsel %vm2541, %v3291, -inf
    %3360 = vmax.xlane.f32.xlu0 %v3359
    %v3361 = vpop.xlane.xlu0 %3360
    %v3362 = vsel %vm2541, %v3292, -inf
    %3363 = vmax.xlane.f32.xlu0 %v3362
    %v3364 = vpop.xlane.xlu0 %3363
    %v3365 = vsel %vm2541, %v3293, -inf
    %3366 = vmax.xlane.f32.xlu0 %v3365
    %v3367 = vpop.xlane.xlu0 %3366
    %v3368 = vsel %vm2541, %v3294, -inf
    %3369 = vmax.xlane.f32.xlu0 %v3368
    %v3370 = vpop.xlane.xlu0 %3369
    %v3371 = vsel %vm2541, %v3295, -inf
    %3372 = vmax.xlane.f32.xlu0 %v3371
    %v3373 = vpop.xlane.xlu0 %3372
    %v3374 = vsel %vm2541, %v3296, -inf
    %3375 = vmax.xlane.f32.xlu0 %v3374
    %v3376 = vpop.xlane.xlu0 %3375
    %v3377 = vsel %vm2541, %v3297, -inf
    %3378 = vmax.xlane.f32.xlu0 %v3377
    %v3379 = vpop.xlane.xlu0 %3378
    %v3380 = vsel %vm2541, %v3298, -inf
    %3381 = vmax.xlane.f32.xlu0 %v3380
    %v3382 = vpop.xlane.xlu0 %3381
    %v3383 = vsel %vm2541, %v3299, -inf
    %3384 = vmax.xlane.f32.xlu0 %v3383
    %v3385 = vpop.xlane.xlu0 %3384
    %v3386 = vsel %vm2541, %v3300, -inf
    %3387 = vmax.xlane.f32.xlu0 %v3386
    %v3388 = vpop.xlane.xlu0 %3387
    %v3389 = vsel %vm2541, %v3301, -inf
    %3390 = vmax.xlane.f32.xlu0 %v3389
    %v3391 = vpop.xlane.xlu0 %3390
    %v3392 = vsel %vm2541, %v3302, -inf
    %3393 = vmax.xlane.f32.xlu0 %v3392
    %v3394 = vpop.xlane.xlu0 %3393
    %v3395 = vsel %vm2541, %v3303, -inf
    %3396 = vmax.xlane.f32.xlu0 %v3395
    %v3397 = vpop.xlane.xlu0 %3396
    %v3398 = vsel %vm2541, %v3304, -inf
    %3399 = vmax.xlane.f32.xlu0 %v3398
    %v3400 = vpop.xlane.xlu0 %3399
    %v3401 = vsel %vm2541, %v3305, -inf
    %3402 = vmax.xlane.f32.xlu0 %v3401
    %v3403 = vpop.xlane.xlu0 %3402
    %v3404 = vsel %vm2541, %v3306, -inf
    %3405 = vmax.xlane.f32.xlu0 %v3404
    %v3406 = vpop.xlane.xlu0 %3405
    %v3407 = vsel %vm2541, %v3307, -inf
    %3408 = vmax.xlane.f32.xlu0 %v3407
    %v3409 = vpop.xlane.xlu0 %3408
    %v3410 = vsel %vm2541, %v3308, -inf
    %3411 = vmax.xlane.f32.xlu0 %v3410
    %v3412 = vpop.xlane.xlu0 %3411
    %v3413 = vsel %vm2541, %v3309, -inf
    %3414 = vmax.xlane.f32.xlu0 %v3413
    %v3415 = vpop.xlane.xlu0 %3414
    %v3416 = vsel %vm2541, %v3310, -inf
    %3417 = vmax.xlane.f32.xlu0 %v3416
    %v3418 = vpop.xlane.xlu0 %3417
    %v3419 = vsel %vm2541, %v3311, -inf
    %3420 = vmax.xlane.f32.xlu0 %v3419
    %v3421 = vpop.xlane.xlu0 %3420
    %v3422 = vsel %vm2541, %v3312, -inf
    %3423 = vmax.xlane.f32.xlu0 %v3422
    %v3424 = vpop.xlane.xlu0 %3423
    %v3425 = vsel %vm2541, %v3313, -inf
    %3426 = vmax.xlane.f32.xlu0 %v3425
    %v3427 = vpop.xlane.xlu0 %3426
    %v3428 = vsel %vm2541, %v3314, -inf
    %3429 = vmax.xlane.f32.xlu0 %v3428
    %v3430 = vpop.xlane.xlu0 %3429
    %v3431 = vsel %vm2541, %v3315, -inf
    %3432 = vmax.xlane.f32.xlu0 %v3431
    %v3433 = vpop.xlane.xlu0 %3432
    %v3434 = vsel %vm2541, %v3316, -inf
    %3435 = vmax.xlane.f32.xlu0 %v3434
    %v3436 = vpop.xlane.xlu0 %3435
    %v3437 = vsel %vm2541, %v3317, -inf
    %3438 = vmax.xlane.f32.xlu0 %v3437
    %v3439 = vpop.xlane.xlu0 %3438
    %v3440 = vsel %vm2541, %v3318, -inf
    %3441 = vmax.xlane.f32.xlu0 %v3440
    %v3442 = vpop.xlane.xlu0 %3441
    %v3443 = vsel %vm2541, %v3319, -inf
    %3444 = vmax.xlane.f32.xlu0 %v3443
    %v3445 = vpop.xlane.xlu0 %3444
    %v3446 = vsel %vm2541, %v3320, -inf
    %3447 = vmax.xlane.f32.xlu0 %v3446
    %v3448 = vpop.xlane.xlu0 %3447
    %v3449 = vsel %vm2541, %v3321, -inf
    %3450 = vmax.xlane.f32.xlu0 %v3449
    %v3451 = vpop.xlane.xlu0 %3450
    %v3452 = vsel %vm2541, %v3322, -inf
    %3453 = vmax.xlane.f32.xlu0 %v3452
    %v3454 = vpop.xlane.xlu0 %3453
    %v3455 = vsel %vm2541, %v3323, -inf
    %3456 = vmax.xlane.f32.xlu0 %v3455
    %v3457 = vpop.xlane.xlu0 %3456
    %v3458 = vsel %vm2541, %v3324, -inf
    %3459 = vmax.xlane.f32.xlu0 %v3458
    %v3460 = vpop.xlane.xlu0 %3459
    %v3461 = vsel %vm2541, %v3325, -inf
    %3462 = vmax.xlane.f32.xlu0 %v3461
    %v3463 = vpop.xlane.xlu0 %3462
    %v3464 = vsel %vm2541, %v3326, -inf
    %3465 = vmax.xlane.f32.xlu0 %v3464
    %v3466 = vpop.xlane.xlu0 %3465
    %v3467 = vsel %vm2541, %v3327, -inf
    %3468 = vmax.xlane.f32.xlu0 %v3467
    %v3469 = vpop.xlane.xlu0 %3468
    %v3470 = vsel %vm2541, %v3328, -inf
    %3471 = vmax.xlane.f32.xlu0 %v3470
    %v3472 = vpop.xlane.xlu0 %3471
    %v3473 = vsel %vm2541, %v3329, -inf
    %3474 = vmax.xlane.f32.xlu0 %v3473
    %v3475 = vpop.xlane.xlu0 %3474
    %v3476 = vsel %vm2541, %v3330, -inf
    %3477 = vmax.xlane.f32.xlu0 %v3476
    %v3478 = vpop.xlane.xlu0 %3477
    %v3479 = vsel %vm2541, %v3331, -inf
    %3480 = vmax.xlane.f32.xlu0 %v3479
    %v3481 = vpop.xlane.xlu0 %3480
    %v3482 = vsel %vm2541, %v3332, -inf
    %3483 = vmax.xlane.f32.xlu0 %v3482
    %v3484 = vpop.xlane.xlu0 %3483
    %v3485 = vsel %vm2541, %v3333, -inf
    %3486 = vmax.xlane.f32.xlu0 %v3485
    %v3487 = vpop.xlane.xlu0 %3486
    %v3488 = vsel %vm2541, %v3334, -inf
    %3489 = vmax.xlane.f32.xlu0 %v3488
    %v3490 = vpop.xlane.xlu0 %3489
    %v3491 = vsel %vm2541, %v3335, -inf
    %3492 = vmax.xlane.f32.xlu0 %v3491
    %v3493 = vpop.xlane.xlu0 %3492
    %v3494 = vsel %vm2541, %v3336, -inf
    %3495 = vmax.xlane.f32.xlu0 %v3494
    %v3496 = vpop.xlane.xlu0 %3495
    %v3497 = vsel %vm2541, %v3337, -inf
    %3498 = vmax.xlane.f32.xlu0 %v3497
    %v3499 = vpop.xlane.xlu0 %3498
    %v3500 = vsel %vm2541, %v3338, -inf
    %3501 = vmax.xlane.f32.xlu0 %v3500
    %v3502 = vpop.xlane.xlu0 %3501
    %v3503 = vsel %vm2541, %v3339, -inf
    %3504 = vmax.xlane.f32.xlu0 %v3503
    %v3505 = vpop.xlane.xlu0 %3504
    %v3506 = vsel %vm2541, %v3340, -inf
    %3507 = vmax.xlane.f32.xlu0 %v3506
    %v3508 = vpop.xlane.xlu0 %3507
    %v3509 = vsel %vm2541, %v3341, -inf
    %3510 = vmax.xlane.f32.xlu0 %v3509
    %v3511 = vpop.xlane.xlu0 %3510
    %v3512 = vsel %vm2541, %v3342, -inf
    %3513 = vmax.xlane.f32.xlu0 %v3512
    %v3514 = vpop.xlane.xlu0 %3513
    %v3515 = vsel %vm2541, %v3343, -inf
    %3516 = vmax.xlane.f32.xlu0 %v3515
    %v3517 = vpop.xlane.xlu0 %3516
    %v3518 = vsel %vm2541, %v3344, -inf
    %3519 = vmax.xlane.f32.xlu0 %v3518
    %v3520 = vpop.xlane.xlu0 %3519
    %v3521 = vsel %vm2541, %v3345, -inf
    %3522 = vmax.xlane.f32.xlu0 %v3521
    %v3523 = vpop.xlane.xlu0 %3522
    %v3524 = vsel %vm2541, %v3346, -inf
    %3525 = vmax.xlane.f32.xlu0 %v3524
    %v3526 = vpop.xlane.xlu0 %3525
    %v3527 = vsel %vm2541, %v3347, -inf
    %3528 = vmax.xlane.f32.xlu0 %v3527
    %v3529 = vpop.xlane.xlu0 %3528
    %v3530 = vsel %vm2541, %v3348, -inf
    %3531 = vmax.xlane.f32.xlu0 %v3530
    %v3532 = vpop.xlane.xlu0 %3531
    %v3533 = vsel %vm2541, %v3349, -inf
    %3534 = vmax.xlane.f32.xlu0 %v3533
    %v3535 = vpop.xlane.xlu0 %3534
    %v3536 = vsel %vm2541, %v3350, -inf
    %3537 = vmax.xlane.f32.xlu0 %v3536
    %v3538 = vpop.xlane.xlu0 %3537
    %v3539 = vsel %vm2541, %v3351, -inf
    %3540 = vmax.xlane.f32.xlu0 %v3539
    %v3541 = vpop.xlane.xlu0 %3540
    %v3542 = vsel %vm2541, %v3352, -inf
    %3543 = vmax.xlane.f32.xlu0 %v3542
    %v3544 = vpop.xlane.xlu0 %3543
    %v3545 = vsub.f32 %v3289, %v3355
    %v3546 = vsub.f32 %v3290, %v3358
    %v3547 = vsub.f32 %v3291, %v3361
    %v3548 = vsub.f32 %v3292, %v3364
    %v3549 = vsub.f32 %v3293, %v3367
    %v3550 = vsub.f32 %v3294, %v3370
    %v3551 = vsub.f32 %v3295, %v3373
    %v3552 = vsub.f32 %v3296, %v3376
    %v3553 = vsub.f32 %v3297, %v3379
    %v3554 = vsub.f32 %v3298, %v3382
    %v3555 = vsub.f32 %v3299, %v3385
    %v3556 = vsub.f32 %v3300, %v3388
    %v3557 = vsub.f32 %v3301, %v3391
    %v3558 = vsub.f32 %v3302, %v3394
    %v3559 = vsub.f32 %v3303, %v3397
    %v3560 = vsub.f32 %v3304, %v3400
    %v3561 = vsub.f32 %v3305, %v3403
    %v3562 = vsub.f32 %v3306, %v3406
    %v3563 = vsub.f32 %v3307, %v3409
    %v3564 = vsub.f32 %v3308, %v3412
    %v3565 = vsub.f32 %v3309, %v3415
    %v3566 = vsub.f32 %v3310, %v3418
    %v3567 = vsub.f32 %v3311, %v3421
    %v3568 = vsub.f32 %v3312, %v3424
    %v3569 = vsub.f32 %v3313, %v3427
    %v3570 = vsub.f32 %v3314, %v3430
    %v3571 = vsub.f32 %v3315, %v3433
    %v3572 = vsub.f32 %v3316, %v3436
    %v3573 = vsub.f32 %v3317, %v3439
    %v3574 = vsub.f32 %v3318, %v3442
    %v3575 = vsub.f32 %v3319, %v3445
    %v3576 = vsub.f32 %v3320, %v3448
    %v3577 = vsub.f32 %v3321, %v3451
    %v3578 = vsub.f32 %v3322, %v3454
    %v3579 = vsub.f32 %v3323, %v3457
    %v3580 = vsub.f32 %v3324, %v3460
    %v3581 = vsub.f32 %v3325, %v3463
    %v3582 = vsub.f32 %v3326, %v3466
    %v3583 = vsub.f32 %v3327, %v3469
    %v3584 = vsub.f32 %v3328, %v3472
    %v3585 = vsub.f32 %v3329, %v3475
    %v3586 = vsub.f32 %v3330, %v3478
    %v3587 = vsub.f32 %v3331, %v3481
    %v3588 = vsub.f32 %v3332, %v3484
    %v3589 = vsub.f32 %v3333, %v3487
    %v3590 = vsub.f32 %v3334, %v3490
    %v3591 = vsub.f32 %v3335, %v3493
    %v3592 = vsub.f32 %v3336, %v3496
    %v3593 = vsub.f32 %v3337, %v3499
    %v3594 = vsub.f32 %v3338, %v3502
    %v3595 = vsub.f32 %v3339, %v3505
    %v3596 = vsub.f32 %v3340, %v3508
    %v3597 = vsub.f32 %v3341, %v3511
    %v3598 = vsub.f32 %v3342, %v3514
    %v3599 = vsub.f32 %v3343, %v3517
    %v3600 = vsub.f32 %v3344, %v3520
    %v3601 = vsub.f32 %v3345, %v3523
    %v3602 = vsub.f32 %v3346, %v3526
    %v3603 = vsub.f32 %v3347, %v3529
    %v3604 = vsub.f32 %v3348, %v3532
    %v3605 = vsub.f32 %v3349, %v3535
    %v3606 = vsub.f32 %v3350, %v3538
    %v3607 = vsub.f32 %v3351, %v3541
    %v3608 = vsub.f32 %v3352, %v3544
    %v3609 = vmul.f32 %v3545, 1.442695
    %v3610 = vpow.pop %v3609
    %v3611 = vmul.f32 %v3546, 1.442695
    %v3612 = vpow.pop %v3611
    %v3613 = vmul.f32 %v3547, 1.442695
    %v3614 = vpow.pop %v3613
    %v3615 = vmul.f32 %v3548, 1.442695
    %v3616 = vpow.pop %v3615
    %v3617 = vmul.f32 %v3549, 1.442695
    %v3618 = vpow.pop %v3617
    %v3619 = vmul.f32 %v3550, 1.442695
    %v3620 = vpow.pop %v3619
    %v3621 = vmul.f32 %v3551, 1.442695
    %v3622 = vpow.pop %v3621
    %v3623 = vmul.f32 %v3552, 1.442695
    %v3624 = vpow.pop %v3623
    %v3625 = vmul.f32 %v3553, 1.442695
    %v3626 = vpow.pop %v3625
    %v3627 = vmul.f32 %v3554, 1.442695
    %v3628 = vpow.pop %v3627
    %v3629 = vmul.f32 %v3555, 1.442695
    %v3630 = vpow.pop %v3629
    %v3631 = vmul.f32 %v3556, 1.442695
    %v3632 = vpow.pop %v3631
    %v3633 = vmul.f32 %v3557, 1.442695
    %v3634 = vpow.pop %v3633
    %v3635 = vmul.f32 %v3558, 1.442695
    %v3636 = vpow.pop %v3635
    %v3637 = vmul.f32 %v3559, 1.442695
    %v3638 = vpow.pop %v3637
    %v3639 = vmul.f32 %v3560, 1.442695
    %v3640 = vpow.pop %v3639
    %v3641 = vmul.f32 %v3561, 1.442695
    %v3642 = vpow.pop %v3641
    %v3643 = vmul.f32 %v3562, 1.442695
    %v3644 = vpow.pop %v3643
    %v3645 = vmul.f32 %v3563, 1.442695
    %v3646 = vpow.pop %v3645
    %v3647 = vmul.f32 %v3564, 1.442695
    %v3648 = vpow.pop %v3647
    %v3649 = vmul.f32 %v3565, 1.442695
    %v3650 = vpow.pop %v3649
    %v3651 = vmul.f32 %v3566, 1.442695
    %v3652 = vpow.pop %v3651
    %v3653 = vmul.f32 %v3567, 1.442695
    %v3654 = vpow.pop %v3653
    %v3655 = vmul.f32 %v3568, 1.442695
    %v3656 = vpow.pop %v3655
    %v3657 = vmul.f32 %v3569, 1.442695
    %v3658 = vpow.pop %v3657
    %v3659 = vmul.f32 %v3570, 1.442695
    %v3660 = vpow.pop %v3659
    %v3661 = vmul.f32 %v3571, 1.442695
    %v3662 = vpow.pop %v3661
    %v3663 = vmul.f32 %v3572, 1.442695
    %v3664 = vpow.pop %v3663
    %v3665 = vmul.f32 %v3573, 1.442695
    %v3666 = vpow.pop %v3665
    %v3667 = vmul.f32 %v3574, 1.442695
    %v3668 = vpow.pop %v3667
    %v3669 = vmul.f32 %v3575, 1.442695
    %v3670 = vpow.pop %v3669
    %v3671 = vmul.f32 %v3576, 1.442695
    %v3672 = vpow.pop %v3671
    %v3673 = vmul.f32 %v3577, 1.442695
    %v3674 = vpow.pop %v3673
    %v3675 = vmul.f32 %v3578, 1.442695
    %v3676 = vpow.pop %v3675
    %v3677 = vmul.f32 %v3579, 1.442695
    %v3678 = vpow.pop %v3677
    %v3679 = vmul.f32 %v3580, 1.442695
    %v3680 = vpow.pop %v3679
    %v3681 = vmul.f32 %v3581, 1.442695
    %v3682 = vpow.pop %v3681
    %v3683 = vmul.f32 %v3582, 1.442695
    %v3684 = vpow.pop %v3683
    %v3685 = vmul.f32 %v3583, 1.442695
    %v3686 = vpow.pop %v3685
    %v3687 = vmul.f32 %v3584, 1.442695
    %v3688 = vpow.pop %v3687
    %v3689 = vmul.f32 %v3585, 1.442695
    %v3690 = vpow.pop %v3689
    %v3691 = vmul.f32 %v3586, 1.442695
    %v3692 = vpow.pop %v3691
    %v3693 = vmul.f32 %v3587, 1.442695
    %v3694 = vpow.pop %v3693
    %v3695 = vmul.f32 %v3588, 1.442695
    %v3696 = vpow.pop %v3695
    %v3697 = vmul.f32 %v3589, 1.442695
    %v3698 = vpow.pop %v3697
    %v3699 = vmul.f32 %v3590, 1.442695
    %v3700 = vpow.pop %v3699
    %v3701 = vmul.f32 %v3591, 1.442695
    %v3702 = vpow.pop %v3701
    %v3703 = vmul.f32 %v3592, 1.442695
    %v3704 = vpow.pop %v3703
    %v3705 = vmul.f32 %v3593, 1.442695
    %v3706 = vpow.pop %v3705
    %v3707 = vmul.f32 %v3594, 1.442695
    %v3708 = vpow.pop %v3707
    %v3709 = vmul.f32 %v3595, 1.442695
    %v3710 = vpow.pop %v3709
    %v3711 = vmul.f32 %v3596, 1.442695
    %v3712 = vpow.pop %v3711
    %v3713 = vmul.f32 %v3597, 1.442695
    %v3714 = vpow.pop %v3713
    %v3715 = vmul.f32 %v3598, 1.442695
    %v3716 = vpow.pop %v3715
    %v3717 = vmul.f32 %v3599, 1.442695
    %v3718 = vpow.pop %v3717
    %v3719 = vmul.f32 %v3600, 1.442695
    %v3720 = vpow.pop %v3719
    %v3721 = vmul.f32 %v3601, 1.442695
    %v3722 = vpow.pop %v3721
    %v3723 = vmul.f32 %v3602, 1.442695
    %v3724 = vpow.pop %v3723
    %v3725 = vmul.f32 %v3603, 1.442695
    %v3726 = vpow.pop %v3725
    %v3727 = vmul.f32 %v3604, 1.442695
    %v3728 = vpow.pop %v3727
    %v3729 = vmul.f32 %v3605, 1.442695
    %v3730 = vpow.pop %v3729
    %v3731 = vmul.f32 %v3606, 1.442695
    %v3732 = vpow.pop %v3731
    %v3733 = vmul.f32 %v3607, 1.442695
    %v3734 = vpow.pop %v3733
    %v3735 = vmul.f32 %v3608, 1.442695
    %v3736 = vpow.pop %v3735
    %v3737 = vsel %vm2541, %v3610, 0.0
    %3738 = vadd.xlane.f32.xlu0 %v3737
    %v3739 = vpop.xlane.xlu0 %3738
    %v3740 = vsel %vm2541, %v3612, 0.0
    %3741 = vadd.xlane.f32.xlu0 %v3740
    %v3742 = vpop.xlane.xlu0 %3741
    %v3743 = vsel %vm2541, %v3614, 0.0
    %3744 = vadd.xlane.f32.xlu0 %v3743
    %v3745 = vpop.xlane.xlu0 %3744
    %v3746 = vsel %vm2541, %v3616, 0.0
    %3747 = vadd.xlane.f32.xlu0 %v3746
    %v3748 = vpop.xlane.xlu0 %3747
    %v3749 = vsel %vm2541, %v3618, 0.0
    %3750 = vadd.xlane.f32.xlu0 %v3749
    %v3751 = vpop.xlane.xlu0 %3750
    %v3752 = vsel %vm2541, %v3620, 0.0
    %3753 = vadd.xlane.f32.xlu0 %v3752
    %v3754 = vpop.xlane.xlu0 %3753
    %v3755 = vsel %vm2541, %v3622, 0.0
    %3756 = vadd.xlane.f32.xlu0 %v3755
    %v3757 = vpop.xlane.xlu0 %3756
    %v3758 = vsel %vm2541, %v3624, 0.0
    %3759 = vadd.xlane.f32.xlu0 %v3758
    %v3760 = vpop.xlane.xlu0 %3759
    %v3761 = vsel %vm2541, %v3626, 0.0
    %3762 = vadd.xlane.f32.xlu0 %v3761
    %v3763 = vpop.xlane.xlu0 %3762
    %v3764 = vsel %vm2541, %v3628, 0.0
    %3765 = vadd.xlane.f32.xlu0 %v3764
    %v3766 = vpop.xlane.xlu0 %3765
    %v3767 = vsel %vm2541, %v3630, 0.0
    %3768 = vadd.xlane.f32.xlu0 %v3767
    %v3769 = vpop.xlane.xlu0 %3768
    %v3770 = vsel %vm2541, %v3632, 0.0
    %3771 = vadd.xlane.f32.xlu0 %v3770
    %v3772 = vpop.xlane.xlu0 %3771
    %v3773 = vsel %vm2541, %v3634, 0.0
    %3774 = vadd.xlane.f32.xlu0 %v3773
    %v3775 = vpop.xlane.xlu0 %3774
    %v3776 = vsel %vm2541, %v3636, 0.0
    %3777 = vadd.xlane.f32.xlu0 %v3776
    %v3778 = vpop.xlane.xlu0 %3777
    %v3779 = vsel %vm2541, %v3638, 0.0
    %3780 = vadd.xlane.f32.xlu0 %v3779
    %v3781 = vpop.xlane.xlu0 %3780
    %v3782 = vsel %vm2541, %v3640, 0.0
    %3783 = vadd.xlane.f32.xlu0 %v3782
    %v3784 = vpop.xlane.xlu0 %3783
    %v3785 = vsel %vm2541, %v3642, 0.0
    %3786 = vadd.xlane.f32.xlu0 %v3785
    %v3787 = vpop.xlane.xlu0 %3786
    %v3788 = vsel %vm2541, %v3644, 0.0
    %3789 = vadd.xlane.f32.xlu0 %v3788
    %v3790 = vpop.xlane.xlu0 %3789
    %v3791 = vsel %vm2541, %v3646, 0.0
    %3792 = vadd.xlane.f32.xlu0 %v3791
    %v3793 = vpop.xlane.xlu0 %3792
    %v3794 = vsel %vm2541, %v3648, 0.0
    %3795 = vadd.xlane.f32.xlu0 %v3794
    %v3796 = vpop.xlane.xlu0 %3795
    %v3797 = vsel %vm2541, %v3650, 0.0
    %3798 = vadd.xlane.f32.xlu0 %v3797
    %v3799 = vpop.xlane.xlu0 %3798
    %v3800 = vsel %vm2541, %v3652, 0.0
    %3801 = vadd.xlane.f32.xlu0 %v3800
    %v3802 = vpop.xlane.xlu0 %3801
    %v3803 = vsel %vm2541, %v3654, 0.0
    %3804 = vadd.xlane.f32.xlu0 %v3803
    %v3805 = vpop.xlane.xlu0 %3804
    %v3806 = vsel %vm2541, %v3656, 0.0
    %3807 = vadd.xlane.f32.xlu0 %v3806
    %v3808 = vpop.xlane.xlu0 %3807
    %v3809 = vsel %vm2541, %v3658, 0.0
    %3810 = vadd.xlane.f32.xlu0 %v3809
    %v3811 = vpop.xlane.xlu0 %3810
    %v3812 = vsel %vm2541, %v3660, 0.0
    %3813 = vadd.xlane.f32.xlu0 %v3812
    %v3814 = vpop.xlane.xlu0 %3813
    %v3815 = vsel %vm2541, %v3662, 0.0
    %3816 = vadd.xlane.f32.xlu0 %v3815
    %v3817 = vpop.xlane.xlu0 %3816
    %v3818 = vsel %vm2541, %v3664, 0.0
    %3819 = vadd.xlane.f32.xlu0 %v3818
    %v3820 = vpop.xlane.xlu0 %3819
    %v3821 = vsel %vm2541, %v3666, 0.0
    %3822 = vadd.xlane.f32.xlu0 %v3821
    %v3823 = vpop.xlane.xlu0 %3822
    %v3824 = vsel %vm2541, %v3668, 0.0
    %3825 = vadd.xlane.f32.xlu0 %v3824
    %v3826 = vpop.xlane.xlu0 %3825
    %v3827 = vsel %vm2541, %v3670, 0.0
    %3828 = vadd.xlane.f32.xlu0 %v3827
    %v3829 = vpop.xlane.xlu0 %3828
    %v3830 = vsel %vm2541, %v3672, 0.0
    %3831 = vadd.xlane.f32.xlu0 %v3830
    %v3832 = vpop.xlane.xlu0 %3831
    %v3833 = vsel %vm2541, %v3674, 0.0
    %3834 = vadd.xlane.f32.xlu0 %v3833
    %v3835 = vpop.xlane.xlu0 %3834
    %v3836 = vsel %vm2541, %v3676, 0.0
    %3837 = vadd.xlane.f32.xlu0 %v3836
    %v3838 = vpop.xlane.xlu0 %3837
    %v3839 = vsel %vm2541, %v3678, 0.0
    %3840 = vadd.xlane.f32.xlu0 %v3839
    %v3841 = vpop.xlane.xlu0 %3840
    %v3842 = vsel %vm2541, %v3680, 0.0
    %3843 = vadd.xlane.f32.xlu0 %v3842
    %v3844 = vpop.xlane.xlu0 %3843
    %v3845 = vsel %vm2541, %v3682, 0.0
    %3846 = vadd.xlane.f32.xlu0 %v3845
    %v3847 = vpop.xlane.xlu0 %3846
    %v3848 = vsel %vm2541, %v3684, 0.0
    %3849 = vadd.xlane.f32.xlu0 %v3848
    %v3850 = vpop.xlane.xlu0 %3849
    %v3851 = vsel %vm2541, %v3686, 0.0
    %3852 = vadd.xlane.f32.xlu0 %v3851
    %v3853 = vpop.xlane.xlu0 %3852
    %v3854 = vsel %vm2541, %v3688, 0.0
    %3855 = vadd.xlane.f32.xlu0 %v3854
    %v3856 = vpop.xlane.xlu0 %3855
    %v3857 = vsel %vm2541, %v3690, 0.0
    %3858 = vadd.xlane.f32.xlu0 %v3857
    %v3859 = vpop.xlane.xlu0 %3858
    %v3860 = vsel %vm2541, %v3692, 0.0
    %3861 = vadd.xlane.f32.xlu0 %v3860
    %v3862 = vpop.xlane.xlu0 %3861
    %v3863 = vsel %vm2541, %v3694, 0.0
    %3864 = vadd.xlane.f32.xlu0 %v3863
    %v3865 = vpop.xlane.xlu0 %3864
    %v3866 = vsel %vm2541, %v3696, 0.0
    %3867 = vadd.xlane.f32.xlu0 %v3866
    %v3868 = vpop.xlane.xlu0 %3867
    %v3869 = vsel %vm2541, %v3698, 0.0
    %3870 = vadd.xlane.f32.xlu0 %v3869
    %v3871 = vpop.xlane.xlu0 %3870
    %v3872 = vsel %vm2541, %v3700, 0.0
    %3873 = vadd.xlane.f32.xlu0 %v3872
    %v3874 = vpop.xlane.xlu0 %3873
    %v3875 = vsel %vm2541, %v3702, 0.0
    %3876 = vadd.xlane.f32.xlu0 %v3875
    %v3877 = vpop.xlane.xlu0 %3876
    %v3878 = vsel %vm2541, %v3704, 0.0
    %3879 = vadd.xlane.f32.xlu0 %v3878
    %v3880 = vpop.xlane.xlu0 %3879
    %v3881 = vsel %vm2541, %v3706, 0.0
    %3882 = vadd.xlane.f32.xlu0 %v3881
    %v3883 = vpop.xlane.xlu0 %3882
    %v3884 = vsel %vm2541, %v3708, 0.0
    %3885 = vadd.xlane.f32.xlu0 %v3884
    %v3886 = vpop.xlane.xlu0 %3885
    %v3887 = vsel %vm2541, %v3710, 0.0
    %3888 = vadd.xlane.f32.xlu0 %v3887
    %v3889 = vpop.xlane.xlu0 %3888
    %v3890 = vsel %vm2541, %v3712, 0.0
    %3891 = vadd.xlane.f32.xlu0 %v3890
    %v3892 = vpop.xlane.xlu0 %3891
    %v3893 = vsel %vm2541, %v3714, 0.0
    %3894 = vadd.xlane.f32.xlu0 %v3893
    %v3895 = vpop.xlane.xlu0 %3894
    %v3896 = vsel %vm2541, %v3716, 0.0
    %3897 = vadd.xlane.f32.xlu0 %v3896
    %v3898 = vpop.xlane.xlu0 %3897
    %v3899 = vsel %vm2541, %v3718, 0.0
    %3900 = vadd.xlane.f32.xlu0 %v3899
    %v3901 = vpop.xlane.xlu0 %3900
    %v3902 = vsel %vm2541, %v3720, 0.0
    %3903 = vadd.xlane.f32.xlu0 %v3902
    %v3904 = vpop.xlane.xlu0 %3903
    %v3905 = vsel %vm2541, %v3722, 0.0
    %3906 = vadd.xlane.f32.xlu0 %v3905
    %v3907 = vpop.xlane.xlu0 %3906
    %v3908 = vsel %vm2541, %v3724, 0.0
    %3909 = vadd.xlane.f32.xlu0 %v3908
    %v3910 = vpop.xlane.xlu0 %3909
    %v3911 = vsel %vm2541, %v3726, 0.0
    %3912 = vadd.xlane.f32.xlu0 %v3911
    %v3913 = vpop.xlane.xlu0 %3912
    %v3914 = vsel %vm2541, %v3728, 0.0
    %3915 = vadd.xlane.f32.xlu0 %v3914
    %v3916 = vpop.xlane.xlu0 %3915
    %v3917 = vsel %vm2541, %v3730, 0.0
    %3918 = vadd.xlane.f32.xlu0 %v3917
    %v3919 = vpop.xlane.xlu0 %3918
    %v3920 = vsel %vm2541, %v3732, 0.0
    %3921 = vadd.xlane.f32.xlu0 %v3920
    %v3922 = vpop.xlane.xlu0 %3921
    %v3923 = vsel %vm2541, %v3734, 0.0
    %3924 = vadd.xlane.f32.xlu0 %v3923
    %v3925 = vpop.xlane.xlu0 %3924
    %v3926 = vsel %vm2541, %v3736, 0.0
    %3927 = vadd.xlane.f32.xlu0 %v3926
    %v3928 = vpop.xlane.xlu0 %3927
    %v3929 = vrcp.pop %v3739
    %v3930 = vrcp.pop %v3742
    %v3931 = vrcp.pop %v3745
    %v3932 = vrcp.pop %v3748
    %v3933 = vrcp.pop %v3751
    %v3934 = vrcp.pop %v3754
    %v3935 = vrcp.pop %v3757
    %v3936 = vrcp.pop %v3760
    %v3937 = vrcp.pop %v3763
    %v3938 = vrcp.pop %v3766
    %v3939 = vrcp.pop %v3769
    %v3940 = vrcp.pop %v3772
    %v3941 = vrcp.pop %v3775
    %v3942 = vrcp.pop %v3778
    %v3943 = vrcp.pop %v3781
    %v3944 = vrcp.pop %v3784
    %v3945 = vrcp.pop %v3787
    %v3946 = vrcp.pop %v3790
    %v3947 = vrcp.pop %v3793
    %v3948 = vrcp.pop %v3796
    %v3949 = vrcp.pop %v3799
    %v3950 = vrcp.pop %v3802
    %v3951 = vrcp.pop %v3805
    %v3952 = vrcp.pop %v3808
    %v3953 = vrcp.pop %v3811
    %v3954 = vrcp.pop %v3814
    %v3955 = vrcp.pop %v3817
    %v3956 = vrcp.pop %v3820
    %v3957 = vrcp.pop %v3823
    %v3958 = vrcp.pop %v3826
    %v3959 = vrcp.pop %v3829
    %v3960 = vrcp.pop %v3832
    %v3961 = vrcp.pop %v3835
    %v3962 = vrcp.pop %v3838
    %v3963 = vrcp.pop %v3841
    %v3964 = vrcp.pop %v3844
    %v3965 = vrcp.pop %v3847
    %v3966 = vrcp.pop %v3850
    %v3967 = vrcp.pop %v3853
    %v3968 = vrcp.pop %v3856
    %v3969 = vrcp.pop %v3859
    %v3970 = vrcp.pop %v3862
    %v3971 = vrcp.pop %v3865
    %v3972 = vrcp.pop %v3868
    %v3973 = vrcp.pop %v3871
    %v3974 = vrcp.pop %v3874
    %v3975 = vrcp.pop %v3877
    %v3976 = vrcp.pop %v3880
    %v3977 = vrcp.pop %v3883
    %v3978 = vrcp.pop %v3886
    %v3979 = vrcp.pop %v3889
    %v3980 = vrcp.pop %v3892
    %v3981 = vrcp.pop %v3895
    %v3982 = vrcp.pop %v3898
    %v3983 = vrcp.pop %v3901
    %v3984 = vrcp.pop %v3904
    %v3985 = vrcp.pop %v3907
    %v3986 = vrcp.pop %v3910
    %v3987 = vrcp.pop %v3913
    %v3988 = vrcp.pop %v3916
    %v3989 = vrcp.pop %v3919
    %v3990 = vrcp.pop %v3922
    %v3991 = vrcp.pop %v3925
    %v3992 = vrcp.pop %v3928
    %v3993 = vmul.f32 %v3610, %v3929
    %v3994 = vmul.f32 %v3612, %v3930
    %v3995 = vmul.f32 %v3614, %v3931
    %v3996 = vmul.f32 %v3616, %v3932
    %v3997 = vmul.f32 %v3618, %v3933
    %v3998 = vmul.f32 %v3620, %v3934
    %v3999 = vmul.f32 %v3622, %v3935
    %v4000 = vmul.f32 %v3624, %v3936
    %v4001 = vmul.f32 %v3626, %v3937
    %v4002 = vmul.f32 %v3628, %v3938
    %v4003 = vmul.f32 %v3630, %v3939
    %v4004 = vmul.f32 %v3632, %v3940
    %v4005 = vmul.f32 %v3634, %v3941
    %v4006 = vmul.f32 %v3636, %v3942
    %v4007 = vmul.f32 %v3638, %v3943
    %v4008 = vmul.f32 %v3640, %v3944
    %v4009 = vmul.f32 %v3642, %v3945
    %v4010 = vmul.f32 %v3644, %v3946
    %v4011 = vmul.f32 %v3646, %v3947
    %v4012 = vmul.f32 %v3648, %v3948
    %v4013 = vmul.f32 %v3650, %v3949
    %v4014 = vmul.f32 %v3652, %v3950
    %v4015 = vmul.f32 %v3654, %v3951
    %v4016 = vmul.f32 %v3656, %v3952
    %v4017 = vmul.f32 %v3658, %v3953
    %v4018 = vmul.f32 %v3660, %v3954
    %v4019 = vmul.f32 %v3662, %v3955
    %v4020 = vmul.f32 %v3664, %v3956
    %v4021 = vmul.f32 %v3666, %v3957
    %v4022 = vmul.f32 %v3668, %v3958
    %v4023 = vmul.f32 %v3670, %v3959
    %v4024 = vmul.f32 %v3672, %v3960
    %v4025 = vmul.f32 %v3674, %v3961
    %v4026 = vmul.f32 %v3676, %v3962
    %v4027 = vmul.f32 %v3678, %v3963
    %v4028 = vmul.f32 %v3680, %v3964
    %v4029 = vmul.f32 %v3682, %v3965
    %v4030 = vmul.f32 %v3684, %v3966
    %v4031 = vmul.f32 %v3686, %v3967
    %v4032 = vmul.f32 %v3688, %v3968
    %v4033 = vmul.f32 %v3690, %v3969
    %v4034 = vmul.f32 %v3692, %v3970
    %v4035 = vmul.f32 %v3694, %v3971
    %v4036 = vmul.f32 %v3696, %v3972
    %v4037 = vmul.f32 %v3698, %v3973
    %v4038 = vmul.f32 %v3700, %v3974
    %v4039 = vmul.f32 %v3702, %v3975
    %v4040 = vmul.f32 %v3704, %v3976
    %v4041 = vmul.f32 %v3706, %v3977
    %v4042 = vmul.f32 %v3708, %v3978
    %v4043 = vmul.f32 %v3710, %v3979
    %v4044 = vmul.f32 %v3712, %v3980
    %v4045 = vmul.f32 %v3714, %v3981
    %v4046 = vmul.f32 %v3716, %v3982
    %v4047 = vmul.f32 %v3718, %v3983
    %v4048 = vmul.f32 %v3720, %v3984
    %v4049 = vmul.f32 %v3722, %v3985
    %v4050 = vmul.f32 %v3724, %v3986
    %v4051 = vmul.f32 %v3726, %v3987
    %v4052 = vmul.f32 %v3728, %v3988
    %v4053 = vmul.f32 %v3730, %v3989
    %v4054 = vmul.f32 %v3732, %v3990
    %v4055 = vmul.f32 %v3734, %v3991
    %v4056 = vmul.f32 %v3736, %v3992
    %v4057 = vpack.c.bf16 %v3994, %v3993
    %v4058 = vpack.c.bf16 %v3996, %v3995
    %v4059 = vpack.c.bf16 %v3998, %v3997
    %v4060 = vpack.c.bf16 %v4000, %v3999
    %v4061 = vpack.c.bf16 %v4002, %v4001
    %v4062 = vpack.c.bf16 %v4004, %v4003
    %v4063 = vpack.c.bf16 %v4006, %v4005
    %v4064 = vpack.c.bf16 %v4008, %v4007
    %v4065 = vpack.c.bf16 %v4010, %v4009
    %v4066 = vpack.c.bf16 %v4012, %v4011
    %v4067 = vpack.c.bf16 %v4014, %v4013
    %v4068 = vpack.c.bf16 %v4016, %v4015
    %v4069 = vpack.c.bf16 %v4018, %v4017
    %v4070 = vpack.c.bf16 %v4020, %v4019
    %v4071 = vpack.c.bf16 %v4022, %v4021
    %v4072 = vpack.c.bf16 %v4024, %v4023
    %v4073 = vpack.c.bf16 %v4026, %v4025
    %v4074 = vpack.c.bf16 %v4028, %v4027
    %v4075 = vpack.c.bf16 %v4030, %v4029
    %v4076 = vpack.c.bf16 %v4032, %v4031
    %v4077 = vpack.c.bf16 %v4034, %v4033
    %v4078 = vpack.c.bf16 %v4036, %v4035
    %v4079 = vpack.c.bf16 %v4038, %v4037
    %v4080 = vpack.c.bf16 %v4040, %v4039
    %v4081 = vpack.c.bf16 %v4042, %v4041
    %v4082 = vpack.c.bf16 %v4044, %v4043
    %v4083 = vpack.c.bf16 %v4046, %v4045
    %v4084 = vpack.c.bf16 %v4048, %v4047
    %v4085 = vpack.c.bf16 %v4050, %v4049
    %v4086 = vpack.c.bf16 %v4052, %v4051
    %v4087 = vpack.c.bf16 %v4054, %v4053
    %v4088 = vpack.c.bf16 %v4056, %v4055
    %v4090 = vsel %vm2541, %v4057, 0
    %v4093 = vsel %vm2541, %v4058, 0
    %v4096 = vsel %vm2541, %v4059, 0
    %v4099 = vsel %vm2541, %v4060, 0
    %4101 = vmatprep.subr.bf16.mxu0 0
    %4102 = vmatpush1.bf16.msra.mxu0 %v2447
    %4103 = vmatprep.subr.bf16.mxu0 0
    %4104 = vmatpush1.bf16.msra.mxu0 %v2450
    %4105 = vmatprep.subr.bf16.mxu0 0
    %4106 = vmatpush1.bf16.msra.mxu0 %v2453
    %4107 = vmatprep.subr.bf16.mxu0 0
    %4108 = vmatpush1.bf16.msra.mxu0 %v2456
    %4109 = vmatprep.subr.bf16.mxu0 0
    %4110 = vmatpush1.bf16.msra.mxu0 0
    %4111 = vmatprep.subr.bf16.mxu0 0
    %4112 = vmatpush1.bf16.msra.mxu0 0
    %4113 = vmatprep.subr.bf16.mxu0 0
    %4114 = vmatpush1.bf16.msra.mxu0 0
    %4115 = vmatprep.subr.bf16.mxu0 0
    %4116 = vmatpush1.bf16.msra.mxu0 0
    %4117 = vmatprep.subr.bf16.mxu0 0
    %4118 = vmatpush1.bf16.msra.mxu0 0
    %4119 = vmatprep.subr.bf16.mxu0 0
    %4120 = vmatpush1.bf16.msra.mxu0 0
    %4121 = vmatprep.subr.bf16.mxu0 0
    %4122 = vmatpush1.bf16.msra.mxu0 0
    %4123 = vmatprep.subr.bf16.mxu0 0
    %4124 = vmatpush1.bf16.msra.mxu0 0
    %4125 = vmatprep.subr.bf16.mxu0 0
    %4126 = vmatpush1.bf16.msra.mxu0 0
    %4127 = vmatprep.subr.bf16.mxu0 0
    %4128 = vmatpush1.bf16.msra.mxu0 0
    %4129 = vmatprep.subr.bf16.mxu0 0
    %4130 = vmatpush1.bf16.msra.mxu0 0
    %4131 = vmatprep.subr.bf16.mxu0 0
    %4132 = vmatpush1.bf16.msra.mxu0 0
    %4133 = vmatprep.mubr.bf16.mxu0 0
    %4134 = vmatmul.mubr.bf16.gmra.mrb[0].mxu0 %v4090
    %v4135 = vpop.f32.mrb[0].mxu0
    %v4136 = vadd.f32 0.0, %v4135
    %v4137 = vpop.f32.mrb[0].mxu0
    %v4138 = vpop.f32.mrb[0].mxu0
    %v4139 = vadd.f32 0.0, %v4138
    %v4140 = vpop.f32.mrb[0].mxu0
    %4141 = vmatprep.mubr.bf16.mxu0 0
    %4142 = vmatmul.mubr.bf16.gmra.mrb[0].mxu0 %v4093
    %v4143 = vpop.f32.mrb[0].mxu0
    %v4144 = vadd.f32 0.0, %v4143
    %v4145 = vpop.f32.mrb[0].mxu0
    %v4146 = vpop.f32.mrb[0].mxu0
    %v4147 = vadd.f32 0.0, %v4146
    %v4148 = vpop.f32.mrb[0].mxu0
    %4149 = vmatprep.mubr.bf16.mxu0 0
    %4150 = vmatmul.mubr.bf16.gmra.mrb[0].mxu0 %v4096
    %v4151 = vpop.f32.mrb[0].mxu0
    %v4152 = vadd.f32 0.0, %v4151
    %v4153 = vpop.f32.mrb[0].mxu0
    %v4154 = vpop.f32.mrb[0].mxu0
    %v4155 = vadd.f32 0.0, %v4154
    %v4156 = vpop.f32.mrb[0].mxu0
    %4157 = vmatprep.mubr.bf16.mxu0 0
    %4158 = vmatmul.mubr.bf16.gmra.mrb[0].mxu0 %v4099
    %v4159 = vpop.f32.mrb[0].mxu0
    %v4160 = vadd.f32 0.0, %v4159
    %v4161 = vpop.f32.mrb[0].mxu0
    %v4162 = vpop.f32.mrb[0].mxu0
    %v4163 = vadd.f32 0.0, %v4162
    %v4164 = vpop.f32.mrb[0].mxu0
    %4165 = vdwg.mxu0
    %v4167 = vsel %vm2541, %v4061, 0
    %v4170 = vsel %vm2541, %v4062, 0
    %v4173 = vsel %vm2541, %v4063, 0
    %v4176 = vsel %vm2541, %v4064, 0
    %4178 = vmatprep.subr.bf16.mxu0 0
    %4179 = vmatpush1.bf16.msra.mxu0 %v2459
    %4180 = vmatprep.subr.bf16.mxu0 0
    %4181 = vmatpush1.bf16.msra.mxu0 %v2462
    %4182 = vmatprep.subr.bf16.mxu0 0
    %4183 = vmatpush1.bf16.msra.mxu0 %v2465
    %4184 = vmatprep.subr.bf16.mxu0 0
    %4185 = vmatpush1.bf16.msra.mxu0 %v2468
    %4186 = vmatprep.subr.bf16.mxu0 0
    %4187 = vmatpush1.bf16.msra.mxu0 0
    %4188 = vmatprep.subr.bf16.mxu0 0
    %4189 = vmatpush1.bf16.msra.mxu0 0
    %4190 = vmatprep.subr.bf16.mxu0 0
    %4191 = vmatpush1.bf16.msra.mxu0 0
    %4192 = vmatprep.subr.bf16.mxu0 0
    %4193 = vmatpush1.bf16.msra.mxu0 0
    %4194 = vmatprep.subr.bf16.mxu0 0
    %4195 = vmatpush1.bf16.msra.mxu0 0
    %4196 = vmatprep.subr.bf16.mxu0 0
    %4197 = vmatpush1.bf16.msra.mxu0 0
    %4198 = vmatprep.subr.bf16.mxu0 0
    %4199 = vmatpush1.bf16.msra.mxu0 0
    %4200 = vmatprep.subr.bf16.mxu0 0
    %4201 = vmatpush1.bf16.msra.mxu0 0
    %4202 = vmatprep.subr.bf16.mxu0 0
    %4203 = vmatpush1.bf16.msra.mxu0 0
    %4204 = vmatprep.subr.bf16.mxu0 0
    %4205 = vmatpush1.bf16.msra.mxu0 0
    %4206 = vmatprep.subr.bf16.mxu0 0
    %4207 = vmatpush1.bf16.msra.mxu0 0
    %4208 = vmatprep.subr.bf16.mxu0 0
    %4209 = vmatpush1.bf16.msra.mxu0 0
    %4210 = vmatprep.mubr.bf16.mxu0 0
    %4211 = vmatmul.mubr.bf16.gmra.mrb[0].mxu0 %v4167
    %v4212 = vpop.f32.mrb[0].mxu0
    %v4213 = vadd.f32 0.0, %v4212
    %v4214 = vpop.f32.mrb[0].mxu0
    %v4215 = vpop.f32.mrb[0].mxu0
    %v4216 = vadd.f32 0.0, %v4215
    %v4217 = vpop.f32.mrb[0].mxu0
    %4218 = vmatprep.mubr.bf16.mxu0 0
    %4219 = vmatmul.mubr.bf16.gmra.mrb[0].mxu0 %v4170
    %v4220 = vpop.f32.mrb[0].mxu0
    %v4221 = vadd.f32 0.0, %v4220
    %v4222 = vpop.f32.mrb[0].mxu0
    %v4223 = vpop.f32.mrb[0].mxu0
    %v4224 = vadd.f32 0.0, %v4223
    %v4225 = vpop.f32.mrb[0].mxu0
    %4226 = vmatprep.mubr.bf16.mxu0 0
    %4227 = vmatmul.mubr.bf16.gmra.mrb[0].mxu0 %v4173
    %v4228 = vpop.f32.mrb[0].mxu0
    %v4229 = vadd.f32 0.0, %v4228
    %v4230 = vpop.f32.mrb[0].mxu0
    %v4231 = vpop.f32.mrb[0].mxu0
    %v4232 = vadd.f32 0.0, %v4231
    %v4233 = vpop.f32.mrb[0].mxu0
    %4234 = vmatprep.mubr.bf16.mxu0 0
    %4235 = vmatmul.mubr.bf16.gmra.mrb[0].mxu0 %v4176
    %v4236 = vpop.f32.mrb[0].mxu0
    %v4237 = vadd.f32 0.0, %v4236
    %v4238 = vpop.f32.mrb[0].mxu0
    %v4239 = vpop.f32.mrb[0].mxu0
    %v4240 = vadd.f32 0.0, %v4239
    %v4241 = vpop.f32.mrb[0].mxu0
    %4242 = vdwg.mxu0
    %v4244 = vsel %vm2541, %v4065, 0
    %v4247 = vsel %vm2541, %v4066, 0
    %v4250 = vsel %vm2541, %v4067, 0
    %v4253 = vsel %vm2541, %v4068, 0
    %4255 = vmatprep.subr.bf16.mxu0 0
    %4256 = vmatpush1.bf16.msra.mxu0 %v2471
    %4257 = vmatprep.subr.bf16.mxu0 0
    %4258 = vmatpush1.bf16.msra.mxu0 %v2474
    %4259 = vmatprep.subr.bf16.mxu0 0
    %4260 = vmatpush1.bf16.msra.mxu0 %v2477
    %4261 = vmatprep.subr.bf16.mxu0 0
    %4262 = vmatpush1.bf16.msra.mxu0 %v2480
    %4263 = vmatprep.subr.bf16.mxu0 0
    %4264 = vmatpush1.bf16.msra.mxu0 0
    %4265 = vmatprep.subr.bf16.mxu0 0
    %4266 = vmatpush1.bf16.msra.mxu0 0
    %4267 = vmatprep.subr.bf16.mxu0 0
    %4268 = vmatpush1.bf16.msra.mxu0 0
    %4269 = vmatprep.subr.bf16.mxu0 0
    %4270 = vmatpush1.bf16.msra.mxu0 0
    %4271 = vmatprep.subr.bf16.mxu0 0
    %4272 = vmatpush1.bf16.msra.mxu0 0
    %4273 = vmatprep.subr.bf16.mxu0 0
    %4274 = vmatpush1.bf16.msra.mxu0 0
    %4275 = vmatprep.subr.bf16.mxu0 0
    %4276 = vmatpush1.bf16.msra.mxu0 0
    %4277 = vmatprep.subr.bf16.mxu0 0
    %4278 = vmatpush1.bf16.msra.mxu0 0
    %4279 = vmatprep.subr.bf16.mxu0 0
    %4280 = vmatpush1.bf16.msra.mxu0 0
    %4281 = vmatprep.subr.bf16.mxu0 0
    %4282 = vmatpush1.bf16.msra.mxu0 0
    %4283 = vmatprep.subr.bf16.mxu0 0
    %4284 = vmatpush1.bf16.msra.mxu0 0
    %4285 = vmatprep.subr.bf16.mxu0 0
    %4286 = vmatpush1.bf16.msra.mxu0 0
    %4287 = vmatprep.mubr.bf16.mxu0 0
    %4288 = vmatmul.mubr.bf16.gmra.mrb[0].mxu0 %v4244
    %v4289 = vpop.f32.mrb[0].mxu0
    %v4290 = vadd.f32 0.0, %v4289
    %v4291 = vpop.f32.mrb[0].mxu0
    %v4292 = vpop.f32.mrb[0].mxu0
    %v4293 = vadd.f32 0.0, %v4292
    %v4294 = vpop.f32.mrb[0].mxu0
    %4295 = vmatprep.mubr.bf16.mxu0 0
    %4296 = vmatmul.mubr.bf16.gmra.mrb[0].mxu0 %v4247
    %v4297 = vpop.f32.mrb[0].mxu0
    %v4298 = vadd.f32 0.0, %v4297
    %v4299 = vpop.f32.mrb[0].mxu0
    %v4300 = vpop.f32.mrb[0].mxu0
    %v4301 = vadd.f32 0.0, %v4300
    %v4302 = vpop.f32.mrb[0].mxu0
    %4303 = vmatprep.mubr.bf16.mxu0 0
    %4304 = vmatmul.mubr.bf16.gmra.mrb[0].mxu0 %v4250
    %v4305 = vpop.f32.mrb[0].mxu0
    %v4306 = vadd.f32 0.0, %v4305
    %v4307 = vpop.f32.mrb[0].mxu0
    %v4308 = vpop.f32.mrb[0].mxu0
    %v4309 = vadd.f32 0.0, %v4308
    %v4310 = vpop.f32.mrb[0].mxu0
    %4311 = vmatprep.mubr.bf16.mxu0 0
    %4312 = vmatmul.mubr.bf16.gmra.mrb[0].mxu0 %v4253
    %v4313 = vpop.f32.mrb[0].mxu0
    %v4314 = vadd.f32 0.0, %v4313
    %v4315 = vpop.f32.mrb[0].mxu0
    %v4316 = vpop.f32.mrb[0].mxu0
    %v4317 = vadd.f32 0.0, %v4316
    %v4318 = vpop.f32.mrb[0].mxu0
    %4319 = vdwg.mxu0
    %v4321 = vsel %vm2541, %v4069, 0
    %v4324 = vsel %vm2541, %v4070, 0
    %v4327 = vsel %vm2541, %v4071, 0
    %v4330 = vsel %vm2541, %v4072, 0
    %4332 = vmatprep.subr.bf16.mxu0 0
    %4333 = vmatpush1.bf16.msra.mxu0 %v2483
    %4334 = vmatprep.subr.bf16.mxu0 0
    %4335 = vmatpush1.bf16.msra.mxu0 %v2486
    %4336 = vmatprep.subr.bf16.mxu0 0
    %4337 = vmatpush1.bf16.msra.mxu0 %v2489
    %4338 = vmatprep.subr.bf16.mxu0 0
    %4339 = vmatpush1.bf16.msra.mxu0 %v2492
    %4340 = vmatprep.subr.bf16.mxu0 0
    %4341 = vmatpush1.bf16.msra.mxu0 0
    %4342 = vmatprep.subr.bf16.mxu0 0
    %4343 = vmatpush1.bf16.msra.mxu0 0
    %4344 = vmatprep.subr.bf16.mxu0 0
    %4345 = vmatpush1.bf16.msra.mxu0 0
    %4346 = vmatprep.subr.bf16.mxu0 0
    %4347 = vmatpush1.bf16.msra.mxu0 0
    %4348 = vmatprep.subr.bf16.mxu0 0
    %4349 = vmatpush1.bf16.msra.mxu0 0
    %4350 = vmatprep.subr.bf16.mxu0 0
    %4351 = vmatpush1.bf16.msra.mxu0 0
    %4352 = vmatprep.subr.bf16.mxu0 0
    %4353 = vmatpush1.bf16.msra.mxu0 0
    %4354 = vmatprep.subr.bf16.mxu0 0
    %4355 = vmatpush1.bf16.msra.mxu0 0
    %4356 = vmatprep.subr.bf16.mxu0 0
    %4357 = vmatpush1.bf16.msra.mxu0 0
    %4358 = vmatprep.subr.bf16.mxu0 0
    %4359 = vmatpush1.bf16.msra.mxu0 0
    %4360 = vmatprep.subr.bf16.mxu0 0
    %4361 = vmatpush1.bf16.msra.mxu0 0
    %4362 = vmatprep.subr.bf16.mxu0 0
    %4363 = vmatpush1.bf16.msra.mxu0 0
    %4364 = vmatprep.mubr.bf16.mxu0 0
    %4365 = vmatmul.mubr.bf16.gmra.mrb[0].mxu0 %v4321
    %v4366 = vpop.f32.mrb[0].mxu0
    %v4367 = vadd.f32 0.0, %v4366
    %v4368 = vpop.f32.mrb[0].mxu0
    %v4369 = vpop.f32.mrb[0].mxu0
    %v4370 = vadd.f32 0.0, %v4369
    %v4371 = vpop.f32.mrb[0].mxu0
    %4372 = vmatprep.mubr.bf16.mxu0 0
    %4373 = vmatmul.mubr.bf16.gmra.mrb[0].mxu0 %v4324
    %v4374 = vpop.f32.mrb[0].mxu0
    %v4375 = vadd.f32 0.0, %v4374
    %v4376 = vpop.f32.mrb[0].mxu0
    %v4377 = vpop.f32.mrb[0].mxu0
    %v4378 = vadd.f32 0.0, %v4377
    %v4379 = vpop.f32.mrb[0].mxu0
    %4380 = vmatprep.mubr.bf16.mxu0 0
    %4381 = vmatmul.mubr.bf16.gmra.mrb[0].mxu0 %v4327
    %v4382 = vpop.f32.mrb[0].mxu0
    %v4383 = vadd.f32 0.0, %v4382
    %v4384 = vpop.f32.mrb[0].mxu0
    %v4385 = vpop.f32.mrb[0].mxu0
    %v4386 = vadd.f32 0.0, %v4385
    %v4387 = vpop.f32.mrb[0].mxu0
    %4388 = vmatprep.mubr.bf16.mxu0 0
    %4389 = vmatmul.mubr.bf16.gmra.mrb[0].mxu0 %v4330
    %v4390 = vpop.f32.mrb[0].mxu0
    %v4391 = vadd.f32 0.0, %v4390
    %v4392 = vpop.f32.mrb[0].mxu0
    %v4393 = vpop.f32.mrb[0].mxu0
    %v4394 = vadd.f32 0.0, %v4393
    %v4395 = vpop.f32.mrb[0].mxu0
    %4396 = vdwg.mxu0
    %v4398 = vsel %vm2541, %v4073, 0
    %v4401 = vsel %vm2541, %v4074, 0
    %v4404 = vsel %vm2541, %v4075, 0
    %v4407 = vsel %vm2541, %v4076, 0
    %4409 = vmatprep.subr.bf16.mxu0 0
    %4410 = vmatpush1.bf16.msra.mxu0 %v2495
    %4411 = vmatprep.subr.bf16.mxu0 0
    %4412 = vmatpush1.bf16.msra.mxu0 %v2498
    %4413 = vmatprep.subr.bf16.mxu0 0
    %4414 = vmatpush1.bf16.msra.mxu0 %v2501
    %4415 = vmatprep.subr.bf16.mxu0 0
    %4416 = vmatpush1.bf16.msra.mxu0 %v2504
    %4417 = vmatprep.subr.bf16.mxu0 0
    %4418 = vmatpush1.bf16.msra.mxu0 0
    %4419 = vmatprep.subr.bf16.mxu0 0
    %4420 = vmatpush1.bf16.msra.mxu0 0
    %4421 = vmatprep.subr.bf16.mxu0 0
    %4422 = vmatpush1.bf16.msra.mxu0 0
    %4423 = vmatprep.subr.bf16.mxu0 0
    %4424 = vmatpush1.bf16.msra.mxu0 0
    %4425 = vmatprep.subr.bf16.mxu0 0
    %4426 = vmatpush1.bf16.msra.mxu0 0
    %4427 = vmatprep.subr.bf16.mxu0 0
    %4428 = vmatpush1.bf16.msra.mxu0 0
    %4429 = vmatprep.subr.bf16.mxu0 0
    %4430 = vmatpush1.bf16.msra.mxu0 0
    %4431 = vmatprep.subr.bf16.mxu0 0
    %4432 = vmatpush1.bf16.msra.mxu0 0
    %4433 = vmatprep.subr.bf16.mxu0 0
    %4434 = vmatpush1.bf16.msra.mxu0 0
    %4435 = vmatprep.subr.bf16.mxu0 0
    %4436 = vmatpush1.bf16.msra.mxu0 0
    %4437 = vmatprep.subr.bf16.mxu0 0
    %4438 = vmatpush1.bf16.msra.mxu0 0
    %4439 = vmatprep.subr.bf16.mxu0 0
    %4440 = vmatpush1.bf16.msra.mxu0 0
    %4441 = vmatprep.mubr.bf16.mxu0 0
    %4442 = vmatmul.mubr.bf16.gmra.mrb[0].mxu0 %v4398
    %v4443 = vpop.f32.mrb[0].mxu0
    %v4444 = vadd.f32 0.0, %v4443
    %v4445 = vpop.f32.mrb[0].mxu0
    %v4446 = vpop.f32.mrb[0].mxu0
    %v4447 = vadd.f32 0.0, %v4446
    %v4448 = vpop.f32.mrb[0].mxu0
    %4449 = vmatprep.mubr.bf16.mxu0 0
    %4450 = vmatmul.mubr.bf16.gmra.mrb[0].mxu0 %v4401
    %v4451 = vpop.f32.mrb[0].mxu0
    %v4452 = vadd.f32 0.0, %v4451
    %v4453 = vpop.f32.mrb[0].mxu0
    %v4454 = vpop.f32.mrb[0].mxu0
    %v4455 = vadd.f32 0.0, %v4454
    %v4456 = vpop.f32.mrb[0].mxu0
    %4457 = vmatprep.mubr.bf16.mxu0 0
    %4458 = vmatmul.mubr.bf16.gmra.mrb[0].mxu0 %v4404
    %v4459 = vpop.f32.mrb[0].mxu0
    %v4460 = vadd.f32 0.0, %v4459
    %v4461 = vpop.f32.mrb[0].mxu0
    %v4462 = vpop.f32.mrb[0].mxu0
    %v4463 = vadd.f32 0.0, %v4462
    %v4464 = vpop.f32.mrb[0].mxu0
    %4465 = vmatprep.mubr.bf16.mxu0 0
    %4466 = vmatmul.mubr.bf16.gmra.mrb[0].mxu0 %v4407
    %v4467 = vpop.f32.mrb[0].mxu0
    %v4468 = vadd.f32 0.0, %v4467
    %v4469 = vpop.f32.mrb[0].mxu0
    %v4470 = vpop.f32.mrb[0].mxu0
    %v4471 = vadd.f32 0.0, %v4470
    %v4472 = vpop.f32.mrb[0].mxu0
    %4473 = vdwg.mxu0
    %v4475 = vsel %vm2541, %v4077, 0
    %v4478 = vsel %vm2541, %v4078, 0
    %v4481 = vsel %vm2541, %v4079, 0
    %v4484 = vsel %vm2541, %v4080, 0
    %4486 = vmatprep.subr.bf16.mxu0 0
    %4487 = vmatpush1.bf16.msra.mxu0 %v2507
    %4488 = vmatprep.subr.bf16.mxu0 0
    %4489 = vmatpush1.bf16.msra.mxu0 %v2510
    %4490 = vmatprep.subr.bf16.mxu0 0
    %4491 = vmatpush1.bf16.msra.mxu0 %v2513
    %4492 = vmatprep.subr.bf16.mxu0 0
    %4493 = vmatpush1.bf16.msra.mxu0 %v2516
    %4494 = vmatprep.subr.bf16.mxu0 0
    %4495 = vmatpush1.bf16.msra.mxu0 0
    %4496 = vmatprep.subr.bf16.mxu0 0
    %4497 = vmatpush1.bf16.msra.mxu0 0
    %4498 = vmatprep.subr.bf16.mxu0 0
    %4499 = vmatpush1.bf16.msra.mxu0 0
    %4500 = vmatprep.subr.bf16.mxu0 0
    %4501 = vmatpush1.bf16.msra.mxu0 0
    %4502 = vmatprep.subr.bf16.mxu0 0
    %4503 = vmatpush1.bf16.msra.mxu0 0
    %4504 = vmatprep.subr.bf16.mxu0 0
    %4505 = vmatpush1.bf16.msra.mxu0 0
    %4506 = vmatprep.subr.bf16.mxu0 0
    %4507 = vmatpush1.bf16.msra.mxu0 0
    %4508 = vmatprep.subr.bf16.mxu0 0
    %4509 = vmatpush1.bf16.msra.mxu0 0
    %4510 = vmatprep.subr.bf16.mxu0 0
    %4511 = vmatpush1.bf16.msra.mxu0 0
    %4512 = vmatprep.subr.bf16.mxu0 0
    %4513 = vmatpush1.bf16.msra.mxu0 0
    %4514 = vmatprep.subr.bf16.mxu0 0
    %4515 = vmatpush1.bf16.msra.mxu0 0
    %4516 = vmatprep.subr.bf16.mxu0 0
    %4517 = vmatpush1.bf16.msra.mxu0 0
    %4518 = vmatprep.mubr.bf16.mxu0 0
    %4519 = vmatmul.mubr.bf16.gmra.mrb[0].mxu0 %v4475
    %v4520 = vpop.f32.mrb[0].mxu0
    %v4521 = vadd.f32 0.0, %v4520
    %v4522 = vpop.f32.mrb[0].mxu0
    %v4523 = vpop.f32.mrb[0].mxu0
    %v4524 = vadd.f32 0.0, %v4523
    %v4525 = vpop.f32.mrb[0].mxu0
    %4526 = vmatprep.mubr.bf16.mxu0 0
    %4527 = vmatmul.mubr.bf16.gmra.mrb[0].mxu0 %v4478
    %v4528 = vpop.f32.mrb[0].mxu0
    %v4529 = vadd.f32 0.0, %v4528
    %v4530 = vpop.f32.mrb[0].mxu0
    %v4531 = vpop.f32.mrb[0].mxu0
    %v4532 = vadd.f32 0.0, %v4531
    %v4533 = vpop.f32.mrb[0].mxu0
    %4534 = vmatprep.mubr.bf16.mxu0 0
    %4535 = vmatmul.mubr.bf16.gmra.mrb[0].mxu0 %v4481
    %v4536 = vpop.f32.mrb[0].mxu0
    %v4537 = vadd.f32 0.0, %v4536
    %v4538 = vpop.f32.mrb[0].mxu0
    %v4539 = vpop.f32.mrb[0].mxu0
    %v4540 = vadd.f32 0.0, %v4539
    %v4541 = vpop.f32.mrb[0].mxu0
    %4542 = vmatprep.mubr.bf16.mxu0 0
    %4543 = vmatmul.mubr.bf16.gmra.mrb[0].mxu0 %v4484
    %v4544 = vpop.f32.mrb[0].mxu0
    %v4545 = vadd.f32 0.0, %v4544
    %v4546 = vpop.f32.mrb[0].mxu0
    %v4547 = vpop.f32.mrb[0].mxu0
    %v4548 = vadd.f32 0.0, %v4547
    %v4549 = vpop.f32.mrb[0].mxu0
    %4550 = vdwg.mxu0
    %v4552 = vsel %vm2541, %v4081, 0
    %v4555 = vsel %vm2541, %v4082, 0
    %v4558 = vsel %vm2541, %v4083, 0
    %v4561 = vsel %vm2541, %v4084, 0
    %4563 = vmatprep.subr.bf16.mxu0 0
    %4564 = vmatpush1.bf16.msra.mxu0 %v2519
    %4565 = vmatprep.subr.bf16.mxu0 0
    %4566 = vmatpush1.bf16.msra.mxu0 %v2522
    %4567 = vmatprep.subr.bf16.mxu0 0
    %4568 = vmatpush1.bf16.msra.mxu0 %v2525
    %4569 = vmatprep.subr.bf16.mxu0 0
    %4570 = vmatpush1.bf16.msra.mxu0 %v2528
    %4571 = vmatprep.subr.bf16.mxu0 0
    %4572 = vmatpush1.bf16.msra.mxu0 0
    %4573 = vmatprep.subr.bf16.mxu0 0
    %4574 = vmatpush1.bf16.msra.mxu0 0
    %4575 = vmatprep.subr.bf16.mxu0 0
    %4576 = vmatpush1.bf16.msra.mxu0 0
    %4577 = vmatprep.subr.bf16.mxu0 0
    %4578 = vmatpush1.bf16.msra.mxu0 0
    %4579 = vmatprep.subr.bf16.mxu0 0
    %4580 = vmatpush1.bf16.msra.mxu0 0
    %4581 = vmatprep.subr.bf16.mxu0 0
    %4582 = vmatpush1.bf16.msra.mxu0 0
    %4583 = vmatprep.subr.bf16.mxu0 0
    %4584 = vmatpush1.bf16.msra.mxu0 0
    %4585 = vmatprep.subr.bf16.mxu0 0
    %4586 = vmatpush1.bf16.msra.mxu0 0
    %4587 = vmatprep.subr.bf16.mxu0 0
    %4588 = vmatpush1.bf16.msra.mxu0 0
    %4589 = vmatprep.subr.bf16.mxu0 0
    %4590 = vmatpush1.bf16.msra.mxu0 0
    %4591 = vmatprep.subr.bf16.mxu0 0
    %4592 = vmatpush1.bf16.msra.mxu0 0
    %4593 = vmatprep.subr.bf16.mxu0 0
    %4594 = vmatpush1.bf16.msra.mxu0 0
    %4595 = vmatprep.mubr.bf16.mxu0 0
    %4596 = vmatmul.mubr.bf16.gmra.mrb[0].mxu0 %v4552
    %v4597 = vpop.f32.mrb[0].mxu0
    %v4598 = vadd.f32 0.0, %v4597
    %v4599 = vpop.f32.mrb[0].mxu0
    %v4600 = vpop.f32.mrb[0].mxu0
    %v4601 = vadd.f32 0.0, %v4600
    %v4602 = vpop.f32.mrb[0].mxu0
    %4603 = vmatprep.mubr.bf16.mxu0 0
    %4604 = vmatmul.mubr.bf16.gmra.mrb[0].mxu0 %v4555
    %v4605 = vpop.f32.mrb[0].mxu0
    %v4606 = vadd.f32 0.0, %v4605
    %v4607 = vpop.f32.mrb[0].mxu0
    %v4608 = vpop.f32.mrb[0].mxu0
    %v4609 = vadd.f32 0.0, %v4608
    %v4610 = vpop.f32.mrb[0].mxu0
    %4611 = vmatprep.mubr.bf16.mxu0 0
    %4612 = vmatmul.mubr.bf16.gmra.mrb[0].mxu0 %v4558
    %v4613 = vpop.f32.mrb[0].mxu0
    %v4614 = vadd.f32 0.0, %v4613
    %v4615 = vpop.f32.mrb[0].mxu0
    %v4616 = vpop.f32.mrb[0].mxu0
    %v4617 = vadd.f32 0.0, %v4616
    %v4618 = vpop.f32.mrb[0].mxu0
    %4619 = vmatprep.mubr.bf16.mxu0 0
    %4620 = vmatmul.mubr.bf16.gmra.mrb[0].mxu0 %v4561
    %v4621 = vpop.f32.mrb[0].mxu0
    %v4622 = vadd.f32 0.0, %v4621
    %v4623 = vpop.f32.mrb[0].mxu0
    %v4624 = vpop.f32.mrb[0].mxu0
    %v4625 = vadd.f32 0.0, %v4624
    %v4626 = vpop.f32.mrb[0].mxu0
    %4627 = vdwg.mxu0
    %v4629 = vsel %vm2541, %v4085, 0
    %v4632 = vsel %vm2541, %v4086, 0
    %v4635 = vsel %vm2541, %v4087, 0
    %v4638 = vsel %vm2541, %v4088, 0
    %4640 = vmatprep.subr.bf16.mxu0 0
    %4641 = vmatpush1.bf16.msra.mxu0 %v2531
    %4642 = vmatprep.subr.bf16.mxu0 0
    %4643 = vmatpush1.bf16.msra.mxu0 %v2534
    %4644 = vmatprep.subr.bf16.mxu0 0
    %4645 = vmatpush1.bf16.msra.mxu0 %v2537
    %4646 = vmatprep.subr.bf16.mxu0 0
    %4647 = vmatpush1.bf16.msra.mxu0 %v2540
    %4648 = vmatprep.subr.bf16.mxu0 0
    %4649 = vmatpush1.bf16.msra.mxu0 0
    %4650 = vmatprep.subr.bf16.mxu0 0
    %4651 = vmatpush1.bf16.msra.mxu0 0
    %4652 = vmatprep.subr.bf16.mxu0 0
    %4653 = vmatpush1.bf16.msra.mxu0 0
    %4654 = vmatprep.subr.bf16.mxu0 0
    %4655 = vmatpush1.bf16.msra.mxu0 0
    %4656 = vmatprep.subr.bf16.mxu0 0
    %4657 = vmatpush1.bf16.msra.mxu0 0
    %4658 = vmatprep.subr.bf16.mxu0 0
    %4659 = vmatpush1.bf16.msra.mxu0 0
    %4660 = vmatprep.subr.bf16.mxu0 0
    %4661 = vmatpush1.bf16.msra.mxu0 0
    %4662 = vmatprep.subr.bf16.mxu0 0
    %4663 = vmatpush1.bf16.msra.mxu0 0
    %4664 = vmatprep.subr.bf16.mxu0 0
    %4665 = vmatpush1.bf16.msra.mxu0 0
    %4666 = vmatprep.subr.bf16.mxu0 0
    %4667 = vmatpush1.bf16.msra.mxu0 0
    %4668 = vmatprep.subr.bf16.mxu0 0
    %4669 = vmatpush1.bf16.msra.mxu0 0
    %4670 = vmatprep.subr.bf16.mxu0 0
    %4671 = vmatpush1.bf16.msra.mxu0 0
    %4672 = vmatprep.mubr.bf16.mxu0 0
    %4673 = vmatmul.mubr.bf16.gmra.mrb[0].mxu0 %v4629
    %v4674 = vpop.f32.mrb[0].mxu0
    %v4675 = vadd.f32 0.0, %v4674
    %v4676 = vpop.f32.mrb[0].mxu0
    %v4677 = vpop.f32.mrb[0].mxu0
    %v4678 = vadd.f32 0.0, %v4677
    %v4679 = vpop.f32.mrb[0].mxu0
    %4680 = vmatprep.mubr.bf16.mxu0 0
    %4681 = vmatmul.mubr.bf16.gmra.mrb[0].mxu0 %v4632
    %v4682 = vpop.f32.mrb[0].mxu0
    %v4683 = vadd.f32 0.0, %v4682
    %v4684 = vpop.f32.mrb[0].mxu0
    %v4685 = vpop.f32.mrb[0].mxu0
    %v4686 = vadd.f32 0.0, %v4685
    %v4687 = vpop.f32.mrb[0].mxu0
    %4688 = vmatprep.mubr.bf16.mxu0 0
    %4689 = vmatmul.mubr.bf16.gmra.mrb[0].mxu0 %v4635
    %v4690 = vpop.f32.mrb[0].mxu0
    %v4691 = vadd.f32 0.0, %v4690
    %v4692 = vpop.f32.mrb[0].mxu0
    %v4693 = vpop.f32.mrb[0].mxu0
    %v4694 = vadd.f32 0.0, %v4693
    %v4695 = vpop.f32.mrb[0].mxu0
    %4696 = vmatprep.mubr.bf16.mxu0 0
    %4697 = vmatmul.mubr.bf16.gmra.mrb[0].mxu0 %v4638
    %v4698 = vpop.f32.mrb[0].mxu0
    %v4699 = vadd.f32 0.0, %v4698
    %v4700 = vpop.f32.mrb[0].mxu0
    %v4701 = vpop.f32.mrb[0].mxu0
    %v4702 = vadd.f32 0.0, %v4701
    %v4703 = vpop.f32.mrb[0].mxu0
    %4704 = vdwg.mxu0
    %v4705 = vpack.c.bf16 %v4139, %v4136
    %v4706 = vpack.c.bf16 %v4147, %v4144
    %v4707 = vpack.c.bf16 %v4155, %v4152
    %v4708 = vpack.c.bf16 %v4163, %v4160
    %v4709 = vpack.c.bf16 %v4216, %v4213
    %v4710 = vpack.c.bf16 %v4224, %v4221
    %v4711 = vpack.c.bf16 %v4232, %v4229
    %v4712 = vpack.c.bf16 %v4240, %v4237
    %v4713 = vpack.c.bf16 %v4293, %v4290
    %v4714 = vpack.c.bf16 %v4301, %v4298
    %v4715 = vpack.c.bf16 %v4309, %v4306
    %v4716 = vpack.c.bf16 %v4317, %v4314
    %v4717 = vpack.c.bf16 %v4370, %v4367
    %v4718 = vpack.c.bf16 %v4378, %v4375
    %v4719 = vpack.c.bf16 %v4386, %v4383
    %v4720 = vpack.c.bf16 %v4394, %v4391
    %v4721 = vpack.c.bf16 %v4447, %v4444
    %v4722 = vpack.c.bf16 %v4455, %v4452
    %v4723 = vpack.c.bf16 %v4463, %v4460
    %v4724 = vpack.c.bf16 %v4471, %v4468
    %v4725 = vpack.c.bf16 %v4524, %v4521
    %v4726 = vpack.c.bf16 %v4532, %v4529
    %v4727 = vpack.c.bf16 %v4540, %v4537
    %v4728 = vpack.c.bf16 %v4548, %v4545
    %v4729 = vpack.c.bf16 %v4601, %v4598
    %v4730 = vpack.c.bf16 %v4609, %v4606
    %v4731 = vpack.c.bf16 %v4617, %v4614
    %v4732 = vpack.c.bf16 %v4625, %v4622
    %v4733 = vpack.c.bf16 %v4678, %v4675
    %v4734 = vpack.c.bf16 %v4686, %v4683
    %v4735 = vpack.c.bf16 %v4694, %v4691
    %v4736 = vpack.c.bf16 %v4702, %v4699
    %v4739 = vpack.i.b16 %v4709, %v4705
    %v4741 = vshrl.u32 %v4705, 16
    %v4742 = vshrl.u32 %v4709, 16
    %v4743 = vpack.i.b16 %v4742, %v4741
    %v4747 = vpack.i.b16 %v4717, %v4713
    %v4749 = vshrl.u32 %v4713, 16
    %v4750 = vshrl.u32 %v4717, 16
    %v4751 = vpack.i.b16 %v4750, %v4749
    %v4755 = vpack.i.b16 %v4725, %v4721
    %v4757 = vshrl.u32 %v4721, 16
    %v4758 = vshrl.u32 %v4725, 16
    %v4759 = vpack.i.b16 %v4758, %v4757
    %v4763 = vpack.i.b16 %v4733, %v4729
    %v4765 = vshrl.u32 %v4729, 16
    %v4766 = vshrl.u32 %v4733, 16
    %v4767 = vpack.i.b16 %v4766, %v4765
    %v4771 = vpack.i.b16 %v4710, %v4706
    %v4773 = vshrl.u32 %v4706, 16
    %v4774 = vshrl.u32 %v4710, 16
    %v4775 = vpack.i.b16 %v4774, %v4773
    %v4779 = vpack.i.b16 %v4718, %v4714
    %v4781 = vshrl.u32 %v4714, 16
    %v4782 = vshrl.u32 %v4718, 16
    %v4783 = vpack.i.b16 %v4782, %v4781
    %v4787 = vpack.i.b16 %v4726, %v4722
    %v4789 = vshrl.u32 %v4722, 16
    %v4790 = vshrl.u32 %v4726, 16
    %v4791 = vpack.i.b16 %v4790, %v4789
    %v4795 = vpack.i.b16 %v4734, %v4730
    %v4797 = vshrl.u32 %v4730, 16
    %v4798 = vshrl.u32 %v4734, 16
    %v4799 = vpack.i.b16 %v4798, %v4797
    %v4803 = vpack.i.b16 %v4711, %v4707
    %v4805 = vshrl.u32 %v4707, 16
    %v4806 = vshrl.u32 %v4711, 16
    %v4807 = vpack.i.b16 %v4806, %v4805
    %v4811 = vpack.i.b16 %v4719, %v4715
    %v4813 = vshrl.u32 %v4715, 16
    %v4814 = vshrl.u32 %v4719, 16
    %v4815 = vpack.i.b16 %v4814, %v4813
    %v4819 = vpack.i.b16 %v4727, %v4723
    %v4821 = vshrl.u32 %v4723, 16
    %v4822 = vshrl.u32 %v4727, 16
    %v4823 = vpack.i.b16 %v4822, %v4821
    %v4827 = vpack.i.b16 %v4735, %v4731
    %v4829 = vshrl.u32 %v4731, 16
    %v4830 = vshrl.u32 %v4735, 16
    %v4831 = vpack.i.b16 %v4830, %v4829
    %v4835 = vpack.i.b16 %v4712, %v4708
    %v4837 = vshrl.u32 %v4708, 16
    %v4838 = vshrl.u32 %v4712, 16
    %v4839 = vpack.i.b16 %v4838, %v4837
    %v4843 = vpack.i.b16 %v4720, %v4716
    %v4845 = vshrl.u32 %v4716, 16
    %v4846 = vshrl.u32 %v4720, 16
    %v4847 = vpack.i.b16 %v4846, %v4845
    %v4851 = vpack.i.b16 %v4728, %v4724
    %v4853 = vshrl.u32 %v4724, 16
    %v4854 = vshrl.u32 %v4728, 16
    %v4855 = vpack.i.b16 %v4854, %v4853
    %v4859 = vpack.i.b16 %v4736, %v4732
    %v4861 = vshrl.u32 %v4732, 16
    %v4862 = vshrl.u32 %v4736, 16
    %v4863 = vpack.i.b16 %v4862, %v4861
    %v4865 = vcombine.low %v4739, %v4755
    %v4866 = vcombine.high %v4739, %v4755
    %v4868 = vunpack.c.l.s4 1983009808
    %v4869 = vunpack.c.0.s8 %v4868
    %v4870 = vlaneseq
    %v4871 = vshrl.u32 %v4870, 7
    %v4872 = vsub.s32 %v4869, %v4871
    %v4873 = vrot.slane %v4865, %v4872
    %v4875 = vunpack.c.l.s4 1983009808
    %v4876 = vunpack.c.0.s8 %v4875
    %v4877 = vlaneseq
    %v4878 = vshrl.u32 %v4877, 7
    %v4879 = vsub.s32 %v4876, %v4878
    %v4880 = vrot.slane %v4866, %v4879
    %v4881 = vcombine.low %v4747, %v4763
    %v4882 = vcombine.high %v4747, %v4763
    %v4884 = vunpack.c.l.s4 1983009808
    %v4885 = vunpack.c.0.s8 %v4884
    %v4886 = vlaneseq
    %v4887 = vshrl.u32 %v4886, 7
    %v4888 = vsub.s32 %v4885, %v4887
    %v4889 = vrot.slane %v4881, %v4888
    %v4891 = vunpack.c.l.s4 1983009808
    %v4892 = vunpack.c.0.s8 %v4891
    %v4893 = vlaneseq
    %v4894 = vshrl.u32 %v4893, 7
    %v4895 = vsub.s32 %v4892, %v4894
    %v4896 = vrot.slane %v4882, %v4895
    %v4897 = vcombine.low %v4873, %v4889
    %v4898 = vcombine.high %v4873, %v4889
    %v4900 = vunpack.c.l.s4 1934713408
    %v4901 = vunpack.c.0.s8 %v4900
    %v4902 = vlaneseq
    %v4903 = vshrl.u32 %v4902, 7
    %v4904 = vsub.s32 %v4901, %v4903
    %v4905 = vrot.slane %v4897, %v4904
    %v4907 = vunpack.c.l.s4 1934713408
    %v4908 = vunpack.c.0.s8 %v4907
    %v4909 = vlaneseq
    %v4910 = vshrl.u32 %v4909, 7
    %v4911 = vsub.s32 %v4908, %v4910
    %v4912 = vrot.slane %v4898, %v4911
    %v4913 = vcombine.low %v4880, %v4896
    %v4914 = vcombine.high %v4880, %v4896
    %v4916 = vunpack.c.l.s4 1934713408
    %v4917 = vunpack.c.0.s8 %v4916
    %v4918 = vlaneseq
    %v4919 = vshrl.u32 %v4918, 7
    %v4920 = vsub.s32 %v4917, %v4919
    %v4921 = vrot.slane %v4913, %v4920
    %v4923 = vunpack.c.l.s4 1934713408
    %v4924 = vunpack.c.0.s8 %v4923
    %v4925 = vlaneseq
    %v4926 = vshrl.u32 %v4925, 7
    %v4927 = vsub.s32 %v4924, %v4926
    %v4928 = vrot.slane %v4914, %v4927
    %v4929 = vcombine.high %v4905, 0
    %v4930 = vcombine.high %v4912, 0
    %v4931 = vcombine.high %v4921, 0
    %v4932 = vcombine.high %v4928, 0
    %v4933 = vcombine.low %v4743, %v4759
    %v4934 = vcombine.high %v4743, %v4759
    %v4936 = vunpack.c.l.s4 1983009808
    %v4937 = vunpack.c.0.s8 %v4936
    %v4938 = vlaneseq
    %v4939 = vshrl.u32 %v4938, 7
    %v4940 = vsub.s32 %v4937, %v4939
    %v4941 = vrot.slane %v4933, %v4940
    %v4943 = vunpack.c.l.s4 1983009808
    %v4944 = vunpack.c.0.s8 %v4943
    %v4945 = vlaneseq
    %v4946 = vshrl.u32 %v4945, 7
    %v4947 = vsub.s32 %v4944, %v4946
    %v4948 = vrot.slane %v4934, %v4947
    %v4949 = vcombine.low %v4751, %v4767
    %v4950 = vcombine.high %v4751, %v4767
    %v4952 = vunpack.c.l.s4 1983009808
    %v4953 = vunpack.c.0.s8 %v4952
    %v4954 = vlaneseq
    %v4955 = vshrl.u32 %v4954, 7
    %v4956 = vsub.s32 %v4953, %v4955
    %v4957 = vrot.slane %v4949, %v4956
    %v4959 = vunpack.c.l.s4 1983009808
    %v4960 = vunpack.c.0.s8 %v4959
    %v4961 = vlaneseq
    %v4962 = vshrl.u32 %v4961, 7
    %v4963 = vsub.s32 %v4960, %v4962
    %v4964 = vrot.slane %v4950, %v4963
    %v4965 = vcombine.low %v4941, %v4957
    %v4966 = vcombine.high %v4941, %v4957
    %v4968 = vunpack.c.l.s4 1934713408
    %v4969 = vunpack.c.0.s8 %v4968
    %v4970 = vlaneseq
    %v4971 = vshrl.u32 %v4970, 7
    %v4972 = vsub.s32 %v4969, %v4971
    %v4973 = vrot.slane %v4965, %v4972
    %v4975 = vunpack.c.l.s4 1934713408
    %v4976 = vunpack.c.0.s8 %v4975
    %v4977 = vlaneseq
    %v4978 = vshrl.u32 %v4977, 7
    %v4979 = vsub.s32 %v4976, %v4978
    %v4980 = vrot.slane %v4966, %v4979
    %v4981 = vcombine.low %v4948, %v4964
    %v4982 = vcombine.high %v4948, %v4964
    %v4984 = vunpack.c.l.s4 1934713408
    %v4985 = vunpack.c.0.s8 %v4984
    %v4986 = vlaneseq
    %v4987 = vshrl.u32 %v4986, 7
    %v4988 = vsub.s32 %v4985, %v4987
    %v4989 = vrot.slane %v4981, %v4988
    %v4991 = vunpack.c.l.s4 1934713408
    %v4992 = vunpack.c.0.s8 %v4991
    %v4993 = vlaneseq
    %v4994 = vshrl.u32 %v4993, 7
    %v4995 = vsub.s32 %v4992, %v4994
    %v4996 = vrot.slane %v4982, %v4995
    %v4997 = vcombine.high %v4973, 0
    %v4998 = vcombine.high %v4980, 0
    %v4999 = vcombine.high %v4989, 0
    %v5000 = vcombine.high %v4996, 0
    %v5001 = vcombine.low %v4771, %v4787
    %v5002 = vcombine.high %v4771, %v4787
    %v5004 = vunpack.c.l.s4 1983009808
    %v5005 = vunpack.c.0.s8 %v5004
    %v5006 = vlaneseq
    %v5007 = vshrl.u32 %v5006, 7
    %v5008 = vsub.s32 %v5005, %v5007
    %v5009 = vrot.slane %v5001, %v5008
    %v5011 = vunpack.c.l.s4 1983009808
    %v5012 = vunpack.c.0.s8 %v5011
    %v5013 = vlaneseq
    %v5014 = vshrl.u32 %v5013, 7
    %v5015 = vsub.s32 %v5012, %v5014
    %v5016 = vrot.slane %v5002, %v5015
    %v5017 = vcombine.low %v4779, %v4795
    %v5018 = vcombine.high %v4779, %v4795
    %v5020 = vunpack.c.l.s4 1983009808
    %v5021 = vunpack.c.0.s8 %v5020
    %v5022 = vlaneseq
    %v5023 = vshrl.u32 %v5022, 7
    %v5024 = vsub.s32 %v5021, %v5023
    %v5025 = vrot.slane %v5017, %v5024
    %v5027 = vunpack.c.l.s4 1983009808
    %v5028 = vunpack.c.0.s8 %v5027
    %v5029 = vlaneseq
    %v5030 = vshrl.u32 %v5029, 7
    %v5031 = vsub.s32 %v5028, %v5030
    %v5032 = vrot.slane %v5018, %v5031
    %v5033 = vcombine.low %v5009, %v5025
    %v5034 = vcombine.high %v5009, %v5025
    %v5036 = vunpack.c.l.s4 1934713408
    %v5037 = vunpack.c.0.s8 %v5036
    %v5038 = vlaneseq
    %v5039 = vshrl.u32 %v5038, 7
    %v5040 = vsub.s32 %v5037, %v5039
    %v5041 = vrot.slane %v5033, %v5040
    %v5043 = vunpack.c.l.s4 1934713408
    %v5044 = vunpack.c.0.s8 %v5043
    %v5045 = vlaneseq
    %v5046 = vshrl.u32 %v5045, 7
    %v5047 = vsub.s32 %v5044, %v5046
    %v5048 = vrot.slane %v5034, %v5047
    %v5049 = vcombine.low %v5016, %v5032
    %v5050 = vcombine.high %v5016, %v5032
    %v5052 = vunpack.c.l.s4 1934713408
    %v5053 = vunpack.c.0.s8 %v5052
    %v5054 = vlaneseq
    %v5055 = vshrl.u32 %v5054, 7
    %v5056 = vsub.s32 %v5053, %v5055
    %v5057 = vrot.slane %v5049, %v5056
    %v5059 = vunpack.c.l.s4 1934713408
    %v5060 = vunpack.c.0.s8 %v5059
    %v5061 = vlaneseq
    %v5062 = vshrl.u32 %v5061, 7
    %v5063 = vsub.s32 %v5060, %v5062
    %v5064 = vrot.slane %v5050, %v5063
    %v5065 = vcombine.high %v5041, 0
    %v5066 = vcombine.high %v5048, 0
    %v5067 = vcombine.high %v5057, 0
    %v5068 = vcombine.high %v5064, 0
    %v5069 = vcombine.low %v4775, %v4791
    %v5070 = vcombine.high %v4775, %v4791
    %v5072 = vunpack.c.l.s4 1983009808
    %v5073 = vunpack.c.0.s8 %v5072
    %v5074 = vlaneseq
    %v5075 = vshrl.u32 %v5074, 7
    %v5076 = vsub.s32 %v5073, %v5075
    %v5077 = vrot.slane %v5069, %v5076
    %v5079 = vunpack.c.l.s4 1983009808
    %v5080 = vunpack.c.0.s8 %v5079
    %v5081 = vlaneseq
    %v5082 = vshrl.u32 %v5081, 7
    %v5083 = vsub.s32 %v5080, %v5082
    %v5084 = vrot.slane %v5070, %v5083
    %v5085 = vcombine.low %v4783, %v4799
    %v5086 = vcombine.high %v4783, %v4799
    %v5088 = vunpack.c.l.s4 1983009808
    %v5089 = vunpack.c.0.s8 %v5088
    %v5090 = vlaneseq
    %v5091 = vshrl.u32 %v5090, 7
    %v5092 = vsub.s32 %v5089, %v5091
    %v5093 = vrot.slane %v5085, %v5092
    %v5095 = vunpack.c.l.s4 1983009808
    %v5096 = vunpack.c.0.s8 %v5095
    %v5097 = vlaneseq
    %v5098 = vshrl.u32 %v5097, 7
    %v5099 = vsub.s32 %v5096, %v5098
    %v5100 = vrot.slane %v5086, %v5099
    %v5101 = vcombine.low %v5077, %v5093
    %v5102 = vcombine.high %v5077, %v5093
    %v5104 = vunpack.c.l.s4 1934713408
    %v5105 = vunpack.c.0.s8 %v5104
    %v5106 = vlaneseq
    %v5107 = vshrl.u32 %v5106, 7
    %v5108 = vsub.s32 %v5105, %v5107
    %v5109 = vrot.slane %v5101, %v5108
    %v5111 = vunpack.c.l.s4 1934713408
    %v5112 = vunpack.c.0.s8 %v5111
    %v5113 = vlaneseq
    %v5114 = vshrl.u32 %v5113, 7
    %v5115 = vsub.s32 %v5112, %v5114
    %v5116 = vrot.slane %v5102, %v5115
    %v5117 = vcombine.low %v5084, %v5100
    %v5118 = vcombine.high %v5084, %v5100
    %v5120 = vunpack.c.l.s4 1934713408
    %v5121 = vunpack.c.0.s8 %v5120
    %v5122 = vlaneseq
    %v5123 = vshrl.u32 %v5122, 7
    %v5124 = vsub.s32 %v5121, %v5123
    %v5125 = vrot.slane %v5117, %v5124
    %v5127 = vunpack.c.l.s4 1934713408
    %v5128 = vunpack.c.0.s8 %v5127
    %v5129 = vlaneseq
    %v5130 = vshrl.u32 %v5129, 7
    %v5131 = vsub.s32 %v5128, %v5130
    %v5132 = vrot.slane %v5118, %v5131
    %v5133 = vcombine.high %v5109, 0
    %v5134 = vcombine.high %v5116, 0
    %v5135 = vcombine.high %v5125, 0
    %v5136 = vcombine.high %v5132, 0
    %v5137 = vcombine.low %v4803, %v4819
    %v5138 = vcombine.high %v4803, %v4819
    %v5140 = vunpack.c.l.s4 1983009808
    %v5141 = vunpack.c.0.s8 %v5140
    %v5142 = vlaneseq
    %v5143 = vshrl.u32 %v5142, 7
    %v5144 = vsub.s32 %v5141, %v5143
    %v5145 = vrot.slane %v5137, %v5144
    %v5147 = vunpack.c.l.s4 1983009808
    %v5148 = vunpack.c.0.s8 %v5147
    %v5149 = vlaneseq
    %v5150 = vshrl.u32 %v5149, 7
    %v5151 = vsub.s32 %v5148, %v5150
    %v5152 = vrot.slane %v5138, %v5151
    %v5153 = vcombine.low %v4811, %v4827
    %v5154 = vcombine.high %v4811, %v4827
    %v5156 = vunpack.c.l.s4 1983009808
    %v5157 = vunpack.c.0.s8 %v5156
    %v5158 = vlaneseq
    %v5159 = vshrl.u32 %v5158, 7
    %v5160 = vsub.s32 %v5157, %v5159
    %v5161 = vrot.slane %v5153, %v5160
    %v5163 = vunpack.c.l.s4 1983009808
    %v5164 = vunpack.c.0.s8 %v5163
    %v5165 = vlaneseq
    %v5166 = vshrl.u32 %v5165, 7
    %v5167 = vsub.s32 %v5164, %v5166
    %v5168 = vrot.slane %v5154, %v5167
    %v5169 = vcombine.low %v5145, %v5161
    %v5170 = vcombine.high %v5145, %v5161
    %v5172 = vunpack.c.l.s4 1934713408
    %v5173 = vunpack.c.0.s8 %v5172
    %v5174 = vlaneseq
    %v5175 = vshrl.u32 %v5174, 7
    %v5176 = vsub.s32 %v5173, %v5175
    %v5177 = vrot.slane %v5169, %v5176
    %v5179 = vunpack.c.l.s4 1934713408
    %v5180 = vunpack.c.0.s8 %v5179
    %v5181 = vlaneseq
    %v5182 = vshrl.u32 %v5181, 7
    %v5183 = vsub.s32 %v5180, %v5182
    %v5184 = vrot.slane %v5170, %v5183
    %v5185 = vcombine.low %v5152, %v5168
    %v5186 = vcombine.high %v5152, %v5168
    %v5188 = vunpack.c.l.s4 1934713408
    %v5189 = vunpack.c.0.s8 %v5188
    %v5190 = vlaneseq
    %v5191 = vshrl.u32 %v5190, 7
    %v5192 = vsub.s32 %v5189, %v5191
    %v5193 = vrot.slane %v5185, %v5192
    %v5195 = vunpack.c.l.s4 1934713408
    %v5196 = vunpack.c.0.s8 %v5195
    %v5197 = vlaneseq
    %v5198 = vshrl.u32 %v5197, 7
    %v5199 = vsub.s32 %v5196, %v5198
    %v5200 = vrot.slane %v5186, %v5199
    %v5201 = vcombine.high %v5177, 0
    %v5202 = vcombine.high %v5184, 0
    %v5203 = vcombine.high %v5193, 0
    %v5204 = vcombine.high %v5200, 0
    %v5205 = vcombine.low %v4807, %v4823
    %v5206 = vcombine.high %v4807, %v4823
    %v5208 = vunpack.c.l.s4 1983009808
    %v5209 = vunpack.c.0.s8 %v5208
    %v5210 = vlaneseq
    %v5211 = vshrl.u32 %v5210, 7
    %v5212 = vsub.s32 %v5209, %v5211
    %v5213 = vrot.slane %v5205, %v5212
    %v5215 = vunpack.c.l.s4 1983009808
    %v5216 = vunpack.c.0.s8 %v5215
    %v5217 = vlaneseq
    %v5218 = vshrl.u32 %v5217, 7
    %v5219 = vsub.s32 %v5216, %v5218
    %v5220 = vrot.slane %v5206, %v5219
    %v5221 = vcombine.low %v4815, %v4831
    %v5222 = vcombine.high %v4815, %v4831
    %v5224 = vunpack.c.l.s4 1983009808
    %v5225 = vunpack.c.0.s8 %v5224
    %v5226 = vlaneseq
    %v5227 = vshrl.u32 %v5226, 7
    %v5228 = vsub.s32 %v5225, %v5227
    %v5229 = vrot.slane %v5221, %v5228
    %v5231 = vunpack.c.l.s4 1983009808
    %v5232 = vunpack.c.0.s8 %v5231
    %v5233 = vlaneseq
    %v5234 = vshrl.u32 %v5233, 7
    %v5235 = vsub.s32 %v5232, %v5234
    %v5236 = vrot.slane %v5222, %v5235
    %v5237 = vcombine.low %v5213, %v5229
    %v5238 = vcombine.high %v5213, %v5229
    %v5240 = vunpack.c.l.s4 1934713408
    %v5241 = vunpack.c.0.s8 %v5240
    %v5242 = vlaneseq
    %v5243 = vshrl.u32 %v5242, 7
    %v5244 = vsub.s32 %v5241, %v5243
    %v5245 = vrot.slane %v5237, %v5244
    %v5247 = vunpack.c.l.s4 1934713408
    %v5248 = vunpack.c.0.s8 %v5247
    %v5249 = vlaneseq
    %v5250 = vshrl.u32 %v5249, 7
    %v5251 = vsub.s32 %v5248, %v5250
    %v5252 = vrot.slane %v5238, %v5251
    %v5253 = vcombine.low %v5220, %v5236
    %v5254 = vcombine.high %v5220, %v5236
    %v5256 = vunpack.c.l.s4 1934713408
    %v5257 = vunpack.c.0.s8 %v5256
    %v5258 = vlaneseq
    %v5259 = vshrl.u32 %v5258, 7
    %v5260 = vsub.s32 %v5257, %v5259
    %v5261 = vrot.slane %v5253, %v5260
    %v5263 = vunpack.c.l.s4 1934713408
    %v5264 = vunpack.c.0.s8 %v5263
    %v5265 = vlaneseq
    %v5266 = vshrl.u32 %v5265, 7
    %v5267 = vsub.s32 %v5264, %v5266
    %v5268 = vrot.slane %v5254, %v5267
    %v5269 = vcombine.high %v5245, 0
    %v5270 = vcombine.high %v5252, 0
    %v5271 = vcombine.high %v5261, 0
    %v5272 = vcombine.high %v5268, 0
    %v5273 = vcombine.low %v4835, %v4851
    %v5274 = vcombine.high %v4835, %v4851
    %v5276 = vunpack.c.l.s4 1983009808
    %v5277 = vunpack.c.0.s8 %v5276
    %v5278 = vlaneseq
    %v5279 = vshrl.u32 %v5278, 7
    %v5280 = vsub.s32 %v5277, %v5279
    %v5281 = vrot.slane %v5273, %v5280
    %v5283 = vunpack.c.l.s4 1983009808
    %v5284 = vunpack.c.0.s8 %v5283
    %v5285 = vlaneseq
    %v5286 = vshrl.u32 %v5285, 7
    %v5287 = vsub.s32 %v5284, %v5286
    %v5288 = vrot.slane %v5274, %v5287
    %v5289 = vcombine.low %v4843, %v4859
    %v5290 = vcombine.high %v4843, %v4859
    %v5292 = vunpack.c.l.s4 1983009808
    %v5293 = vunpack.c.0.s8 %v5292
    %v5294 = vlaneseq
    %v5295 = vshrl.u32 %v5294, 7
    %v5296 = vsub.s32 %v5293, %v5295
    %v5297 = vrot.slane %v5289, %v5296
    %v5299 = vunpack.c.l.s4 1983009808
    %v5300 = vunpack.c.0.s8 %v5299
    %v5301 = vlaneseq
    %v5302 = vshrl.u32 %v5301, 7
    %v5303 = vsub.s32 %v5300, %v5302
    %v5304 = vrot.slane %v5290, %v5303
    %v5305 = vcombine.low %v5281, %v5297
    %v5306 = vcombine.high %v5281, %v5297
    %v5308 = vunpack.c.l.s4 1934713408
    %v5309 = vunpack.c.0.s8 %v5308
    %v5310 = vlaneseq
    %v5311 = vshrl.u32 %v5310, 7
    %v5312 = vsub.s32 %v5309, %v5311
    %v5313 = vrot.slane %v5305, %v5312
    %v5315 = vunpack.c.l.s4 1934713408
    %v5316 = vunpack.c.0.s8 %v5315
    %v5317 = vlaneseq
    %v5318 = vshrl.u32 %v5317, 7
    %v5319 = vsub.s32 %v5316, %v5318
    %v5320 = vrot.slane %v5306, %v5319
    %v5321 = vcombine.low %v5288, %v5304
    %v5322 = vcombine.high %v5288, %v5304
    %v5324 = vunpack.c.l.s4 1934713408
    %v5325 = vunpack.c.0.s8 %v5324
    %v5326 = vlaneseq
    %v5327 = vshrl.u32 %v5326, 7
    %v5328 = vsub.s32 %v5325, %v5327
    %v5329 = vrot.slane %v5321, %v5328
    %v5331 = vunpack.c.l.s4 1934713408
    %v5332 = vunpack.c.0.s8 %v5331
    %v5333 = vlaneseq
    %v5334 = vshrl.u32 %v5333, 7
    %v5335 = vsub.s32 %v5332, %v5334
    %v5336 = vrot.slane %v5322, %v5335
    %v5337 = vcombine.high %v5313, 0
    %v5338 = vcombine.high %v5320, 0
    %v5339 = vcombine.high %v5329, 0
    %v5340 = vcombine.high %v5336, 0
    %v5341 = vcombine.low %v4839, %v4855
    %v5342 = vcombine.high %v4839, %v4855
    %v5344 = vunpack.c.l.s4 1983009808
    %v5345 = vunpack.c.0.s8 %v5344
    %v5346 = vlaneseq
    %v5347 = vshrl.u32 %v5346, 7
    %v5348 = vsub.s32 %v5345, %v5347
    %v5349 = vrot.slane %v5341, %v5348
    %v5351 = vunpack.c.l.s4 1983009808
    %v5352 = vunpack.c.0.s8 %v5351
    %v5353 = vlaneseq
    %v5354 = vshrl.u32 %v5353, 7
    %v5355 = vsub.s32 %v5352, %v5354
    %v5356 = vrot.slane %v5342, %v5355
    %v5357 = vcombine.low %v4847, %v4863
    %v5358 = vcombine.high %v4847, %v4863
    %v5360 = vunpack.c.l.s4 1983009808
    %v5361 = vunpack.c.0.s8 %v5360
    %v5362 = vlaneseq
    %v5363 = vshrl.u32 %v5362, 7
    %v5364 = vsub.s32 %v5361, %v5363
    %v5365 = vrot.slane %v5357, %v5364
    %v5367 = vunpack.c.l.s4 1983009808
    %v5368 = vunpack.c.0.s8 %v5367
    %v5369 = vlaneseq
    %v5370 = vshrl.u32 %v5369, 7
    %v5371 = vsub.s32 %v5368, %v5370
    %v5372 = vrot.slane %v5358, %v5371
    %v5373 = vcombine.low %v5349, %v5365
    %v5374 = vcombine.high %v5349, %v5365
    %v5376 = vunpack.c.l.s4 1934713408
    %v5377 = vunpack.c.0.s8 %v5376
    %v5378 = vlaneseq
    %v5379 = vshrl.u32 %v5378, 7
    %v5380 = vsub.s32 %v5377, %v5379
    %v5381 = vrot.slane %v5373, %v5380
    %v5383 = vunpack.c.l.s4 1934713408
    %v5384 = vunpack.c.0.s8 %v5383
    %v5385 = vlaneseq
    %v5386 = vshrl.u32 %v5385, 7
    %v5387 = vsub.s32 %v5384, %v5386
    %v5388 = vrot.slane %v5374, %v5387
    %v5389 = vcombine.low %v5356, %v5372
    %v5390 = vcombine.high %v5356, %v5372
    %v5392 = vunpack.c.l.s4 1934713408
    %v5393 = vunpack.c.0.s8 %v5392
    %v5394 = vlaneseq
    %v5395 = vshrl.u32 %v5394, 7
    %v5396 = vsub.s32 %v5393, %v5395
    %v5397 = vrot.slane %v5389, %v5396
    %v5399 = vunpack.c.l.s4 1934713408
    %v5400 = vunpack.c.0.s8 %v5399
    %v5401 = vlaneseq
    %v5402 = vshrl.u32 %v5401, 7
    %v5403 = vsub.s32 %v5400, %v5402
    %v5404 = vrot.slane %v5390, %v5403
    %v5405 = vcombine.high %v5381, 0
    %v5406 = vcombine.high %v5388, 0
    %v5407 = vcombine.high %v5397, 0
    %v5408 = vcombine.high %v5404, 0
    %5410 = vrot.lane.b32.xlu0 %v4973, 64
    %v5411 = vpop.permute.xlu0 %5410
    %5413 = vrot.lane.b32.xlu0 %v4997, 64
    %v5414 = vpop.permute.xlu0 %5413
    %5416 = vrot.lane.b32.xlu0 %v4980, 64
    %v5417 = vpop.permute.xlu0 %5416
    %5419 = vrot.lane.b32.xlu0 %v4998, 64
    %v5420 = vpop.permute.xlu0 %5419
    %5422 = vrot.lane.b32.xlu0 %v4989, 64
    %v5423 = vpop.permute.xlu0 %5422
    %5425 = vrot.lane.b32.xlu0 %v4999, 64
    %v5426 = vpop.permute.xlu0 %5425
    %5428 = vrot.lane.b32.xlu0 %v4996, 64
    %v5429 = vpop.permute.xlu0 %5428
    %5431 = vrot.lane.b32.xlu0 %v5000, 64
    %v5432 = vpop.permute.xlu0 %5431
    %5434 = vrot.lane.b32.xlu0 %v5109, 64
    %v5435 = vpop.permute.xlu0 %5434
    %5437 = vrot.lane.b32.xlu0 %v5133, 64
    %v5438 = vpop.permute.xlu0 %5437
    %5440 = vrot.lane.b32.xlu0 %v5116, 64
    %v5441 = vpop.permute.xlu0 %5440
    %5443 = vrot.lane.b32.xlu0 %v5134, 64
    %v5444 = vpop.permute.xlu0 %5443
    %5446 = vrot.lane.b32.xlu0 %v5125, 64
    %v5447 = vpop.permute.xlu0 %5446
    %5449 = vrot.lane.b32.xlu0 %v5135, 64
    %v5450 = vpop.permute.xlu0 %5449
    %5452 = vrot.lane.b32.xlu0 %v5132, 64
    %v5453 = vpop.permute.xlu0 %5452
    %5455 = vrot.lane.b32.xlu0 %v5136, 64
    %v5456 = vpop.permute.xlu0 %5455
    %5458 = vrot.lane.b32.xlu0 %v5245, 64
    %v5459 = vpop.permute.xlu0 %5458
    %5461 = vrot.lane.b32.xlu0 %v5269, 64
    %v5462 = vpop.permute.xlu0 %5461
    %5464 = vrot.lane.b32.xlu0 %v5252, 64
    %v5465 = vpop.permute.xlu0 %5464
    %5467 = vrot.lane.b32.xlu0 %v5270, 64
    %v5468 = vpop.permute.xlu0 %5467
    %5470 = vrot.lane.b32.xlu0 %v5261, 64
    %v5471 = vpop.permute.xlu0 %5470
    %5473 = vrot.lane.b32.xlu0 %v5271, 64
    %v5474 = vpop.permute.xlu0 %5473
    %5476 = vrot.lane.b32.xlu0 %v5268, 64
    %v5477 = vpop.permute.xlu0 %5476
    %5479 = vrot.lane.b32.xlu0 %v5272, 64
    %v5480 = vpop.permute.xlu0 %5479
    %5482 = vrot.lane.b32.xlu0 %v5381, 64
    %v5483 = vpop.permute.xlu0 %5482
    %5485 = vrot.lane.b32.xlu0 %v5405, 64
    %v5486 = vpop.permute.xlu0 %5485
    %5488 = vrot.lane.b32.xlu0 %v5388, 64
    %v5489 = vpop.permute.xlu0 %5488
    %5491 = vrot.lane.b32.xlu0 %v5406, 64
    %v5492 = vpop.permute.xlu0 %5491
    %5494 = vrot.lane.b32.xlu0 %v5397, 64
    %v5495 = vpop.permute.xlu0 %5494
    %5497 = vrot.lane.b32.xlu0 %v5407, 64
    %v5498 = vpop.permute.xlu0 %5497
    %5500 = vrot.lane.b32.xlu0 %v5404, 64
    %v5501 = vpop.permute.xlu0 %5500
    %5503 = vrot.lane.b32.xlu0 %v5408, 64
    %v5504 = vpop.permute.xlu0 %5503
    %v5507 = vsel %vm2541, %v4905, %v5411
    %v5510 = vsel %vm2541, %v4929, %v5414
    %v5513 = vsel %vm2541, %v4912, %v5417
    %v5516 = vsel %vm2541, %v4930, %v5420
    %v5519 = vsel %vm2541, %v4921, %v5423
    %v5522 = vsel %vm2541, %v4931, %v5426
    %v5525 = vsel %vm2541, %v4928, %v5429
    %v5528 = vsel %vm2541, %v4932, %v5432
    %v5531 = vsel %vm2541, %v5041, %v5435
    %v5534 = vsel %vm2541, %v5065, %v5438
    %v5537 = vsel %vm2541, %v5048, %v5441
    %v5540 = vsel %vm2541, %v5066, %v5444
    %v5543 = vsel %vm2541, %v5057, %v5447
    %v5546 = vsel %vm2541, %v5067, %v5450
    %v5549 = vsel %vm2541, %v5064, %v5453
    %v5552 = vsel %vm2541, %v5068, %v5456
    %v5555 = vsel %vm2541, %v5177, %v5459
    %v5558 = vsel %vm2541, %v5201, %v5462
    %v5561 = vsel %vm2541, %v5184, %v5465
    %v5564 = vsel %vm2541, %v5202, %v5468
    %v5567 = vsel %vm2541, %v5193, %v5471
    %v5570 = vsel %vm2541, %v5203, %v5474
    %v5573 = vsel %vm2541, %v5200, %v5477
    %v5576 = vsel %vm2541, %v5204, %v5480
    %v5579 = vsel %vm2541, %v5313, %v5483
    %v5582 = vsel %vm2541, %v5337, %v5486
    %v5585 = vsel %vm2541, %v5320, %v5489
    %v5588 = vsel %vm2541, %v5338, %v5492
    %v5591 = vsel %vm2541, %v5329, %v5495
    %v5594 = vsel %vm2541, %v5339, %v5498
    %v5597 = vsel %vm2541, %v5336, %v5501
    %v5600 = vsel %vm2541, %v5340, %v5504
    %v5633 = vunpack.c.l.b16 %v5507
    %v5634 = vunpack.c.l.b16 %v5510
    %v5635 = vunpack.c.l.b16 %v5513
    %v5636 = vunpack.c.l.b16 %v5516
    %v5637 = vunpack.c.l.b16 %v5519
    %v5638 = vunpack.c.l.b16 %v5522
    %v5639 = vunpack.c.l.b16 %v5525
    %v5640 = vunpack.c.l.b16 %v5528
    %v5641 = vunpack.c.l.b16 %v5531
    %v5642 = vunpack.c.l.b16 %v5534
    %v5643 = vunpack.c.l.b16 %v5537
    %v5644 = vunpack.c.l.b16 %v5540
    %v5645 = vunpack.c.l.b16 %v5543
    %v5646 = vunpack.c.l.b16 %v5546
    %v5647 = vunpack.c.l.b16 %v5549
    %v5648 = vunpack.c.l.b16 %v5552
    %v5649 = vunpack.c.l.b16 %v5555
    %v5650 = vunpack.c.l.b16 %v5558
    %v5651 = vunpack.c.l.b16 %v5561
    %v5652 = vunpack.c.l.b16 %v5564
    %v5653 = vunpack.c.l.b16 %v5567
    %v5654 = vunpack.c.l.b16 %v5570
    %v5655 = vunpack.c.l.b16 %v5573
    %v5656 = vunpack.c.l.b16 %v5576
    %v5657 = vunpack.c.l.b16 %v5579
    %v5658 = vunpack.c.l.b16 %v5582
    %v5659 = vunpack.c.l.b16 %v5585
    %v5660 = vunpack.c.l.b16 %v5588
    %v5661 = vunpack.c.l.b16 %v5591
    %v5662 = vunpack.c.l.b16 %v5594
    %v5663 = vunpack.c.l.b16 %v5597
    %v5664 = vunpack.c.l.b16 %v5600
    %v5665 = vpack.c.b16 %v5634, %v5633
    %v5666 = vpack.c.b16 %v5636, %v5635
    %v5667 = vpack.c.b16 %v5638, %v5637
    %v5668 = vpack.c.b16 %v5640, %v5639
    %v5669 = vpack.c.b16 %v5642, %v5641
    %v5670 = vpack.c.b16 %v5644, %v5643
    %v5671 = vpack.c.b16 %v5646, %v5645
    %v5672 = vpack.c.b16 %v5648, %v5647
    %v5673 = vpack.c.b16 %v5650, %v5649
    %v5674 = vpack.c.b16 %v5652, %v5651
    %v5675 = vpack.c.b16 %v5654, %v5653
    %v5676 = vpack.c.b16 %v5656, %v5655
    %v5677 = vpack.c.b16 %v5658, %v5657
    %v5678 = vpack.c.b16 %v5660, %v5659
    %v5679 = vpack.c.b16 %v5662, %v5661
    %v5680 = vpack.c.b16 %v5664, %v5663
    %5697 = vst [vmem:[#allocation7] sm:$0xff] %v5665
    %5698 = vst [vmem:[#allocation7 + $0x8] sm:$0xff] %v5666
    %5699 = vst [vmem:[#allocation7 + $0x10] sm:$0xff] %v5667
    %5700 = vst [vmem:[#allocation7 + $0x18] sm:$0xff] %v5668
    %5701 = vst [vmem:[#allocation7 + $0x20] sm:$0xff] %v5669
    %5702 = vst [vmem:[#allocation7 + $0x28] sm:$0xff] %v5670
    %5703 = vst [vmem:[#allocation7 + $0x30] sm:$0xff] %v5671
    %5704 = vst [vmem:[#allocation7 + $0x38] sm:$0xff] %v5672
    %5705 = vst [vmem:[#allocation7 + $0x40] sm:$0xff] %v5673
    %5706 = vst [vmem:[#allocation7 + $0x48] sm:$0xff] %v5674
    %5707 = vst [vmem:[#allocation7 + $0x50] sm:$0xff] %v5675
    %5708 = vst [vmem:[#allocation7 + $0x58] sm:$0xff] %v5676
    %5709 = vst [vmem:[#allocation7 + $0x60] sm:$0xff] %v5677
    %5710 = vst [vmem:[#allocation7 + $0x68] sm:$0xff] %v5678
    %5711 = vst [vmem:[#allocation7 + $0x70] sm:$0xff] %v5679
    %5712 = vst [vmem:[#allocation7 + $0x78] sm:$0xff] %v5680
    // Predicated region
    $region18: #{tpu_custom_call.1} parent=1 // pred_check
      _
    $region19: #{tpu_custom_call.1} parent=1 // pred_check_branch
      %5714 = sbr.rel (0) target = $region21
    $region20: #{tpu_custom_call.1} parent=1 // pred_region
      %s5716 = ssub.s32 2048, 2048
      %5717 = vsyncadd [#allocation4], %s5716
      %s5719 = sshll.u32 [#allocation7], 4
      %s5720 = int_to_ptr.vmem [resolvable:$true] %s5719
      %5722 = dma.vmem_to_hbm [thread:$0]  %s5720, 2048, %s2, [#allocation4]
    $region21: #{tpu_custom_call.1} parent=1 // pred_fallthru
      _
    // Predicated region
    $region22: #{tpu_custom_call.1} parent=1 // pred_check
      _
    $region23: #{tpu_custom_call.1} parent=1 // pred_check_branch
      %5724 = sbr.rel (0) target = $region25
    $region24: #{tpu_custom_call.1} parent=1 // pred_region
      %5725 = dma.done [#allocation4], 2048
    $region25: #{tpu_custom_call.1} parent=1 // pred_fallthru
      _
    %5726 = vsyncpa [#allocation3], 1
    %5727 = vsyncpa [#allocation6], 1
    %5728 = vsyncpa [#allocation4], 1

</llo_original>
